<compile_context>
chip_gen: v7x
topology: tpu7x:2x2x1
jax: 0.10.0
libtpu: 0.0.40
codegen_flags: <defaults>
</compile_context>

<pallas_src>
import functools

import jax
import jax.numpy as jnp
from jax import lax
from jax.experimental import pallas as pl
from jax.experimental.pallas import tpu as pltpu

LRELU_SLOPE = 0.1          # hp.lrelu_slope
KERNEL_SIZE = 3
DILATIONS = (1, 3, 5)
NUNITS = len(DILATIONS)

# Per-side halo a tile needs so the fused 3-unit chain is exact at interior
# tile boundaries: sum_u (dilation_u + 1) = 12, rounded up to a multiple of 8.
HALO = 16
# Guard rows beyond the halo so every dilated tap is an in-bounds static
# slice; guard rows stay zero and sit outside the dependency cone of the core.
GUARD = 8
DEFAULT_T_TILE = 1024      # target rows per time tile at large T

assert HALO >= sum(d + 1 for d in DILATIONS), "halo too small for fused chain"
assert GUARD >= max(DILATIONS), "guard too small for the widest dilated tap"


def _leaky(x, slope):
    # NB: halo/guard correctness relies on leaky_relu(0) == 0.
    return jnp.where(x >= 0, x, slope * x)


def _fused_resblock_kernel(x_ref, xprev_ref, xnext_ref,
                           w1_ref, b1_ref, w2_ref, b2_ref,
                           o_ref, xbuf, lxbuf, hbuf, *, tt, slope):
    """One (batch, time-tile) grid step; chains all 3 residual units in VMEM.

    x_ref     : (1, tt, C)        current tile of the residual stream
    xprev_ref : (1, HALO, C)      last HALO rows of the previous tile
    xnext_ref : (1, HALO, C)      first HALO rows of the next tile
    w*_ref    : (3, K, Cin, Cout) bf16 weights, kernel layout
    b*_ref    : (3, 1, C)         f32 biases
    o_ref     : (1, tt, C)
    xbuf      : (tt+2*HALO+2*GUARD, C) f32  residual stream
    lxbuf     : (tt+2*HALO+2*GUARD, C) bf16 leaky_relu(residual) (conv1 taps)
    hbuf      : (tt+2*HALO+2*GUARD, C) bf16 leaky_relu(conv1)    (conv2 taps)
    """
    C = o_ref.shape[-1]
    G, H = GUARD, HALO
    B = tt + 2 * H                          # "data window" rows (halo+core+halo)
    core = G + H                            # first core row inside the scratch
    f32 = jnp.float32

    t = pl.program_id(1)
    nt = pl.num_programs(1)

    # ---- stage the residual stream -------------------------------------
    # Guard + halo rows default to zero; the core comes straight from HBM.
    xbuf[pl.ds(0, G + H), :] = jnp.zeros((G + H, C), f32)
    xbuf[pl.ds(core + tt, H + G), :] = jnp.zeros((H + G, C), f32)
    xbuf[pl.ds(core, tt), :] = x_ref[0].astype(f32)

    @pl.when(t > 0)                         # interior boundary: real halo data
    def _():
        xbuf[pl.ds(G, H), :] = xprev_ref[0].astype(f32)

    @pl.when(t < nt - 1)
    def _():
        xbuf[pl.ds(core + tt, H), :] = xnext_ref[0].astype(f32)

    # hbuf guard rows provide conv2's out-of-window zeros; zero them once.
    hbuf[pl.ds(0, G), :] = jnp.zeros((G, C), hbuf.dtype)
    hbuf[pl.ds(G + B, G), :] = jnp.zeros((G, C), hbuf.dtype)

    h_zero = jnp.zeros((H, C), hbuf.dtype)
    x_zero = jnp.zeros((H, C), f32)

    for u, d in enumerate(DILATIONS):
        # leaky_relu of the residual stream, stored ONCE as the bf16 MXU
        # operand (guard rows stay 0 because lrelu(0) == 0).
        lxbuf[...] = _leaky(xbuf[...], slope).astype(lxbuf.dtype)

        # ---- conv1: kernel=3, dilation=d — 3 static-offset MXU matmuls ----
        acc = jnp.broadcast_to(b1_ref[u], (B, C)).astype(f32)
        for k in range(KERNEL_SIZE):
            off = G + (k - 1) * d                           # static slice start
            acc = acc + jnp.dot(lxbuf[pl.ds(off, B), :], w1_ref[u, k],
                                preferred_element_type=f32)
        hbuf[pl.ds(G, B), :] = _leaky(acc, slope).astype(hbuf.dtype)

        # True sequence boundaries: out-of-range positions must read as the
        # Conv1d zero padding, i.e. exactly 0.
        @pl.when(t == 0)
        def _():
            hbuf[pl.ds(G, H), :] = h_zero

        @pl.when(t == nt - 1)
        def _():
            hbuf[pl.ds(core + tt, H), :] = h_zero

        # ---- conv2: kernel=3, dilation=1, then residual add ---------------
        acc2 = jnp.broadcast_to(b2_ref[u], (B, C)).astype(f32)
        for k in range(KERNEL_SIZE):
            off = G + (k - 1)
            acc2 = acc2 + jnp.dot(hbuf[pl.ds(off, B), :], w2_ref[u, k],
                                  preferred_element_type=f32)
        xbuf[pl.ds(G, B), :] = xbuf[pl.ds(G, B), :] + acc2

        @pl.when(t == 0)
        def _():
            xbuf[pl.ds(G, H), :] = x_zero

        @pl.when(t == nt - 1)
        def _():
            xbuf[pl.ds(core + tt, H), :] = x_zero

    o_ref[0] = xbuf[pl.ds(core, tt), :].astype(o_ref.dtype)


def _choose_time_tile(T, t_tile=None):
    if t_tile is not None:
        if T % t_tile != 0 or t_tile % HALO != 0:
            raise ValueError(
                f"t_tile={t_tile} must divide T={T} and be a multiple of {HALO}")
        return t_tile
    target = min(T, DEFAULT_T_TILE)
    start = (target // HALO) * HALO
    for tt in range(start, 0, -HALO):
        if T % tt == 0:
            return tt
    # TODO(synk): ragged T (pad the last tile in-kernel) not supported yet.
    raise ValueError(f"T={T} must be a multiple of {HALO}")


def _vmem_limit_bytes(in_dtype, out_dtype, C, tt):
    rows = tt + 2 * HALO + 2 * GUARD
    ib = jnp.dtype(in_dtype).itemsize
    ob = jnp.dtype(out_dtype).itemsize
    weights = 2 * NUNITS * KERNEL_SIZE * C * C * 2        # w1k + w2k (bf16)
    biases = 2 * NUNITS * C * 4
    per_step_io = (tt + 2 * HALO) * C * ib + tt * C * ob  # in + halos + out
    scratch = rows * C * (4 + 2 + 2)                      # f32 + 2 x bf16
    total = 2 * (weights + biases + per_step_io) + scratch  # 2x: double buffers
    return int(min(max(2 * total, 32 << 20), 100 << 20))


def resblock1_forward_ntc(x_ntc, params, *, t_tile=None):
    """Fused ResBlock1 forward on (N, T, C) activations (preferred layout)."""
    N, T, C = x_ntc.shape
    w1k, b1k, w2k, b2k = params["kernel"]

    tt = _choose_time_tile(T, t_tile)
    nt = T // tt
    n_halo = tt // HALO                 # HALO-sized blocks per time tile
    last_halo_blk = T // HALO - 1
    rows = tt + 2 * HALO + 2 * GUARD

    def core_map(n, t):
        return (n, t, 0)

    def prev_halo_map(n, t):            # last HALO rows of tile t-1 (clamped)
        return (n, jnp.maximum(t * n_halo - 1, 0), 0)

    def next_halo_map(n, t):            # first HALO rows of tile t+1 (clamped)
        return (n, jnp.minimum((t + 1) * n_halo, last_halo_blk), 0)

    kernel = functools.partial(_fused_resblock_kernel, tt=tt, slope=LRELU_SLOPE)

    return pl.pallas_call(
        kernel,
        out_shape=jax.ShapeDtypeStruct((N, T, C), x_ntc.dtype),
        grid_spec=pltpu.PrefetchScalarGridSpec(
            num_scalar_prefetch=0,
            grid=(N, nt),
            in_specs=[
                pl.BlockSpec((1, tt, C), core_map),
                pl.BlockSpec((1, HALO, C), prev_halo_map),
                pl.BlockSpec((1, HALO, C), next_halo_map),
                # Grid-invariant weights/biases (constant index maps -> fetched
                # once).  TODO(synk): single-buffer via pl.Buffered(1) to save
                # VMEM headroom at large C.
                pl.BlockSpec((NUNITS, KERNEL_SIZE, C, C), lambda n, t: (0, 0, 0, 0)),
                pl.BlockSpec((NUNITS, 1, C), lambda n, t: (0, 0, 0)),
                pl.BlockSpec((NUNITS, KERNEL_SIZE, C, C), lambda n, t: (0, 0, 0, 0)),
                pl.BlockSpec((NUNITS, 1, C), lambda n, t: (0, 0, 0)),
            ],
            out_specs=pl.BlockSpec((1, tt, C), core_map),
            scratch_shapes=[
                pltpu.VMEM((rows, C), jnp.float32),     # residual stream
                pltpu.VMEM((rows, C), jnp.bfloat16),    # lrelu(residual)
                pltpu.VMEM((rows, C), jnp.bfloat16),    # lrelu(conv1)
            ],
        ),
        compiler_params=pltpu.CompilerParams(
            dimension_semantics=("parallel", "parallel"),
            vmem_limit_bytes=_vmem_limit_bytes(x_ntc.dtype, x_ntc.dtype, C, tt),
        ),
    )(x_ntc, x_ntc, x_ntc, w1k, b1k, w2k, b2k)


def resblock1_forward(x_nct, params, *, t_tile=None):
    """Drop-in PyTorch-layout wrapper: x_nct is (N, C, T).

    For a full model, keep activations in (N, T, C) and call
    resblock1_forward_ntc directly to avoid these two layout transposes.
    """
    x = jnp.transpose(x_nct, (0, 2, 1))
    y = resblock1_forward_ntc(x, params, t_tile=t_tile)
    return jnp.transpose(y, (0, 2, 1))


# --------------------------------------------------------------------------
# Parameter construction (deterministic; the weight_norm reparameterization is
# collapsed into an effective weight — identical forward semantics).  Kernel-
# layout (K, Cin, Cout) bf16 weights are built once here, hoisted out of the
# forward pass.
# --------------------------------------------------------------------------
def init_params(key, channels):
    ref1, ref2 = [], []
    for i in range(NUNITS):
        key, kv1, kb1, kv2, kb2 = jax.random.split(key, 5)
        # weight_norm: w = g * v / ||v||  (norm over (Cin, K) per out channel)
        v1 = 0.01 * jax.random.normal(kv1, (channels, channels, KERNEL_SIZE),
                                      jnp.float32)            # (Cout, Cin, K)
        n1 = jnp.linalg.norm(v1.reshape(channels, -1), axis=1) + 1e-12
        g1 = n1 * (1.0 + 0.1 * i)
        w1 = v1 * (g1 / n1)[:, None, None]
        b1 = 0.01 * jax.random.normal(kb1, (channels,), jnp.float32)

        v2 = 0.01 * jax.random.normal(kv2, (channels, channels, KERNEL_SIZE),
                                      jnp.float32)
        n2 = jnp.linalg.norm(v2.reshape(channels, -1), axis=1) + 1e-12
        g2 = n2 * (1.0 - 0.05 * i)
        w2 = v2 * (g2 / n2)[:, None, None]
        b2 = 0.01 * jax.random.normal(kb2, (channels,), jnp.float32)

        ref1.append((w1, b1))      # PyTorch layout (Cout, Cin, K), f32
        ref2.append((w2, b2))

    # Kernel layout: stack units, (Cout, Cin, K) -> (K, Cin, Cout), bf16 for
    # the MXU; f32 biases shaped (unit, 1, C) for broadcast accumulator init.
    w1k = jnp.stack([jnp.transpose(w, (2, 1, 0)) for w, _ in ref1]
                    ).astype(jnp.bfloat16)
    w2k = jnp.stack([jnp.transpose(w, (2, 1, 0)) for w, _ in ref2]
                    ).astype(jnp.bfloat16)
    b1k = jnp.stack([b[None, :] for _, b in ref1])
    b2k = jnp.stack([b[None, :] for _, b in ref2])
    return {"ref": (ref1, ref2), "kernel": (w1k, b1k, w2k, b2k)}


# --------------------------------------------------------------------------
# Pure-JAX reference (matches torch.nn.Conv1d / F.leaky_relu semantics)
# --------------------------------------------------------------------------
def _conv1d_ref(x_nct, w_oik, b, dilation):
    pad = dilation * (w_oik.shape[-1] - 1) // 2            # get_padding
    y = lax.conv_general_dilated(
        x_nct, w_oik, window_strides=(1,), padding=[(pad, pad)],
        rhs_dilation=(dilation,),
        dimension_numbers=("NCH", "OIH", "NCH"))
    return y + b[None, :, None]


def resblock1_ref(x_nct, params):
    ref1, ref2 = params["ref"]
    x = x_nct
    for i, d in enumerate(DILATIONS):
        w1, b1 = ref1[i]
        w2, b2 = ref2[i]
        xt = _leaky(x, LRELU_SLOPE)
        xt = _conv1d_ref(xt, w1, b1, d)
        xt = _leaky(xt, LRELU_SLOPE)
        xt = _conv1d_ref(xt, w2, b2, 1)
        x = xt + x
    return x


if __name__ == "__main__":
    key = jax.random.PRNGKey(0)
    kx, kp = jax.random.split(key)

    N, C, T = 2, 16, 64                                     # small test shapes
    x = jax.random.normal(kx, (N, C, T), jnp.float32)       # (N, C, T)
    params = init_params(kp, C)

    ref = jax.block_until_ready(resblock1_ref(x, params))

    # Single-tile path (whole sequence in one time tile).
    out = jax.block_until_ready(resblock1_forward(x, params))
    # Multi-tile path: forces grid=(N, 4), exercising the halo exchange and
    # boundary masking logic.
    out_tiled = jax.block_until_ready(resblock1_forward(x, params, t_tile=16))

    assert out.shape == (N, C, T)
    for got in (out, out_tiled):
        max_err = float(jnp.max(jnp.abs(got - ref)))
        # bf16 MXU operands -> slightly looser tolerance than pure f32.
        assert jnp.allclose(got, ref, atol=2e-2, rtol=2e-2), max_err

    print("KERNEL_OK")
</pallas_src>

<mosaic_0001>
module attributes {stable_mosaic.version = 11 : i64} {
  func.func @_fused_resblock_kernel(%arg0: i32, %arg1: i32, %arg2: memref<1x64x16xf32, #tpu.memory_space<vmem>>, %arg3: memref<1x16x16xf32, #tpu.memory_space<vmem>>, %arg4: memref<1x16x16xf32, #tpu.memory_space<vmem>>, %arg5: memref<3x3x16x16xbf16, #tpu.memory_space<vmem>>, %arg6: memref<3x1x16xf32, #tpu.memory_space<vmem>>, %arg7: memref<3x3x16x16xbf16, #tpu.memory_space<vmem>>, %arg8: memref<3x1x16xf32, #tpu.memory_space<vmem>>, %arg9: memref<1x64x16xf32, #tpu.memory_space<vmem>>, %arg10: memref<112x16xf32, #tpu.memory_space<vmem>>, %arg11: memref<112x16xbf16, #tpu.memory_space<vmem>>, %arg12: memref<112x16xbf16, #tpu.memory_space<vmem>>) attributes {dimension_semantics = [#tpu.dimension_semantics<parallel>, #tpu.dimension_semantics<parallel>], iteration_bounds = array<i64: 2, 1>, scalar_prefetch = 0 : i64, scratch_operands = 3 : i64, tpu.core_type = #tpu.core_type<tc>, window_params = [{transform_indices = @transform_0, window_bounds = array<i64: 1, 64, 16>}, {transform_indices = @transform_1, window_bounds = array<i64: 1, 16, 16>}, {transform_indices = @transform_2, window_bounds = array<i64: 1, 16, 16>}, {pipeline_mode = #tpu.pipeline_mode<synchronous>, transform_indices = @transform_3, window_bounds = array<i64: 3, 3, 16, 16>}, {pipeline_mode = #tpu.pipeline_mode<synchronous>, transform_indices = @transform_4, window_bounds = array<i64: 3, 1, 16>}, {pipeline_mode = #tpu.pipeline_mode<synchronous>, transform_indices = @transform_5, window_bounds = array<i64: 3, 3, 16, 16>}, {pipeline_mode = #tpu.pipeline_mode<synchronous>, transform_indices = @transform_6, window_bounds = array<i64: 3, 1, 16>}, {transform_indices = @transform_7, window_bounds = array<i64: 1, 64, 16>}]} {
    %cst = arith.constant 0.000000e+00 : f32
    %0 = vector.broadcast %cst : f32 to vector<24x16xf32>
    %c0 = arith.constant 0 : index
    %c0_0 = arith.constant 0 : index
    %1 = vector.load %arg10[%c0, %c0_0] : memref<112x16xf32, #tpu.memory_space<vmem>>, vector<24x16xf32>
    tpu.vector_store %arg10[%c0, %c0_0], %0 {strides = array<i32>} : memref<112x16xf32, #tpu.memory_space<vmem>>, vector<24x16xf32>,
    %cst_1 = arith.constant 0.000000e+00 : f32
    %2 = vector.broadcast %cst_1 : f32 to vector<24x16xf32>
    %c88 = arith.constant 88 : index
    %c0_2 = arith.constant 0 : index
    %3 = vector.load %arg10[%c88, %c0_2] : memref<112x16xf32, #tpu.memory_space<vmem>>, vector<24x16xf32>
    tpu.vector_store %arg10[%c88, %c0_2], %2 {strides = array<i32>} : memref<112x16xf32, #tpu.memory_space<vmem>>, vector<24x16xf32>,
    %c0_3 = arith.constant 0 : index
    %c0_4 = arith.constant 0 : index
    %c0_5 = arith.constant 0 : index
    %4 = vector.load %arg2[%c0_3, %c0_4, %c0_5] : memref<1x64x16xf32, #tpu.memory_space<vmem>>, vector<1x64x16xf32>
    %5 = vector.shape_cast %4 : vector<1x64x16xf32> to vector<64x16xf32>
    %c24 = arith.constant 24 : index
    %c0_6 = arith.constant 0 : index
    %6 = vector.load %arg10[%c24, %c0_6] : memref<112x16xf32, #tpu.memory_space<vmem>>, vector<64x16xf32>
    tpu.vector_store %arg10[%c24, %c0_6], %5 {strides = array<i32>} : memref<112x16xf32, #tpu.memory_space<vmem>>, vector<64x16xf32>,
    %c0_i32 = arith.constant 0 : i32
    %7 = arith.cmpi sgt, %arg1, %c0_i32 : i32
    %8 = arith.extui %7 : i1 to i32
    %c0_i32_7 = arith.constant 0 : i32
    %9 = arith.cmpi ne, %8, %c0_i32_7 : i32
    scf.if %9 {
      %c0_223 = arith.constant 0 : index
      %c0_224 = arith.constant 0 : index
      %c0_225 = arith.constant 0 : index
      %227 = vector.load %arg3[%c0_223, %c0_224, %c0_225] : memref<1x16x16xf32, #tpu.memory_space<vmem>>, vector<1x16x16xf32>
      %228 = vector.shape_cast %227 : vector<1x16x16xf32> to vector<16x16xf32>
      %c8_226 = arith.constant 8 : index
      %c0_227 = arith.constant 0 : index
      %229 = vector.load %arg10[%c8_226, %c0_227] : memref<112x16xf32, #tpu.memory_space<vmem>>, vector<16x16xf32>
      tpu.vector_store %arg10[%c8_226, %c0_227], %228 {strides = array<i32>} : memref<112x16xf32, #tpu.memory_space<vmem>>, vector<16x16xf32>,
    } else {
    }
    %c0_i32_8 = arith.constant 0 : i32
    %10 = arith.cmpi slt, %arg1, %c0_i32_8 : i32
    %11 = arith.extui %10 : i1 to i32
    %c0_i32_9 = arith.constant 0 : i32
    %12 = arith.cmpi ne, %11, %c0_i32_9 : i32
    scf.if %12 {
      %c0_223 = arith.constant 0 : index
      %c0_224 = arith.constant 0 : index
      %c0_225 = arith.constant 0 : index
      %227 = vector.load %arg4[%c0_223, %c0_224, %c0_225] : memref<1x16x16xf32, #tpu.memory_space<vmem>>, vector<1x16x16xf32>
      %228 = vector.shape_cast %227 : vector<1x16x16xf32> to vector<16x16xf32>
      %c88_226 = arith.constant 88 : index
      %c0_227 = arith.constant 0 : index
      %229 = vector.load %arg10[%c88_226, %c0_227] : memref<112x16xf32, #tpu.memory_space<vmem>>, vector<16x16xf32>
      tpu.vector_store %arg10[%c88_226, %c0_227], %228 {strides = array<i32>} : memref<112x16xf32, #tpu.memory_space<vmem>>, vector<16x16xf32>,
    } else {
    }
    %cst_10 = arith.constant 0.000000e+00 : bf16
    %13 = vector.broadcast %cst_10 : bf16 to vector<8x16xbf16>
    %c0_11 = arith.constant 0 : index
    %c0_12 = arith.constant 0 : index
    %14 = vector.load %arg12[%c0_11, %c0_12] : memref<112x16xbf16, #tpu.memory_space<vmem>>, vector<8x16xbf16>
    tpu.vector_store %arg12[%c0_11, %c0_12], %13 {strides = array<i32>} : memref<112x16xbf16, #tpu.memory_space<vmem>>, vector<8x16xbf16>,
    %cst_13 = arith.constant 0.000000e+00 : bf16
    %15 = vector.broadcast %cst_13 : bf16 to vector<8x16xbf16>
    %c104 = arith.constant 104 : index
    %c0_14 = arith.constant 0 : index
    %16 = vector.load %arg12[%c104, %c0_14] : memref<112x16xbf16, #tpu.memory_space<vmem>>, vector<8x16xbf16>
    tpu.vector_store %arg12[%c104, %c0_14], %15 {strides = array<i32>} : memref<112x16xbf16, #tpu.memory_space<vmem>>, vector<8x16xbf16>,
    %cst_15 = arith.constant 0.000000e+00 : bf16
    %17 = vector.broadcast %cst_15 : bf16 to vector<16x16xbf16>
    %cst_16 = arith.constant 0.000000e+00 : f32
    %18 = vector.broadcast %cst_16 : f32 to vector<16x16xf32>
    %c0_17 = arith.constant 0 : index
    %c0_18 = arith.constant 0 : index
    %19 = vector.load %arg10[%c0_17, %c0_18] : memref<112x16xf32, #tpu.memory_space<vmem>>, vector<112x16xf32>
    %cst_19 = arith.constant 0.000000e+00 : f32
    %20 = vector.broadcast %cst_19 : f32 to vector<112x16xf32>
    %21 = arith.cmpf oge, %19, %20 : vector<112x16xf32>
    %cst_20 = arith.constant 1.000000e-01 : f32
    %22 = vector.broadcast %cst_20 : f32 to vector<112x16xf32>
    %23 = arith.mulf %22, %19 : vector<112x16xf32>
    %24 = arith.select %21, %19, %23 : vector<112x16xi1>, vector<112x16xf32>
    %25 = arith.truncf %24 : vector<112x16xf32> to vector<112x16xbf16>
    %c0_21 = arith.constant 0 : index
    %c0_22 = arith.constant 0 : index
    %26 = vector.load %arg11[%c0_21, %c0_22] : memref<112x16xbf16, #tpu.memory_space<vmem>>, vector<112x16xbf16>
    tpu.vector_store %arg11[%c0_21, %c0_22], %25 {strides = array<i32>} : memref<112x16xbf16, #tpu.memory_space<vmem>>, vector<112x16xbf16>,
    %c0_23 = arith.constant 0 : index
    %c0_24 = arith.constant 0 : index
    %c0_25 = arith.constant 0 : index
    %27 = vector.load %arg6[%c0_23, %c0_24, %c0_25] : memref<3x1x16xf32, #tpu.memory_space<vmem>>, vector<1x1x16xf32>
    %28 = vector.shape_cast %27 : vector<1x1x16xf32> to vector<1x16xf32>
    %29 = vector.shape_cast %28 : vector<1x16xf32> to vector<1x16xf32>
    %30 = vector.broadcast %29 : vector<1x16xf32> to vector<96x16xf32>
    %c7 = arith.constant 7 : index
    %c0_26 = arith.constant 0 : index
    %31 = vector.load %arg11[%c7, %c0_26] : memref<112x16xbf16, #tpu.memory_space<vmem>>, vector<96x16xbf16>
    %c0_27 = arith.constant 0 : index
    %c0_28 = arith.constant 0 : index
    %c0_29 = arith.constant 0 : index
    %c0_30 = arith.constant 0 : index
    %32 = vector.load %arg5[%c0_27, %c0_28, %c0_29, %c0_30] : memref<3x3x16x16xbf16, #tpu.memory_space<vmem>>, vector<1x1x16x16xbf16>
    %33 = vector.shape_cast %32 : vector<1x1x16x16xbf16> to vector<16x16xbf16>
    %cst_31 = arith.constant dense<0.000000e+00> : vector<96x16xf32>
    %34 = tpu.matmul %31, %33, %cst_31 {dimension_numbers = #tpu.dot_dimension_numbers<[1], [0], [0], [1], [0, 0, 1, 1], [], []>} : vector<96x16xbf16>, vector<16x16xbf16>, vector<96x16xf32> -> vector<96x16xf32>
    %35 = arith.addf %30, %34 : vector<96x16xf32>
    %c8 = arith.constant 8 : index
    %c0_32 = arith.constant 0 : index
    %36 = vector.load %arg11[%c8, %c0_32] : memref<112x16xbf16, #tpu.memory_space<vmem>>, vector<96x16xbf16>
    %c0_33 = arith.constant 0 : index
    %c1 = arith.constant 1 : index
    %c0_34 = arith.constant 0 : index
    %c0_35 = arith.constant 0 : index
    %37 = vector.load %arg5[%c0_33, %c1, %c0_34, %c0_35] : memref<3x3x16x16xbf16, #tpu.memory_space<vmem>>, vector<1x1x16x16xbf16>
    %38 = vector.shape_cast %37 : vector<1x1x16x16xbf16> to vector<16x16xbf16>
    %cst_36 = arith.constant dense<0.000000e+00> : vector<96x16xf32>
    %39 = tpu.matmul %36, %38, %cst_36 {dimension_numbers = #tpu.dot_dimension_numbers<[1], [0], [0], [1], [0, 0, 1, 1], [], []>} : vector<96x16xbf16>, vector<16x16xbf16>, vector<96x16xf32> -> vector<96x16xf32>
    %40 = arith.addf %35, %39 : vector<96x16xf32>
    %c9 = arith.constant 9 : index
    %c0_37 = arith.constant 0 : index
    %41 = vector.load %arg11[%c9, %c0_37] : memref<112x16xbf16, #tpu.memory_space<vmem>>, vector<96x16xbf16>
    %c0_38 = arith.constant 0 : index
    %c2 = arith.constant 2 : index
    %c0_39 = arith.constant 0 : index
    %c0_40 = arith.constant 0 : index
    %42 = vector.load %arg5[%c0_38, %c2, %c0_39, %c0_40] : memref<3x3x16x16xbf16, #tpu.memory_space<vmem>>, vector<1x1x16x16xbf16>
    %43 = vector.shape_cast %42 : vector<1x1x16x16xbf16> to vector<16x16xbf16>
    %cst_41 = arith.constant dense<0.000000e+00> : vector<96x16xf32>
    %44 = tpu.matmul %41, %43, %cst_41 {dimension_numbers = #tpu.dot_dimension_numbers<[1], [0], [0], [1], [0, 0, 1, 1], [], []>} : vector<96x16xbf16>, vector<16x16xbf16>, vector<96x16xf32> -> vector<96x16xf32>
    %45 = arith.addf %40, %44 : vector<96x16xf32>
    %cst_42 = arith.constant 0.000000e+00 : f32
    %46 = vector.broadcast %cst_42 : f32 to vector<96x16xf32>
    %47 = arith.cmpf oge, %45, %46 : vector<96x16xf32>
    %cst_43 = arith.constant 1.000000e-01 : f32
    %48 = vector.broadcast %cst_43 : f32 to vector<96x16xf32>
    %49 = arith.mulf %48, %45 : vector<96x16xf32>
    %50 = arith.select %47, %45, %49 : vector<96x16xi1>, vector<96x16xf32>
    %51 = arith.truncf %50 : vector<96x16xf32> to vector<96x16xbf16>
    %c8_44 = arith.constant 8 : index
    %c0_45 = arith.constant 0 : index
    %52 = vector.load %arg12[%c8_44, %c0_45] : memref<112x16xbf16, #tpu.memory_space<vmem>>, vector<96x16xbf16>
    tpu.vector_store %arg12[%c8_44, %c0_45], %51 {strides = array<i32>} : memref<112x16xbf16, #tpu.memory_space<vmem>>, vector<96x16xbf16>,
    %c0_i32_46 = arith.constant 0 : i32
    %53 = arith.cmpi eq, %arg1, %c0_i32_46 : i32
    %54 = arith.extui %53 : i1 to i32
    %c0_i32_47 = arith.constant 0 : i32
    %55 = arith.cmpi ne, %54, %c0_i32_47 : i32
    scf.if %55 {
      %c8_223 = arith.constant 8 : index
      %c0_224 = arith.constant 0 : index
      %227 = vector.load %arg12[%c8_223, %c0_224] : memref<112x16xbf16, #tpu.memory_space<vmem>>, vector<16x16xbf16>
      tpu.vector_store %arg12[%c8_223, %c0_224], %17 {strides = array<i32>} : memref<112x16xbf16, #tpu.memory_space<vmem>>, vector<16x16xbf16>,
    } else {
    }
    %c0_i32_48 = arith.constant 0 : i32
    %56 = arith.cmpi eq, %arg1, %c0_i32_48 : i32
    %57 = arith.extui %56 : i1 to i32
    %c0_i32_49 = arith.constant 0 : i32
    %58 = arith.cmpi ne, %57, %c0_i32_49 : i32
    scf.if %58 {
      %c88_223 = arith.constant 88 : index
      %c0_224 = arith.constant 0 : index
      %227 = vector.load %arg12[%c88_223, %c0_224] : memref<112x16xbf16, #tpu.memory_space<vmem>>, vector<16x16xbf16>
      tpu.vector_store %arg12[%c88_223, %c0_224], %17 {strides = array<i32>} : memref<112x16xbf16, #tpu.memory_space<vmem>>, vector<16x16xbf16>,
    } else {
    }
    %c0_50 = arith.constant 0 : index
    %c0_51 = arith.constant 0 : index
    %c0_52 = arith.constant 0 : index
    %59 = vector.load %arg8[%c0_50, %c0_51, %c0_52] : memref<3x1x16xf32, #tpu.memory_space<vmem>>, vector<1x1x16xf32>
    %60 = vector.shape_cast %59 : vector<1x1x16xf32> to vector<1x16xf32>
    %61 = vector.shape_cast %60 : vector<1x16xf32> to vector<1x16xf32>
    %62 = vector.broadcast %61 : vector<1x16xf32> to vector<96x16xf32>
    %c7_53 = arith.constant 7 : index
    %c0_54 = arith.constant 0 : index
    %63 = vector.load %arg12[%c7_53, %c0_54] : memref<112x16xbf16, #tpu.memory_space<vmem>>, vector<96x16xbf16>
    %c0_55 = arith.constant 0 : index
    %c0_56 = arith.constant 0 : index
    %c0_57 = arith.constant 0 : index
    %c0_58 = arith.constant 0 : index
    %64 = vector.load %arg7[%c0_55, %c0_56, %c0_57, %c0_58] : memref<3x3x16x16xbf16, #tpu.memory_space<vmem>>, vector<1x1x16x16xbf16>
    %65 = vector.shape_cast %64 : vector<1x1x16x16xbf16> to vector<16x16xbf16>
    %cst_59 = arith.constant dense<0.000000e+00> : vector<96x16xf32>
    %66 = tpu.matmul %63, %65, %cst_59 {dimension_numbers = #tpu.dot_dimension_numbers<[1], [0], [0], [1], [0, 0, 1, 1], [], []>} : vector<96x16xbf16>, vector<16x16xbf16>, vector<96x16xf32> -> vector<96x16xf32>
    %67 = arith.addf %62, %66 : vector<96x16xf32>
    %c8_60 = arith.constant 8 : index
    %c0_61 = arith.constant 0 : index
    %68 = vector.load %arg12[%c8_60, %c0_61] : memref<112x16xbf16, #tpu.memory_space<vmem>>, vector<96x16xbf16>
    %c0_62 = arith.constant 0 : index
    %c1_63 = arith.constant 1 : index
    %c0_64 = arith.constant 0 : index
    %c0_65 = arith.constant 0 : index
    %69 = vector.load %arg7[%c0_62, %c1_63, %c0_64, %c0_65] : memref<3x3x16x16xbf16, #tpu.memory_space<vmem>>, vector<1x1x16x16xbf16>
    %70 = vector.shape_cast %69 : vector<1x1x16x16xbf16> to vector<16x16xbf16>
    %cst_66 = arith.constant dense<0.000000e+00> : vector<96x16xf32>
    %71 = tpu.matmul %68, %70, %cst_66 {dimension_numbers = #tpu.dot_dimension_numbers<[1], [0], [0], [1], [0, 0, 1, 1], [], []>} : vector<96x16xbf16>, vector<16x16xbf16>, vector<96x16xf32> -> vector<96x16xf32>
    %72 = arith.addf %67, %71 : vector<96x16xf32>
    %c9_67 = arith.constant 9 : index
    %c0_68 = arith.constant 0 : index
    %73 = vector.load %arg12[%c9_67, %c0_68] : memref<112x16xbf16, #tpu.memory_space<vmem>>, vector<96x16xbf16>
    %c0_69 = arith.constant 0 : index
    %c2_70 = arith.constant 2 : index
    %c0_71 = arith.constant 0 : index
    %c0_72 = arith.constant 0 : index
    %74 = vector.load %arg7[%c0_69, %c2_70, %c0_71, %c0_72] : memref<3x3x16x16xbf16, #tpu.memory_space<vmem>>, vector<1x1x16x16xbf16>
    %75 = vector.shape_cast %74 : vector<1x1x16x16xbf16> to vector<16x16xbf16>
    %cst_73 = arith.constant dense<0.000000e+00> : vector<96x16xf32>
    %76 = tpu.matmul %73, %75, %cst_73 {dimension_numbers = #tpu.dot_dimension_numbers<[1], [0], [0], [1], [0, 0, 1, 1], [], []>} : vector<96x16xbf16>, vector<16x16xbf16>, vector<96x16xf32> -> vector<96x16xf32>
    %77 = arith.addf %72, %76 : vector<96x16xf32>
    %c8_74 = arith.constant 8 : index
    %c0_75 = arith.constant 0 : index
    %78 = vector.load %arg10[%c8_74, %c0_75] : memref<112x16xf32, #tpu.memory_space<vmem>>, vector<96x16xf32>
    %79 = arith.addf %78, %77 : vector<96x16xf32>
    %c8_76 = arith.constant 8 : index
    %c0_77 = arith.constant 0 : index
    %80 = vector.load %arg10[%c8_76, %c0_77] : memref<112x16xf32, #tpu.memory_space<vmem>>, vector<96x16xf32>
    tpu.vector_store %arg10[%c8_76, %c0_77], %79 {strides = array<i32>} : memref<112x16xf32, #tpu.memory_space<vmem>>, vector<96x16xf32>,
    %c0_i32_78 = arith.constant 0 : i32
    %81 = arith.cmpi eq, %arg1, %c0_i32_78 : i32
    %82 = arith.extui %81 : i1 to i32
    %c0_i32_79 = arith.constant 0 : i32
    %83 = arith.cmpi ne, %82, %c0_i32_79 : i32
    scf.if %83 {
      %c8_223 = arith.constant 8 : index
      %c0_224 = arith.constant 0 : index
      %227 = vector.load %arg10[%c8_223, %c0_224] : memref<112x16xf32, #tpu.memory_space<vmem>>, vector<16x16xf32>
      tpu.vector_store %arg10[%c8_223, %c0_224], %18 {strides = array<i32>} : memref<112x16xf32, #tpu.memory_space<vmem>>, vector<16x16xf32>,
    } else {
    }
    %c0_i32_80 = arith.constant 0 : i32
    %84 = arith.cmpi eq, %arg1, %c0_i32_80 : i32
    %85 = arith.extui %84 : i1 to i32
    %c0_i32_81 = arith.constant 0 : i32
    %86 = arith.cmpi ne, %85, %c0_i32_81 : i32
    scf.if %86 {
      %c88_223 = arith.constant 88 : index
      %c0_224 = arith.constant 0 : index
      %227 = vector.load %arg10[%c88_223, %c0_224] : memref<112x16xf32, #tpu.memory_space<vmem>>, vector<16x16xf32>
      tpu.vector_store %arg10[%c88_223, %c0_224], %18 {strides = array<i32>} : memref<112x16xf32, #tpu.memory_space<vmem>>, vector<16x16xf32>,
    } else {
    }
    %c0_82 = arith.constant 0 : index
    %c0_83 = arith.constant 0 : index
    %87 = vector.load %arg10[%c0_82, %c0_83] : memref<112x16xf32, #tpu.memory_space<vmem>>, vector<112x16xf32>
    %cst_84 = arith.constant 0.000000e+00 : f32
    %88 = vector.broadcast %cst_84 : f32 to vector<112x16xf32>
    %89 = arith.cmpf oge, %87, %88 : vector<112x16xf32>
    %cst_85 = arith.constant 1.000000e-01 : f32
    %90 = vector.broadcast %cst_85 : f32 to vector<112x16xf32>
    %91 = arith.mulf %90, %87 : vector<112x16xf32>
    %92 = arith.select %89, %87, %91 : vector<112x16xi1>, vector<112x16xf32>
    %93 = arith.truncf %92 : vector<112x16xf32> to vector<112x16xbf16>
    %c0_86 = arith.constant 0 : index
    %c0_87 = arith.constant 0 : index
    %94 = vector.load %arg11[%c0_86, %c0_87] : memref<112x16xbf16, #tpu.memory_space<vmem>>, vector<112x16xbf16>
    tpu.vector_store %arg11[%c0_86, %c0_87], %93 {strides = array<i32>} : memref<112x16xbf16, #tpu.memory_space<vmem>>, vector<112x16xbf16>,
    %c1_88 = arith.constant 1 : index
    %c0_89 = arith.constant 0 : index
    %c0_90 = arith.constant 0 : index
    %95 = vector.load %arg6[%c1_88, %c0_89, %c0_90] : memref<3x1x16xf32, #tpu.memory_space<vmem>>, vector<1x1x16xf32>
    %96 = vector.shape_cast %95 : vector<1x1x16xf32> to vector<1x16xf32>
    %97 = vector.shape_cast %96 : vector<1x16xf32> to vector<1x16xf32>
    %98 = vector.broadcast %97 : vector<1x16xf32> to vector<96x16xf32>
    %c5 = arith.constant 5 : index
    %c0_91 = arith.constant 0 : index
    %99 = vector.load %arg11[%c5, %c0_91] : memref<112x16xbf16, #tpu.memory_space<vmem>>, vector<96x16xbf16>
    %c1_92 = arith.constant 1 : index
    %c0_93 = arith.constant 0 : index
    %c0_94 = arith.constant 0 : index
    %c0_95 = arith.constant 0 : index
    %100 = vector.load %arg5[%c1_92, %c0_93, %c0_94, %c0_95] : memref<3x3x16x16xbf16, #tpu.memory_space<vmem>>, vector<1x1x16x16xbf16>
    %101 = vector.shape_cast %100 : vector<1x1x16x16xbf16> to vector<16x16xbf16>
    %cst_96 = arith.constant dense<0.000000e+00> : vector<96x16xf32>
    %102 = tpu.matmul %99, %101, %cst_96 {dimension_numbers = #tpu.dot_dimension_numbers<[1], [0], [0], [1], [0, 0, 1, 1], [], []>} : vector<96x16xbf16>, vector<16x16xbf16>, vector<96x16xf32> -> vector<96x16xf32>
    %103 = arith.addf %98, %102 : vector<96x16xf32>
    %c8_97 = arith.constant 8 : index
    %c0_98 = arith.constant 0 : index
    %104 = vector.load %arg11[%c8_97, %c0_98] : memref<112x16xbf16, #tpu.memory_space<vmem>>, vector<96x16xbf16>
    %c1_99 = arith.constant 1 : index
    %c1_100 = arith.constant 1 : index
    %c0_101 = arith.constant 0 : index
    %c0_102 = arith.constant 0 : index
    %105 = vector.load %arg5[%c1_99, %c1_100, %c0_101, %c0_102] : memref<3x3x16x16xbf16, #tpu.memory_space<vmem>>, vector<1x1x16x16xbf16>
    %106 = vector.shape_cast %105 : vector<1x1x16x16xbf16> to vector<16x16xbf16>
    %cst_103 = arith.constant dense<0.000000e+00> : vector<96x16xf32>
    %107 = tpu.matmul %104, %106, %cst_103 {dimension_numbers = #tpu.dot_dimension_numbers<[1], [0], [0], [1], [0, 0, 1, 1], [], []>} : vector<96x16xbf16>, vector<16x16xbf16>, vector<96x16xf32> -> vector<96x16xf32>
    %108 = arith.addf %103, %107 : vector<96x16xf32>
    %c11 = arith.constant 11 : index
    %c0_104 = arith.constant 0 : index
    %109 = vector.load %arg11[%c11, %c0_104] : memref<112x16xbf16, #tpu.memory_space<vmem>>, vector<96x16xbf16>
    %c1_105 = arith.constant 1 : index
    %c2_106 = arith.constant 2 : index
    %c0_107 = arith.constant 0 : index
    %c0_108 = arith.constant 0 : index
    %110 = vector.load %arg5[%c1_105, %c2_106, %c0_107, %c0_108] : memref<3x3x16x16xbf16, #tpu.memory_space<vmem>>, vector<1x1x16x16xbf16>
    %111 = vector.shape_cast %110 : vector<1x1x16x16xbf16> to vector<16x16xbf16>
    %cst_109 = arith.constant dense<0.000000e+00> : vector<96x16xf32>
    %112 = tpu.matmul %109, %111, %cst_109 {dimension_numbers = #tpu.dot_dimension_numbers<[1], [0], [0], [1], [0, 0, 1, 1], [], []>} : vector<96x16xbf16>, vector<16x16xbf16>, vector<96x16xf32> -> vector<96x16xf32>
    %113 = arith.addf %108, %112 : vector<96x16xf32>
    %cst_110 = arith.constant 0.000000e+00 : f32
    %114 = vector.broadcast %cst_110 : f32 to vector<96x16xf32>
    %115 = arith.cmpf oge, %113, %114 : vector<96x16xf32>
    %cst_111 = arith.constant 1.000000e-01 : f32
    %116 = vector.broadcast %cst_111 : f32 to vector<96x16xf32>
    %117 = arith.mulf %116, %113 : vector<96x16xf32>
    %118 = arith.select %115, %113, %117 : vector<96x16xi1>, vector<96x16xf32>
    %119 = arith.truncf %118 : vector<96x16xf32> to vector<96x16xbf16>
    %c8_112 = arith.constant 8 : index
    %c0_113 = arith.constant 0 : index
    %120 = vector.load %arg12[%c8_112, %c0_113] : memref<112x16xbf16, #tpu.memory_space<vmem>>, vector<96x16xbf16>
    tpu.vector_store %arg12[%c8_112, %c0_113], %119 {strides = array<i32>} : memref<112x16xbf16, #tpu.memory_space<vmem>>, vector<96x16xbf16>,
    %c0_i32_114 = arith.constant 0 : i32
    %121 = arith.cmpi eq, %arg1, %c0_i32_114 : i32
    %122 = arith.extui %121 : i1 to i32
    %c0_i32_115 = arith.constant 0 : i32
    %123 = arith.cmpi ne, %122, %c0_i32_115 : i32
    scf.if %123 {
      %c8_223 = arith.constant 8 : index
      %c0_224 = arith.constant 0 : index
      %227 = vector.load %arg12[%c8_223, %c0_224] : memref<112x16xbf16, #tpu.memory_space<vmem>>, vector<16x16xbf16>
      tpu.vector_store %arg12[%c8_223, %c0_224], %17 {strides = array<i32>} : memref<112x16xbf16, #tpu.memory_space<vmem>>, vector<16x16xbf16>,
    } else {
    }
    %c0_i32_116 = arith.constant 0 : i32
    %124 = arith.cmpi eq, %arg1, %c0_i32_116 : i32
    %125 = arith.extui %124 : i1 to i32
    %c0_i32_117 = arith.constant 0 : i32
    %126 = arith.cmpi ne, %125, %c0_i32_117 : i32
    scf.if %126 {
      %c88_223 = arith.constant 88 : index
      %c0_224 = arith.constant 0 : index
      %227 = vector.load %arg12[%c88_223, %c0_224] : memref<112x16xbf16, #tpu.memory_space<vmem>>, vector<16x16xbf16>
      tpu.vector_store %arg12[%c88_223, %c0_224], %17 {strides = array<i32>} : memref<112x16xbf16, #tpu.memory_space<vmem>>, vector<16x16xbf16>,
    } else {
    }
    %c1_118 = arith.constant 1 : index
    %c0_119 = arith.constant 0 : index
    %c0_120 = arith.constant 0 : index
    %127 = vector.load %arg8[%c1_118, %c0_119, %c0_120] : memref<3x1x16xf32, #tpu.memory_space<vmem>>, vector<1x1x16xf32>
    %128 = vector.shape_cast %127 : vector<1x1x16xf32> to vector<1x16xf32>
    %129 = vector.shape_cast %128 : vector<1x16xf32> to vector<1x16xf32>
    %130 = vector.broadcast %129 : vector<1x16xf32> to vector<96x16xf32>
    %c7_121 = arith.constant 7 : index
    %c0_122 = arith.constant 0 : index
    %131 = vector.load %arg12[%c7_121, %c0_122] : memref<112x16xbf16, #tpu.memory_space<vmem>>, vector<96x16xbf16>
    %c1_123 = arith.constant 1 : index
    %c0_124 = arith.constant 0 : index
    %c0_125 = arith.constant 0 : index
    %c0_126 = arith.constant 0 : index
    %132 = vector.load %arg7[%c1_123, %c0_124, %c0_125, %c0_126] : memref<3x3x16x16xbf16, #tpu.memory_space<vmem>>, vector<1x1x16x16xbf16>
    %133 = vector.shape_cast %132 : vector<1x1x16x16xbf16> to vector<16x16xbf16>
    %cst_127 = arith.constant dense<0.000000e+00> : vector<96x16xf32>
    %134 = tpu.matmul %131, %133, %cst_127 {dimension_numbers = #tpu.dot_dimension_numbers<[1], [0], [0], [1], [0, 0, 1, 1], [], []>} : vector<96x16xbf16>, vector<16x16xbf16>, vector<96x16xf32> -> vector<96x16xf32>
    %135 = arith.addf %130, %134 : vector<96x16xf32>
    %c8_128 = arith.constant 8 : index
    %c0_129 = arith.constant 0 : index
    %136 = vector.load %arg12[%c8_128, %c0_129] : memref<112x16xbf16, #tpu.memory_space<vmem>>, vector<96x16xbf16>
    %c1_130 = arith.constant 1 : index
    %c1_131 = arith.constant 1 : index
    %c0_132 = arith.constant 0 : index
    %c0_133 = arith.constant 0 : index
    %137 = vector.load %arg7[%c1_130, %c1_131, %c0_132, %c0_133] : memref<3x3x16x16xbf16, #tpu.memory_space<vmem>>, vector<1x1x16x16xbf16>
    %138 = vector.shape_cast %137 : vector<1x1x16x16xbf16> to vector<16x16xbf16>
    %cst_134 = arith.constant dense<0.000000e+00> : vector<96x16xf32>
    %139 = tpu.matmul %136, %138, %cst_134 {dimension_numbers = #tpu.dot_dimension_numbers<[1], [0], [0], [1], [0, 0, 1, 1], [], []>} : vector<96x16xbf16>, vector<16x16xbf16>, vector<96x16xf32> -> vector<96x16xf32>
    %140 = arith.addf %135, %139 : vector<96x16xf32>
    %c9_135 = arith.constant 9 : index
    %c0_136 = arith.constant 0 : index
    %141 = vector.load %arg12[%c9_135, %c0_136] : memref<112x16xbf16, #tpu.memory_space<vmem>>, vector<96x16xbf16>
    %c1_137 = arith.constant 1 : index
    %c2_138 = arith.constant 2 : index
    %c0_139 = arith.constant 0 : index
    %c0_140 = arith.constant 0 : index
    %142 = vector.load %arg7[%c1_137, %c2_138, %c0_139, %c0_140] : memref<3x3x16x16xbf16, #tpu.memory_space<vmem>>, vector<1x1x16x16xbf16>
    %143 = vector.shape_cast %142 : vector<1x1x16x16xbf16> to vector<16x16xbf16>
    %cst_141 = arith.constant dense<0.000000e+00> : vector<96x16xf32>
    %144 = tpu.matmul %141, %143, %cst_141 {dimension_numbers = #tpu.dot_dimension_numbers<[1], [0], [0], [1], [0, 0, 1, 1], [], []>} : vector<96x16xbf16>, vector<16x16xbf16>, vector<96x16xf32> -> vector<96x16xf32>
    %145 = arith.addf %140, %144 : vector<96x16xf32>
    %c8_142 = arith.constant 8 : index
    %c0_143 = arith.constant 0 : index
    %146 = vector.load %arg10[%c8_142, %c0_143] : memref<112x16xf32, #tpu.memory_space<vmem>>, vector<96x16xf32>
    %147 = arith.addf %146, %145 : vector<96x16xf32>
    %c8_144 = arith.constant 8 : index
    %c0_145 = arith.constant 0 : index
    %148 = vector.load %arg10[%c8_144, %c0_145] : memref<112x16xf32, #tpu.memory_space<vmem>>, vector<96x16xf32>
    tpu.vector_store %arg10[%c8_144, %c0_145], %147 {strides = array<i32>} : memref<112x16xf32, #tpu.memory_space<vmem>>, vector<96x16xf32>,
    %c0_i32_146 = arith.constant 0 : i32
    %149 = arith.cmpi eq, %arg1, %c0_i32_146 : i32
    %150 = arith.extui %149 : i1 to i32
    %c0_i32_147 = arith.constant 0 : i32
    %151 = arith.cmpi ne, %150, %c0_i32_147 : i32
    scf.if %151 {
      %c8_223 = arith.constant 8 : index
      %c0_224 = arith.constant 0 : index
      %227 = vector.load %arg10[%c8_223, %c0_224] : memref<112x16xf32, #tpu.memory_space<vmem>>, vector<16x16xf32>
      tpu.vector_store %arg10[%c8_223, %c0_224], %18 {strides = array<i32>} : memref<112x16xf32, #tpu.memory_space<vmem>>, vector<16x16xf32>,
    } else {
    }
    %c0_i32_148 = arith.constant 0 : i32
    %152 = arith.cmpi eq, %arg1, %c0_i32_148 : i32
    %153 = arith.extui %152 : i1 to i32
    %c0_i32_149 = arith.constant 0 : i32
    %154 = arith.cmpi ne, %153, %c0_i32_149 : i32
    scf.if %154 {
      %c88_223 = arith.constant 88 : index
      %c0_224 = arith.constant 0 : index
      %227 = vector.load %arg10[%c88_223, %c0_224] : memref<112x16xf32, #tpu.memory_space<vmem>>, vector<16x16xf32>
      tpu.vector_store %arg10[%c88_223, %c0_224], %18 {strides = array<i32>} : memref<112x16xf32, #tpu.memory_space<vmem>>, vector<16x16xf32>,
    } else {
    }
    %c0_150 = arith.constant 0 : index
    %c0_151 = arith.constant 0 : index
    %155 = vector.load %arg10[%c0_150, %c0_151] : memref<112x16xf32, #tpu.memory_space<vmem>>, vector<112x16xf32>
    %cst_152 = arith.constant 0.000000e+00 : f32
    %156 = vector.broadcast %cst_152 : f32 to vector<112x16xf32>
    %157 = arith.cmpf oge, %155, %156 : vector<112x16xf32>
    %cst_153 = arith.constant 1.000000e-01 : f32
    %158 = vector.broadcast %cst_153 : f32 to vector<112x16xf32>
    %159 = arith.mulf %158, %155 : vector<112x16xf32>
    %160 = arith.select %157, %155, %159 : vector<112x16xi1>, vector<112x16xf32>
    %161 = arith.truncf %160 : vector<112x16xf32> to vector<112x16xbf16>
    %c0_154 = arith.constant 0 : index
    %c0_155 = arith.constant 0 : index
    %162 = vector.load %arg11[%c0_154, %c0_155] : memref<112x16xbf16, #tpu.memory_space<vmem>>, vector<112x16xbf16>
    tpu.vector_store %arg11[%c0_154, %c0_155], %161 {strides = array<i32>} : memref<112x16xbf16, #tpu.memory_space<vmem>>, vector<112x16xbf16>,
    %c2_156 = arith.constant 2 : index
    %c0_157 = arith.constant 0 : index
    %c0_158 = arith.constant 0 : index
    %163 = vector.load %arg6[%c2_156, %c0_157, %c0_158] : memref<3x1x16xf32, #tpu.memory_space<vmem>>, vector<1x1x16xf32>
    %164 = vector.shape_cast %163 : vector<1x1x16xf32> to vector<1x16xf32>
    %165 = vector.shape_cast %164 : vector<1x16xf32> to vector<1x16xf32>
    %166 = vector.broadcast %165 : vector<1x16xf32> to vector<96x16xf32>
    %c3 = arith.constant 3 : index
    %c0_159 = arith.constant 0 : index
    %167 = vector.load %arg11[%c3, %c0_159] : memref<112x16xbf16, #tpu.memory_space<vmem>>, vector<96x16xbf16>
    %c2_160 = arith.constant 2 : index
    %c0_161 = arith.constant 0 : index
    %c0_162 = arith.constant 0 : index
    %c0_163 = arith.constant 0 : index
    %168 = vector.load %arg5[%c2_160, %c0_161, %c0_162, %c0_163] : memref<3x3x16x16xbf16, #tpu.memory_space<vmem>>, vector<1x1x16x16xbf16>
    %169 = vector.shape_cast %168 : vector<1x1x16x16xbf16> to vector<16x16xbf16>
    %cst_164 = arith.constant dense<0.000000e+00> : vector<96x16xf32>
    %170 = tpu.matmul %167, %169, %cst_164 {dimension_numbers = #tpu.dot_dimension_numbers<[1], [0], [0], [1], [0, 0, 1, 1], [], []>} : vector<96x16xbf16>, vector<16x16xbf16>, vector<96x16xf32> -> vector<96x16xf32>
    %171 = arith.addf %166, %170 : vector<96x16xf32>
    %c8_165 = arith.constant 8 : index
    %c0_166 = arith.constant 0 : index
    %172 = vector.load %arg11[%c8_165, %c0_166] : memref<112x16xbf16, #tpu.memory_space<vmem>>, vector<96x16xbf16>
    %c2_167 = arith.constant 2 : index
    %c1_168 = arith.constant 1 : index
    %c0_169 = arith.constant 0 : index
    %c0_170 = arith.constant 0 : index
    %173 = vector.load %arg5[%c2_167, %c1_168, %c0_169, %c0_170] : memref<3x3x16x16xbf16, #tpu.memory_space<vmem>>, vector<1x1x16x16xbf16>
    %174 = vector.shape_cast %173 : vector<1x1x16x16xbf16> to vector<16x16xbf16>
    %cst_171 = arith.constant dense<0.000000e+00> : vector<96x16xf32>
    %175 = tpu.matmul %172, %174, %cst_171 {dimension_numbers = #tpu.dot_dimension_numbers<[1], [0], [0], [1], [0, 0, 1, 1], [], []>} : vector<96x16xbf16>, vector<16x16xbf16>, vector<96x16xf32> -> vector<96x16xf32>
    %176 = arith.addf %171, %175 : vector<96x16xf32>
    %c13 = arith.constant 13 : index
    %c0_172 = arith.constant 0 : index
    %177 = vector.load %arg11[%c13, %c0_172] : memref<112x16xbf16, #tpu.memory_space<vmem>>, vector<96x16xbf16>
    %c2_173 = arith.constant 2 : index
    %c2_174 = arith.constant 2 : index
    %c0_175 = arith.constant 0 : index
    %c0_176 = arith.constant 0 : index
    %178 = vector.load %arg5[%c2_173, %c2_174, %c0_175, %c0_176] : memref<3x3x16x16xbf16, #tpu.memory_space<vmem>>, vector<1x1x16x16xbf16>
    %179 = vector.shape_cast %178 : vector<1x1x16x16xbf16> to vector<16x16xbf16>
    %cst_177 = arith.constant dense<0.000000e+00> : vector<96x16xf32>
    %180 = tpu.matmul %177, %179, %cst_177 {dimension_numbers = #tpu.dot_dimension_numbers<[1], [0], [0], [1], [0, 0, 1, 1], [], []>} : vector<96x16xbf16>, vector<16x16xbf16>, vector<96x16xf32> -> vector<96x16xf32>
    %181 = arith.addf %176, %180 : vector<96x16xf32>
    %cst_178 = arith.constant 0.000000e+00 : f32
    %182 = vector.broadcast %cst_178 : f32 to vector<96x16xf32>
    %183 = arith.cmpf oge, %181, %182 : vector<96x16xf32>
    %cst_179 = arith.constant 1.000000e-01 : f32
    %184 = vector.broadcast %cst_179 : f32 to vector<96x16xf32>
    %185 = arith.mulf %184, %181 : vector<96x16xf32>
    %186 = arith.select %183, %181, %185 : vector<96x16xi1>, vector<96x16xf32>
    %187 = arith.truncf %186 : vector<96x16xf32> to vector<96x16xbf16>
    %c8_180 = arith.constant 8 : index
    %c0_181 = arith.constant 0 : index
    %188 = vector.load %arg12[%c8_180, %c0_181] : memref<112x16xbf16, #tpu.memory_space<vmem>>, vector<96x16xbf16>
    tpu.vector_store %arg12[%c8_180, %c0_181], %187 {strides = array<i32>} : memref<112x16xbf16, #tpu.memory_space<vmem>>, vector<96x16xbf16>,
    %c0_i32_182 = arith.constant 0 : i32
    %189 = arith.cmpi eq, %arg1, %c0_i32_182 : i32
    %190 = arith.extui %189 : i1 to i32
    %c0_i32_183 = arith.constant 0 : i32
    %191 = arith.cmpi ne, %190, %c0_i32_183 : i32
    scf.if %191 {
      %c8_223 = arith.constant 8 : index
      %c0_224 = arith.constant 0 : index
      %227 = vector.load %arg12[%c8_223, %c0_224] : memref<112x16xbf16, #tpu.memory_space<vmem>>, vector<16x16xbf16>
      tpu.vector_store %arg12[%c8_223, %c0_224], %17 {strides = array<i32>} : memref<112x16xbf16, #tpu.memory_space<vmem>>, vector<16x16xbf16>,
    } else {
    }
    %c0_i32_184 = arith.constant 0 : i32
    %192 = arith.cmpi eq, %arg1, %c0_i32_184 : i32
    %193 = arith.extui %192 : i1 to i32
    %c0_i32_185 = arith.constant 0 : i32
    %194 = arith.cmpi ne, %193, %c0_i32_185 : i32
    scf.if %194 {
      %c88_223 = arith.constant 88 : index
      %c0_224 = arith.constant 0 : index
      %227 = vector.load %arg12[%c88_223, %c0_224] : memref<112x16xbf16, #tpu.memory_space<vmem>>, vector<16x16xbf16>
      tpu.vector_store %arg12[%c88_223, %c0_224], %17 {strides = array<i32>} : memref<112x16xbf16, #tpu.memory_space<vmem>>, vector<16x16xbf16>,
    } else {
    }
    %c2_186 = arith.constant 2 : index
    %c0_187 = arith.constant 0 : index
    %c0_188 = arith.constant 0 : index
    %195 = vector.load %arg8[%c2_186, %c0_187, %c0_188] : memref<3x1x16xf32, #tpu.memory_space<vmem>>, vector<1x1x16xf32>
    %196 = vector.shape_cast %195 : vector<1x1x16xf32> to vector<1x16xf32>
    %197 = vector.shape_cast %196 : vector<1x16xf32> to vector<1x16xf32>
    %198 = vector.broadcast %197 : vector<1x16xf32> to vector<96x16xf32>
    %c7_189 = arith.constant 7 : index
    %c0_190 = arith.constant 0 : index
    %199 = vector.load %arg12[%c7_189, %c0_190] : memref<112x16xbf16, #tpu.memory_space<vmem>>, vector<96x16xbf16>
    %c2_191 = arith.constant 2 : index
    %c0_192 = arith.constant 0 : index
    %c0_193 = arith.constant 0 : index
    %c0_194 = arith.constant 0 : index
    %200 = vector.load %arg7[%c2_191, %c0_192, %c0_193, %c0_194] : memref<3x3x16x16xbf16, #tpu.memory_space<vmem>>, vector<1x1x16x16xbf16>
    %201 = vector.shape_cast %200 : vector<1x1x16x16xbf16> to vector<16x16xbf16>
    %cst_195 = arith.constant dense<0.000000e+00> : vector<96x16xf32>
    %202 = tpu.matmul %199, %201, %cst_195 {dimension_numbers = #tpu.dot_dimension_numbers<[1], [0], [0], [1], [0, 0, 1, 1], [], []>} : vector<96x16xbf16>, vector<16x16xbf16>, vector<96x16xf32> -> vector<96x16xf32>
    %203 = arith.addf %198, %202 : vector<96x16xf32>
    %c8_196 = arith.constant 8 : index
    %c0_197 = arith.constant 0 : index
    %204 = vector.load %arg12[%c8_196, %c0_197] : memref<112x16xbf16, #tpu.memory_space<vmem>>, vector<96x16xbf16>
    %c2_198 = arith.constant 2 : index
    %c1_199 = arith.constant 1 : index
    %c0_200 = arith.constant 0 : index
    %c0_201 = arith.constant 0 : index
    %205 = vector.load %arg7[%c2_198, %c1_199, %c0_200, %c0_201] : memref<3x3x16x16xbf16, #tpu.memory_space<vmem>>, vector<1x1x16x16xbf16>
    %206 = vector.shape_cast %205 : vector<1x1x16x16xbf16> to vector<16x16xbf16>
    %cst_202 = arith.constant dense<0.000000e+00> : vector<96x16xf32>
    %207 = tpu.matmul %204, %206, %cst_202 {dimension_numbers = #tpu.dot_dimension_numbers<[1], [0], [0], [1], [0, 0, 1, 1], [], []>} : vector<96x16xbf16>, vector<16x16xbf16>, vector<96x16xf32> -> vector<96x16xf32>
    %208 = arith.addf %203, %207 : vector<96x16xf32>
    %c9_203 = arith.constant 9 : index
    %c0_204 = arith.constant 0 : index
    %209 = vector.load %arg12[%c9_203, %c0_204] : memref<112x16xbf16, #tpu.memory_space<vmem>>, vector<96x16xbf16>
    %c2_205 = arith.constant 2 : index
    %c2_206 = arith.constant 2 : index
    %c0_207 = arith.constant 0 : index
    %c0_208 = arith.constant 0 : index
    %210 = vector.load %arg7[%c2_205, %c2_206, %c0_207, %c0_208] : memref<3x3x16x16xbf16, #tpu.memory_space<vmem>>, vector<1x1x16x16xbf16>
    %211 = vector.shape_cast %210 : vector<1x1x16x16xbf16> to vector<16x16xbf16>
    %cst_209 = arith.constant dense<0.000000e+00> : vector<96x16xf32>
    %212 = tpu.matmul %209, %211, %cst_209 {dimension_numbers = #tpu.dot_dimension_numbers<[1], [0], [0], [1], [0, 0, 1, 1], [], []>} : vector<96x16xbf16>, vector<16x16xbf16>, vector<96x16xf32> -> vector<96x16xf32>
    %213 = arith.addf %208, %212 : vector<96x16xf32>
    %c8_210 = arith.constant 8 : index
    %c0_211 = arith.constant 0 : index
    %214 = vector.load %arg10[%c8_210, %c0_211] : memref<112x16xf32, #tpu.memory_space<vmem>>, vector<96x16xf32>
    %215 = arith.addf %214, %213 : vector<96x16xf32>
    %c8_212 = arith.constant 8 : index
    %c0_213 = arith.constant 0 : index
    %216 = vector.load %arg10[%c8_212, %c0_213] : memref<112x16xf32, #tpu.memory_space<vmem>>, vector<96x16xf32>
    tpu.vector_store %arg10[%c8_212, %c0_213], %215 {strides = array<i32>} : memref<112x16xf32, #tpu.memory_space<vmem>>, vector<96x16xf32>,
    %c0_i32_214 = arith.constant 0 : i32
    %217 = arith.cmpi eq, %arg1, %c0_i32_214 : i32
    %218 = arith.extui %217 : i1 to i32
    %c0_i32_215 = arith.constant 0 : i32
    %219 = arith.cmpi ne, %218, %c0_i32_215 : i32
    scf.if %219 {
      %c8_223 = arith.constant 8 : index
      %c0_224 = arith.constant 0 : index
      %227 = vector.load %arg10[%c8_223, %c0_224] : memref<112x16xf32, #tpu.memory_space<vmem>>, vector<16x16xf32>
      tpu.vector_store %arg10[%c8_223, %c0_224], %18 {strides = array<i32>} : memref<112x16xf32, #tpu.memory_space<vmem>>, vector<16x16xf32>,
    } else {
    }
    %c0_i32_216 = arith.constant 0 : i32
    %220 = arith.cmpi eq, %arg1, %c0_i32_216 : i32
    %221 = arith.extui %220 : i1 to i32
    %c0_i32_217 = arith.constant 0 : i32
    %222 = arith.cmpi ne, %221, %c0_i32_217 : i32
    scf.if %222 {
      %c88_223 = arith.constant 88 : index
      %c0_224 = arith.constant 0 : index
      %227 = vector.load %arg10[%c88_223, %c0_224] : memref<112x16xf32, #tpu.memory_space<vmem>>, vector<16x16xf32>
      tpu.vector_store %arg10[%c88_223, %c0_224], %18 {strides = array<i32>} : memref<112x16xf32, #tpu.memory_space<vmem>>, vector<16x16xf32>,
    } else {
    }
    %c24_218 = arith.constant 24 : index
    %c0_219 = arith.constant 0 : index
    %223 = vector.load %arg10[%c24_218, %c0_219] : memref<112x16xf32, #tpu.memory_space<vmem>>, vector<64x16xf32>
    %c0_220 = arith.constant 0 : index
    %c0_221 = arith.constant 0 : index
    %c0_222 = arith.constant 0 : index
    %224 = vector.load %arg9[%c0_220, %c0_221, %c0_222] : memref<1x64x16xf32, #tpu.memory_space<vmem>>, vector<1x64x16xf32>
    %225 = vector.shape_cast %224 : vector<1x64x16xf32> to vector<64x16xf32>
    %226 = vector.shape_cast %223 : vector<64x16xf32> to vector<1x64x16xf32>
    tpu.vector_store %arg9[%c0_220, %c0_221, %c0_222], %226 {strides = array<i32>} : memref<1x64x16xf32, #tpu.memory_space<vmem>>, vector<1x64x16xf32>,
    return
  }
  func.func @transform_0(%arg0: i32, %arg1: i32) -> (i32, i32, i32) {
    %c0_i32 = arith.constant 0 : i32
    %c0_i32_0 = arith.constant 0 : i32
    return %arg0, %arg1, %c0_i32 : i32, i32, i32
  }
  func.func @transform_1(%arg0: i32, %arg1: i32) -> (i32, i32, i32) {
    %c4_i32 = arith.constant 4 : i32
    %0 = arith.muli %arg1, %c4_i32 : i32
    %c1_i32 = arith.constant 1 : i32
    %1 = arith.subi %0, %c1_i32 : i32
    %c0_i32 = arith.constant 0 : i32
    %2 = arith.maxsi %1, %c0_i32 : i32
    %c0_i32_0 = arith.constant 0 : i32
    %c0_i32_1 = arith.constant 0 : i32
    return %arg0, %2, %c0_i32_0 : i32, i32, i32
  }
  func.func @transform_2(%arg0: i32, %arg1: i32) -> (i32, i32, i32) {
    %c1_i32 = arith.constant 1 : i32
    %0 = arith.addi %arg1, %c1_i32 : i32
    %c4_i32 = arith.constant 4 : i32
    %1 = arith.muli %0, %c4_i32 : i32
    %c3_i32 = arith.constant 3 : i32
    %2 = arith.minsi %1, %c3_i32 : i32
    %c0_i32 = arith.constant 0 : i32
    %c0_i32_0 = arith.constant 0 : i32
    return %arg0, %2, %c0_i32 : i32, i32, i32
  }
  func.func @transform_3(%arg0: i32, %arg1: i32) -> (i32, i32, i32, i32) {
    %c0_i32 = arith.constant 0 : i32
    %c0_i32_0 = arith.constant 0 : i32
    %c0_i32_1 = arith.constant 0 : i32
    %c0_i32_2 = arith.constant 0 : i32
    %c0_i32_3 = arith.constant 0 : i32
    return %c0_i32, %c0_i32_0, %c0_i32_1, %c0_i32_2 : i32, i32, i32, i32
  }
  func.func @transform_4(%arg0: i32, %arg1: i32) -> (i32, i32, i32) {
    %c0_i32 = arith.constant 0 : i32
    %c0_i32_0 = arith.constant 0 : i32
    %c0_i32_1 = arith.constant 0 : i32
    %c0_i32_2 = arith.constant 0 : i32
    return %c0_i32, %c0_i32_0, %c0_i32_1 : i32, i32, i32
  }
  func.func @transform_5(%arg0: i32, %arg1: i32) -> (i32, i32, i32, i32) {
    %c0_i32 = arith.constant 0 : i32
    %c0_i32_0 = arith.constant 0 : i32
    %c0_i32_1 = arith.constant 0 : i32
    %c0_i32_2 = arith.constant 0 : i32
    %c0_i32_3 = arith.constant 0 : i32
    return %c0_i32, %c0_i32_0, %c0_i32_1, %c0_i32_2 : i32, i32, i32, i32
  }
  func.func @transform_6(%arg0: i32, %arg1: i32) -> (i32, i32, i32) {
    %c0_i32 = arith.constant 0 : i32
    %c0_i32_0 = arith.constant 0 : i32
    %c0_i32_1 = arith.constant 0 : i32
    %c0_i32_2 = arith.constant 0 : i32
    return %c0_i32, %c0_i32_0, %c0_i32_1 : i32, i32, i32
  }
  func.func @transform_7(%arg0: i32, %arg1: i32) -> (i32, i32, i32) {
    %c0_i32 = arith.constant 0 : i32
    %c0_i32_0 = arith.constant 0 : i32
    return %arg0, %arg1, %c0_i32 : i32, i32, i32
  }
}

</mosaic_0001>

<llo_original>
// kernel: tpu_custom_call.1
$region0: #{tpu_custom_call.1}
  #allocation0 [shape = 'u32[]', space=smem, size = 0x4, offset = 0x4, fixed_abs, tag = 'smem constant byte address 0x4 - core index']
  #allocation1 [shape = 'u32[144,128]{1,0:T(1,128)}', space=vmem, size = 0x12000, scoped, tag = 'internal scratch']
  #allocation2 [shape = 'f32[112,16]{1,0:T(8,128)}', space=vmem, size = 0xe000, scoped, tag = 'scratch operand']
  #allocation3 [shape = 'bf16[112,16]{1,0:T(16,128)(2,1)}', space=vmem, size = 0x7000, scoped, tag = 'scratch operand']
  #allocation4 [shape = 'bf16[112,16]{1,0:T(16,128)(2,1)}', space=vmem, size = 0x7000, scoped, tag = 'scratch operand']
  %s0 = inlined_call_operand.vmem [shape: f32[2,64,16], index: 0, kind: input, shape index: {}]
  %s1 = inlined_call_operand.vmem [shape: f32[2,64,16], index: 1, kind: input, shape index: {}]
  %s2 = inlined_call_operand.vmem [shape: f32[2,64,16], index: 2, kind: input, shape index: {}]
  %s3 = inlined_call_operand.vmem [shape: bf16[3,3,16,16], index: 3, kind: input, shape index: {}]
  %s4 = inlined_call_operand.vmem [shape: f32[3,1,16], index: 4, kind: input, shape index: {}]
  %s5 = inlined_call_operand.vmem [shape: bf16[3,3,16,16], index: 5, kind: input, shape index: {}]
  %s6 = inlined_call_operand.vmem [shape: f32[3,1,16], index: 6, kind: input, shape index: {}]
  %s7 = inlined_call_operand.vmem [shape: f32[2,64,16], index: 7, kind: output, shape index: {}]
  %s8 = sld [smem:[#allocation0]]
  $region93: #{tpu_custom_call.1} parent=0
    _
  %s10 = ssub.s32 1, %s8
  %s11 = scalar_select 0, %s10, %s8
  loop: start=0, step=1, limit=4
  $region2: #{tpu_custom_call.1} parent=0 // loop_pre_header
    _
  $region3: #{tpu_custom_call.1} parent=0 // loop_header
    %s13 = sphi 0, %s17
    %p14 = scmp.ge.s32.totalorder %s13, 4
    %s20 = sphi 0, %s32
    %s21 = sphi 0, %s28
    %s22 = sphi 0, %s20
    %s23 = sphi 0, %s21
    %s24 = sphi 0, %s22
    %s25 = sphi 0, %s23
    %s37 = sphi 0, %s39
    %s40 = sphi 0, %s37
    %s41 = sphi 0, %s40
    %s57 = sphi 0, %s41
    %s73 = sphi 0, %s75
    %s76 = sphi 0, %s73
    %s77 = sphi 0, %s76
    %s93 = sphi 0, %s77
    %s109 = sphi 0, %s111
    %s112 = sphi 0, %s109
    %s113 = sphi 0, %s112
    %s129 = sphi 0, %s113
    %s133 = sphi 0, %s133
    %s135 = sphi 0, %s133
    %s136 = sphi 0, %s135
    %s150 = sphi 0, %s136
    %s154 = sphi 0, %s154
    %s156 = sphi 0, %s154
    %s157 = sphi 0, %s156
    %s171 = sphi 0, %s157
    %s175 = sphi 0, %s175
    %s177 = sphi 0, %s175
    %s178 = sphi 0, %s177
    %s192 = sphi 0, %s178
    %s196 = sphi 0, %s196
    %s198 = sphi 0, %s196
    %s199 = sphi 0, %s198
    %s213 = sphi 0, %s199
    %s221 = sphi 0, %s223
    %s224 = sphi 0, %s221
    %s225 = sphi 0, %s224
    %s241 = sphi 0, %s225
  $region4: #{tpu_custom_call.1} parent=0 // loop_header_branch
    %16 = sbr.rel (%p14) target = $region8
  $region5: #{tpu_custom_call.1} parent=0 // loop_body
    %s18 = ssub.s32 %s13, 1
    %s19 = ssub.s32 %s13, 2
    %s26 = sadd.s32 1, %s21
    %p27 = scmp.ge.s32.totalorder %s26, 1
    %s28 = scalar_select %p27, 0, %s26
    %s29 = sadd.s32 1, %s20
    %s30 = scalar_select %p27, %s29, %s20
    %p31 = scmp.ge.s32.totalorder %s30, 2
    %s32 = scalar_select %p31, 0, %s30
    %s33 = ssub.s32 %s20, %s32
    %s34 = ssub.s32 %s21, %s28
    %s35 = sor.u32 %s33, %s34
    %p36 = scmp.eq.s32.totalorder %s35, 0
    %s38 = sadd.s32 %s37, 1
    %s39 = scalar_select %p36, %s37, %s38
    %p42 = pneg %p36
    %p43 = scmp.eq.s32.totalorder %s13, 1
    %p44 = por %p42, %p43
    %p45 = scmp.ne.s32.totalorder %s37, %s40
    %p46 = scmp.eq.s32.totalorder %s13, 0
    %p47 = por %p45, %p46
    %p48 = scmp.ne.s32.totalorder %s37, %s40
    %p49 = scmp.eq.s32.totalorder %s18, 1
    %p50 = por %p48, %p49
    %p51 = scmp.ne.s32.totalorder %s40, %s41
    %p52 = scmp.eq.s32.totalorder %s18, 0
    %p53 = por %p51, %p52
    %p54 = scmp.ne.s32.totalorder %s40, %s41
    %p55 = scmp.eq.s32.totalorder %s19, 1
    %p56 = por %p54, %p55
    %p58 = scmp.ne.s32.totalorder %s41, %s57
    %p59 = scmp.eq.s32.totalorder %s19, 0
    %p60 = por %p58, %p59
    %s61 = smul.u32 %s21, 4
    %s62 = ssub.s32 %s61, 1
    %p63 = scmp.gt.s32.totalorder %s62, 0
    %s64 = scalar_select %p63, %s62, 0
    %s65 = smul.u32 %s28, 4
    %s66 = ssub.s32 %s65, 1
    %p67 = scmp.gt.s32.totalorder %s66, 0
    %s68 = scalar_select %p67, %s66, 0
    %s69 = ssub.s32 %s20, %s32
    %s70 = ssub.s32 %s64, %s68
    %s71 = sor.u32 %s69, %s70
    %p72 = scmp.eq.s32.totalorder %s71, 0
    %s74 = sadd.s32 %s73, 1
    %s75 = scalar_select %p72, %s73, %s74
    %p78 = pneg %p72
    %p79 = scmp.eq.s32.totalorder %s13, 1
    %p80 = por %p78, %p79
    %p81 = scmp.ne.s32.totalorder %s73, %s76
    %p82 = scmp.eq.s32.totalorder %s13, 0
    %p83 = por %p81, %p82
    %p84 = scmp.ne.s32.totalorder %s73, %s76
    %p85 = scmp.eq.s32.totalorder %s18, 1
    %p86 = por %p84, %p85
    %p87 = scmp.ne.s32.totalorder %s76, %s77
    %p88 = scmp.eq.s32.totalorder %s18, 0
    %p89 = por %p87, %p88
    %p90 = scmp.ne.s32.totalorder %s76, %s77
    %p91 = scmp.eq.s32.totalorder %s19, 1
    %p92 = por %p90, %p91
    %p94 = scmp.ne.s32.totalorder %s77, %s93
    %p95 = scmp.eq.s32.totalorder %s19, 0
    %p96 = por %p94, %p95
    %s97 = sadd.s32 %s21, 1
    %s98 = smul.u32 %s97, 4
    %p99 = scmp.lt.s32.totalorder %s98, 3
    %s100 = scalar_select %p99, %s98, 3
    %s101 = sadd.s32 %s28, 1
    %s102 = smul.u32 %s101, 4
    %p103 = scmp.lt.s32.totalorder %s102, 3
    %s104 = scalar_select %p103, %s102, 3
    %s105 = ssub.s32 %s20, %s32
    %s106 = ssub.s32 %s100, %s104
    %s107 = sor.u32 %s105, %s106
    %p108 = scmp.eq.s32.totalorder %s107, 0
    %s110 = sadd.s32 %s109, 1
    %s111 = scalar_select %p108, %s109, %s110
    %p114 = pneg %p108
    %p115 = scmp.eq.s32.totalorder %s13, 1
    %p116 = por %p114, %p115
    %p117 = scmp.ne.s32.totalorder %s109, %s112
    %p118 = scmp.eq.s32.totalorder %s13, 0
    %p119 = por %p117, %p118
    %p120 = scmp.ne.s32.totalorder %s109, %s112
    %p121 = scmp.eq.s32.totalorder %s18, 1
    %p122 = por %p120, %p121
    %p123 = scmp.ne.s32.totalorder %s112, %s113
    %p124 = scmp.eq.s32.totalorder %s18, 0
    %p125 = por %p123, %p124
    %p126 = scmp.ne.s32.totalorder %s112, %s113
    %p127 = scmp.eq.s32.totalorder %s19, 1
    %p128 = por %p126, %p127
    %p130 = scmp.ne.s32.totalorder %s113, %s129
    %p131 = scmp.eq.s32.totalorder %s19, 0
    %p132 = por %p130, %p131
    %s134 = sadd.s32 %s133, 1
    %p137 = scmp.eq.s32.totalorder %s13, 1
    %p138 = scmp.ne.s32.totalorder %s133, %s135
    %p139 = scmp.eq.s32.totalorder %s13, 0
    %p140 = por %p138, %p139
    %p141 = scmp.ne.s32.totalorder %s133, %s135
    %p142 = scmp.eq.s32.totalorder %s18, 1
    %p143 = por %p141, %p142
    %p144 = scmp.ne.s32.totalorder %s135, %s136
    %p145 = scmp.eq.s32.totalorder %s18, 0
    %p146 = por %p144, %p145
    %p147 = scmp.ne.s32.totalorder %s135, %s136
    %p148 = scmp.eq.s32.totalorder %s19, 1
    %p149 = por %p147, %p148
    %p151 = scmp.ne.s32.totalorder %s136, %s150
    %p152 = scmp.eq.s32.totalorder %s19, 0
    %p153 = por %p151, %p152
    %s155 = sadd.s32 %s154, 1
    %p158 = scmp.eq.s32.totalorder %s13, 1
    %p159 = scmp.ne.s32.totalorder %s154, %s156
    %p160 = scmp.eq.s32.totalorder %s13, 0
    %p161 = por %p159, %p160
    %p162 = scmp.ne.s32.totalorder %s154, %s156
    %p163 = scmp.eq.s32.totalorder %s18, 1
    %p164 = por %p162, %p163
    %p165 = scmp.ne.s32.totalorder %s156, %s157
    %p166 = scmp.eq.s32.totalorder %s18, 0
    %p167 = por %p165, %p166
    %p168 = scmp.ne.s32.totalorder %s156, %s157
    %p169 = scmp.eq.s32.totalorder %s19, 1
    %p170 = por %p168, %p169
    %p172 = scmp.ne.s32.totalorder %s157, %s171
    %p173 = scmp.eq.s32.totalorder %s19, 0
    %p174 = por %p172, %p173
    %s176 = sadd.s32 %s175, 1
    %p179 = scmp.eq.s32.totalorder %s13, 1
    %p180 = scmp.ne.s32.totalorder %s175, %s177
    %p181 = scmp.eq.s32.totalorder %s13, 0
    %p182 = por %p180, %p181
    %p183 = scmp.ne.s32.totalorder %s175, %s177
    %p184 = scmp.eq.s32.totalorder %s18, 1
    %p185 = por %p183, %p184
    %p186 = scmp.ne.s32.totalorder %s177, %s178
    %p187 = scmp.eq.s32.totalorder %s18, 0
    %p188 = por %p186, %p187
    %p189 = scmp.ne.s32.totalorder %s177, %s178
    %p190 = scmp.eq.s32.totalorder %s19, 1
    %p191 = por %p189, %p190
    %p193 = scmp.ne.s32.totalorder %s178, %s192
    %p194 = scmp.eq.s32.totalorder %s19, 0
    %p195 = por %p193, %p194
    %s197 = sadd.s32 %s196, 1
    %p200 = scmp.eq.s32.totalorder %s13, 1
    %p201 = scmp.ne.s32.totalorder %s196, %s198
    %p202 = scmp.eq.s32.totalorder %s13, 0
    %p203 = por %p201, %p202
    %p204 = scmp.ne.s32.totalorder %s196, %s198
    %p205 = scmp.eq.s32.totalorder %s18, 1
    %p206 = por %p204, %p205
    %p207 = scmp.ne.s32.totalorder %s198, %s199
    %p208 = scmp.eq.s32.totalorder %s18, 0
    %p209 = por %p207, %p208
    %p210 = scmp.ne.s32.totalorder %s198, %s199
    %p211 = scmp.eq.s32.totalorder %s19, 1
    %p212 = por %p210, %p211
    %p214 = scmp.ne.s32.totalorder %s199, %s213
    %p215 = scmp.eq.s32.totalorder %s19, 0
    %p216 = por %p214, %p215
    %s217 = ssub.s32 %s20, %s32
    %s218 = ssub.s32 %s21, %s28
    %s219 = sor.u32 %s217, %s218
    %p220 = scmp.eq.s32.totalorder %s219, 0
    %s222 = sadd.s32 %s221, 1
    %s223 = scalar_select %p220, %s221, %s222
    %p226 = pneg %p220
    %p227 = scmp.eq.s32.totalorder %s13, 1
    %p228 = por %p226, %p227
    %p229 = scmp.ne.s32.totalorder %s221, %s224
    %p230 = scmp.eq.s32.totalorder %s13, 0
    %p231 = por %p229, %p230
    %p232 = scmp.ne.s32.totalorder %s221, %s224
    %p233 = scmp.eq.s32.totalorder %s18, 1
    %p234 = por %p232, %p233
    %p235 = scmp.ne.s32.totalorder %s224, %s225
    %p236 = scmp.eq.s32.totalorder %s18, 0
    %p237 = por %p235, %p236
    %p238 = scmp.ne.s32.totalorder %s224, %s225
    %p239 = scmp.eq.s32.totalorder %s19, 1
    %p240 = por %p238, %p239
    %p242 = scmp.ne.s32.totalorder %s225, %s241
    %p243 = scmp.eq.s32.totalorder %s19, 0
    %p244 = por %p242, %p243
    %p245 = scmp.le.s32.totalorder 1, %s13
    %p246 = scmp.lt.s32.totalorder %s13, 3
    %p247 = pnand %p245, %p246
    %p248 = pneg %p247
    // Predicated region
    $region9: #{tpu_custom_call.1} parent=5 // pred_check
      _
    $region10: #{tpu_custom_call.1} parent=5 // pred_check_branch
      %250 = sbr.rel (%p247) target = $region12
    $region11: #{tpu_custom_call.1} parent=5 // pred_region
      %s251 = ssub.s32 %s13, 1
      // Predicated region
      $region13: #{tpu_custom_call.1} parent=11 // pred_check
        %p252 = pneg %p146
      $region14: #{tpu_custom_call.1} parent=11 // pred_check_branch
        %254 = sbr.rel (%p252) target = $region16
      $region15: #{tpu_custom_call.1} parent=11 // pred_region
        _
      $region16: #{tpu_custom_call.1} parent=11 // pred_fallthru
        _
      // Predicated region
      $region17: #{tpu_custom_call.1} parent=11 // pred_check
        %p255 = pneg %p167
      $region18: #{tpu_custom_call.1} parent=11 // pred_check_branch
        %257 = sbr.rel (%p255) target = $region20
      $region19: #{tpu_custom_call.1} parent=11 // pred_region
        _
      $region20: #{tpu_custom_call.1} parent=11 // pred_fallthru
        _
      // Predicated region
      $region21: #{tpu_custom_call.1} parent=11 // pred_check
        %p258 = pneg %p188
      $region22: #{tpu_custom_call.1} parent=11 // pred_check_branch
        %260 = sbr.rel (%p258) target = $region24
      $region23: #{tpu_custom_call.1} parent=11 // pred_region
        _
      $region24: #{tpu_custom_call.1} parent=11 // pred_fallthru
        _
      // Predicated region
      $region25: #{tpu_custom_call.1} parent=11 // pred_check
        %p261 = pneg %p209
      $region26: #{tpu_custom_call.1} parent=11 // pred_check_branch
        %263 = sbr.rel (%p261) target = $region28
      $region27: #{tpu_custom_call.1} parent=11 // pred_region
        _
      $region28: #{tpu_custom_call.1} parent=11 // pred_fallthru
        _
    $region12: #{tpu_custom_call.1} parent=5 // pred_fallthru
      _
    %p264 = scmp.lt.s32.totalorder %s13, 2
    // Predicated region
    $region29: #{tpu_custom_call.1} parent=5 // pred_check
      %p265 = pneg %p264
    $region30: #{tpu_custom_call.1} parent=5 // pred_check_branch
      %267 = sbr.rel (%p265) target = $region32
    $region31: #{tpu_custom_call.1} parent=5 // pred_region
      // Predicated region
      $region33: #{tpu_custom_call.1} parent=31 // pred_check
        %p268 = pneg %p47
      $region34: #{tpu_custom_call.1} parent=31 // pred_check_branch
        %270 = sbr.rel (%p268) target = $region36
      $region35: #{tpu_custom_call.1} parent=31 // pred_region
        %s271 = smul.u32 8, %s21
        %p272 = scmp.lt.s32.totalorder %s20, 1
        %s273 = scalar_select %p272, %s20, 1
        %p274 = scmp.lt.s32.totalorder %s271, 7
        %s275 = scalar_select %p274, %s271, 7
        %s276 = smul.addr %s273, 8
        %s277 = sadd.s32 %s275, %s276
        %s278 = smul.addr %s277, 8
        %s279 = scalar_lea.vmem %s0, %s278
        %s280 = smul.u32 8, %s21
      $region36: #{tpu_custom_call.1} parent=31 // pred_fallthru
        _
      // Predicated region
      $region37: #{tpu_custom_call.1} parent=31 // pred_check
        %p281 = pneg %p83
      $region38: #{tpu_custom_call.1} parent=31 // pred_check_branch
        %283 = sbr.rel (%p281) target = $region40
      $region39: #{tpu_custom_call.1} parent=31 // pred_region
        %s284 = smul.u32 %s21, 4
        %s285 = ssub.s32 %s284, 1
        %p286 = scmp.gt.s32.totalorder %s285, 0
        %s287 = scalar_select %p286, %s285, 0
        %s288 = smul.u32 2, %s287
        %p289 = scmp.lt.s32.totalorder %s20, 1
        %s290 = scalar_select %p289, %s20, 1
        %p291 = scmp.lt.s32.totalorder %s288, 7
        %s292 = scalar_select %p291, %s288, 7
        %s293 = smul.addr %s290, 8
        %s294 = sadd.s32 %s292, %s293
        %s295 = smul.addr %s294, 8
        %s296 = scalar_lea.vmem %s1, %s295
        %s297 = smul.u32 %s21, 4
        %s298 = ssub.s32 %s297, 1
        %p299 = scmp.gt.s32.totalorder %s298, 0
        %s300 = scalar_select %p299, %s298, 0
        %s301 = smul.u32 2, %s300
      $region40: #{tpu_custom_call.1} parent=31 // pred_fallthru
        _
      // Predicated region
      $region41: #{tpu_custom_call.1} parent=31 // pred_check
        %p302 = pneg %p119
      $region42: #{tpu_custom_call.1} parent=31 // pred_check_branch
        %304 = sbr.rel (%p302) target = $region44
      $region43: #{tpu_custom_call.1} parent=31 // pred_region
        %s305 = sadd.s32 %s21, 1
        %s306 = smul.u32 %s305, 4
        %p307 = scmp.lt.s32.totalorder %s306, 3
        %s308 = scalar_select %p307, %s306, 3
        %s309 = smul.u32 2, %s308
        %p310 = scmp.lt.s32.totalorder %s20, 1
        %s311 = scalar_select %p310, %s20, 1
        %p312 = scmp.lt.s32.totalorder %s309, 7
        %s313 = scalar_select %p312, %s309, 7
        %s314 = smul.addr %s311, 8
        %s315 = sadd.s32 %s313, %s314
        %s316 = smul.addr %s315, 8
        %s317 = scalar_lea.vmem %s2, %s316
        %s318 = sadd.s32 %s21, 1
        %s319 = smul.u32 %s318, 4
        %p320 = scmp.lt.s32.totalorder %s319, 3
        %s321 = scalar_select %p320, %s319, 3
        %s322 = smul.u32 2, %s321
      $region44: #{tpu_custom_call.1} parent=31 // pred_fallthru
        _
    $region32: #{tpu_custom_call.1} parent=5 // pred_fallthru
      _
    %p323 = scmp.le.s32.totalorder 1, %s13
    %p324 = scmp.lt.s32.totalorder %s13, 3
    %p325 = pnand %p323, %p324
    %p326 = pneg %p325
    // Predicated region
    $region45: #{tpu_custom_call.1} parent=5 // pred_check
      _
    $region46: #{tpu_custom_call.1} parent=5 // pred_check_branch
      %328 = sbr.rel (%p325) target = $region48
    $region47: #{tpu_custom_call.1} parent=5 // pred_region
      %s329 = ssub.s32 %s13, 1
      %s330 = smul.u32 8, %s23
      %p331 = scmp.lt.s32.totalorder %s22, 1
      %s332 = scalar_select %p331, %s22, 1
      %p333 = scmp.lt.s32.totalorder %s330, 7
      %s334 = scalar_select %p333, %s330, 7
      %s335 = smul.addr %s332, 8
      %s336 = sadd.s32 %s334, %s335
      %s337 = smul.addr %s336, 8
      %s338 = scalar_lea.vmem %s0, %s337
      %p339 = pneg %p53
      %p340 = pneg %p50
      %s341 = smul.u32 %s23, 4
      %s342 = ssub.s32 %s341, 1
      %p343 = scmp.gt.s32.totalorder %s342, 0
      %s344 = scalar_select %p343, %s342, 0
      %s345 = smul.u32 2, %s344
      %p346 = scmp.lt.s32.totalorder %s22, 1
      %s347 = scalar_select %p346, %s22, 1
      %p348 = scmp.lt.s32.totalorder %s345, 7
      %s349 = scalar_select %p348, %s345, 7
      %s350 = smul.addr %s347, 8
      %s351 = sadd.s32 %s349, %s350
      %s352 = smul.addr %s351, 8
      %s353 = scalar_lea.vmem %s1, %s352
      %p354 = pneg %p89
      %p355 = pneg %p86
      %s356 = sadd.s32 %s23, 1
      %s357 = smul.u32 %s356, 4
      %p358 = scmp.lt.s32.totalorder %s357, 3
      %s359 = scalar_select %p358, %s357, 3
      %s360 = smul.u32 2, %s359
      %p361 = scmp.lt.s32.totalorder %s22, 1
      %s362 = scalar_select %p361, %s22, 1
      %p363 = scmp.lt.s32.totalorder %s360, 7
      %s364 = scalar_select %p363, %s360, 7
      %s365 = smul.addr %s362, 8
      %s366 = sadd.s32 %s364, %s365
      %s367 = smul.addr %s366, 8
      %s368 = scalar_lea.vmem %s2, %s367
      %p369 = pneg %p125
      %p370 = pneg %p122
      %p371 = pneg %p146
      %p372 = pneg %p143
      %p373 = pneg %p167
      %p374 = pneg %p164
      %p375 = pneg %p188
      %p376 = pneg %p185
      %p377 = pneg %p209
      %p378 = pneg %p206
      %p379 = pneg %p237
      %p380 = pneg %p234
      %s381 = smul.u32 8, %s23
      %p382 = scmp.lt.s32.totalorder %s22, 1
      %s383 = scalar_select %p382, %s22, 1
      %p384 = scmp.lt.s32.totalorder %s381, 7
      %s385 = scalar_select %p384, %s381, 7
      %s386 = smul.addr %s383, 8
      %s387 = sadd.s32 %s385, %s386
      %s388 = smul.addr %s387, 8
      %s389 = scalar_lea.vmem %s7, %s388
      %s390 = smul.u32 8, %s23
      %p391 = scmp.lt.s32.totalorder %s22, 1
      %s392 = scalar_select %p391, %s22, 1
      %p393 = scmp.lt.s32.totalorder %s390, 7
      %s394 = scalar_select %p393, %s390, 7
      %s395 = smul.addr %s392, 8
      %s396 = sadd.s32 %s394, %s395
      %s397 = smul.addr %s396, 8
      %s398 = scalar_lea.vmem %s0, %s397
      %s399 = smul.u32 8, %s23
      %s400 = smul.u32 %s23, 4
      %s401 = ssub.s32 %s400, 1
      %p402 = scmp.gt.s32.totalorder %s401, 0
      %s403 = scalar_select %p402, %s401, 0
      %s404 = smul.u32 2, %s403
      %p405 = scmp.lt.s32.totalorder %s22, 1
      %s406 = scalar_select %p405, %s22, 1
      %p407 = scmp.lt.s32.totalorder %s404, 7
      %s408 = scalar_select %p407, %s404, 7
      %s409 = smul.addr %s406, 8
      %s410 = sadd.s32 %s408, %s409
      %s411 = smul.addr %s410, 8
      %s412 = scalar_lea.vmem %s1, %s411
      %s413 = smul.u32 %s23, 4
      %s414 = ssub.s32 %s413, 1
      %p415 = scmp.gt.s32.totalorder %s414, 0
      %s416 = scalar_select %p415, %s414, 0
      %s417 = smul.u32 2, %s416
      %s418 = sadd.s32 %s23, 1
      %s419 = smul.u32 %s418, 4
      %p420 = scmp.lt.s32.totalorder %s419, 3
      %s421 = scalar_select %p420, %s419, 3
      %s422 = smul.u32 2, %s421
      %p423 = scmp.lt.s32.totalorder %s22, 1
      %s424 = scalar_select %p423, %s22, 1
      %p425 = scmp.lt.s32.totalorder %s422, 7
      %s426 = scalar_select %p425, %s422, 7
      %s427 = smul.addr %s424, 8
      %s428 = sadd.s32 %s426, %s427
      %s429 = smul.addr %s428, 8
      %s430 = scalar_lea.vmem %s2, %s429
      %s431 = sadd.s32 %s23, 1
      %s432 = smul.u32 %s431, 4
      %p433 = scmp.lt.s32.totalorder %s432, 3
      %s434 = scalar_select %p433, %s432, 3
      %s435 = smul.u32 2, %s434
      %s436 = smul.u32 8, %s23
      %p437 = scmp.lt.s32.totalorder %s22, 1
      %s438 = scalar_select %p437, %s22, 1
      %p439 = scmp.lt.s32.totalorder %s436, 7
      %s440 = scalar_select %p439, %s436, 7
      %s441 = smul.addr %s438, 8
      %s442 = sadd.s32 %s440, %s441
      %s443 = smul.addr %s442, 8
      %s444 = scalar_lea.vmem %s7, %s443
      %s445 = smul.u32 8, %s23
      %vm447 = vcmask 130048
      %448 = vst.msk [vmem:[#allocation2] sm:$0xff] %vm447, 0.0
      %449 = vst.msk [vmem:[#allocation2 + $0x8] sm:$0xff] %vm447, 0.0
      %450 = vst.msk [vmem:[#allocation2 + $0x10] sm:$0xff] %vm447, 0.0
      %451 = vst.msk [vmem:[#allocation2 + $0x58] sm:$0xff] %vm447, 0.0
      %452 = vst.msk [vmem:[#allocation2 + $0x60] sm:$0xff] %vm447, 0.0
      %453 = vst.msk [vmem:[#allocation2 + $0x68] sm:$0xff] %vm447, 0.0
      %v454 = vld [vmem:[%s398] sm:$0xff]
      %v455 = vld [vmem:[%s398 + $0x8] sm:$0xff]
      %v456 = vld [vmem:[%s398 + $0x10] sm:$0xff]
      %v457 = vld [vmem:[%s398 + $0x18] sm:$0xff]
      %v458 = vld [vmem:[%s398 + $0x20] sm:$0xff]
      %v459 = vld [vmem:[%s398 + $0x28] sm:$0xff]
      %v460 = vld [vmem:[%s398 + $0x30] sm:$0xff]
      %v461 = vld [vmem:[%s398 + $0x38] sm:$0xff]
      %462 = vst.msk [vmem:[#allocation2 + $0x18] sm:$0xff] %vm447, %v454
      %463 = vst.msk [vmem:[#allocation2 + $0x20] sm:$0xff] %vm447, %v455
      %464 = vst.msk [vmem:[#allocation2 + $0x28] sm:$0xff] %vm447, %v456
      %465 = vst.msk [vmem:[#allocation2 + $0x30] sm:$0xff] %vm447, %v457
      %466 = vst.msk [vmem:[#allocation2 + $0x38] sm:$0xff] %vm447, %v458
      %467 = vst.msk [vmem:[#allocation2 + $0x40] sm:$0xff] %vm447, %v459
      %468 = vst.msk [vmem:[#allocation2 + $0x48] sm:$0xff] %vm447, %v460
      %469 = vst.msk [vmem:[#allocation2 + $0x50] sm:$0xff] %vm447, %v461
      %p470 = scmp.gt.s32.totalorder %s23, 0
      // Predicated region
      $region49: #{tpu_custom_call.1} parent=47 // pred_check
        %p471 = pneg %p470
      $region50: #{tpu_custom_call.1} parent=47 // pred_check_branch
        %473 = sbr.rel (%p471) target = $region52
      $region51: #{tpu_custom_call.1} parent=47 // pred_region
        %v474 = vld [vmem:[%s412] sm:$0xff]
        %v475 = vld [vmem:[%s412 + $0x8] sm:$0xff]
        %476 = vst.msk [vmem:[#allocation2 + $0x8] sm:$0xff] %vm447, %v474
        %477 = vst.msk [vmem:[#allocation2 + $0x10] sm:$0xff] %vm447, %v475
      $region52: #{tpu_custom_call.1} parent=47 // pred_fallthru
        _
      %p478 = scmp.lt.s32.totalorder %s23, 0
      // Predicated region
      $region53: #{tpu_custom_call.1} parent=47 // pred_check
        %p479 = pneg %p478
      $region54: #{tpu_custom_call.1} parent=47 // pred_check_branch
        %481 = sbr.rel (%p479) target = $region56
      $region55: #{tpu_custom_call.1} parent=47 // pred_region
        %v482 = vld [vmem:[%s430] sm:$0xff]
        %v483 = vld [vmem:[%s430 + $0x8] sm:$0xff]
        %484 = vst.msk [vmem:[#allocation2 + $0x58] sm:$0xff] %vm447, %v482
        %485 = vst.msk [vmem:[#allocation2 + $0x60] sm:$0xff] %vm447, %v483
      $region56: #{tpu_custom_call.1} parent=47 // pred_fallthru
        _
      %vm486 = vcmask 125952
      %487 = vst.msk [vmem:[#allocation4] sm:$0xf] %vm486, 0
      %vm488 = vcmask 130052
      %489 = vst.msk [vmem:[#allocation4 + $0x30] sm:$0xf0] %vm488, 0
      %v490 = vld [vmem:[#allocation2] sm:$0xff]
      %v491 = vld [vmem:[#allocation2 + $0x8] sm:$0xff]
      %v492 = vld [vmem:[#allocation2 + $0x10] sm:$0xff]
      %v493 = vld [vmem:[#allocation2 + $0x18] sm:$0xff]
      %v494 = vld [vmem:[#allocation2 + $0x20] sm:$0xff]
      %v495 = vld [vmem:[#allocation2 + $0x28] sm:$0xff]
      %v496 = vld [vmem:[#allocation2 + $0x30] sm:$0xff]
      %v497 = vld [vmem:[#allocation2 + $0x38] sm:$0xff]
      %v498 = vld [vmem:[#allocation2 + $0x40] sm:$0xff]
      %v499 = vld [vmem:[#allocation2 + $0x48] sm:$0xff]
      %v500 = vld [vmem:[#allocation2 + $0x50] sm:$0xff]
      %v501 = vld [vmem:[#allocation2 + $0x58] sm:$0xff]
      %v502 = vld [vmem:[#allocation2 + $0x60] sm:$0xff]
      %v503 = vld [vmem:[#allocation2 + $0x68] sm:$0xff]
      %vm504 = vcmp.ge.f32.partialorder %v490, 0.0
      %vm505 = vcmp.ge.f32.partialorder %v491, 0.0
      %vm506 = vcmp.ge.f32.partialorder %v492, 0.0
      %vm507 = vcmp.ge.f32.partialorder %v493, 0.0
      %vm508 = vcmp.ge.f32.partialorder %v494, 0.0
      %vm509 = vcmp.ge.f32.partialorder %v495, 0.0
      %vm510 = vcmp.ge.f32.partialorder %v496, 0.0
      %vm511 = vcmp.ge.f32.partialorder %v497, 0.0
      %vm512 = vcmp.ge.f32.partialorder %v498, 0.0
      %vm513 = vcmp.ge.f32.partialorder %v499, 0.0
      %vm514 = vcmp.ge.f32.partialorder %v500, 0.0
      %vm515 = vcmp.ge.f32.partialorder %v501, 0.0
      %vm516 = vcmp.ge.f32.partialorder %v502, 0.0
      %vm517 = vcmp.ge.f32.partialorder %v503, 0.0
      %v518 = vmul.f32 %v490, 0.1
      %v519 = vmul.f32 %v491, 0.1
      %v520 = vmul.f32 %v492, 0.1
      %v521 = vmul.f32 %v493, 0.1
      %v522 = vmul.f32 %v494, 0.1
      %v523 = vmul.f32 %v495, 0.1
      %v524 = vmul.f32 %v496, 0.1
      %v525 = vmul.f32 %v497, 0.1
      %v526 = vmul.f32 %v498, 0.1
      %v527 = vmul.f32 %v499, 0.1
      %v528 = vmul.f32 %v500, 0.1
      %v529 = vmul.f32 %v501, 0.1
      %v530 = vmul.f32 %v502, 0.1
      %v531 = vmul.f32 %v503, 0.1
      %v532 = vsel %vm504, %v490, %v518
      %v533 = vsel %vm505, %v491, %v519
      %v534 = vsel %vm506, %v492, %v520
      %v535 = vsel %vm507, %v493, %v521
      %v536 = vsel %vm508, %v494, %v522
      %v537 = vsel %vm509, %v495, %v523
      %v538 = vsel %vm510, %v496, %v524
      %v539 = vsel %vm511, %v497, %v525
      %v540 = vsel %vm512, %v498, %v526
      %v541 = vsel %vm513, %v499, %v527
      %v542 = vsel %vm514, %v500, %v528
      %v543 = vsel %vm515, %v501, %v529
      %v544 = vsel %vm516, %v502, %v530
      %v545 = vsel %vm517, %v503, %v531
      %v546 = vpack.c.bf16 %v533, %v532
      %v547 = vpack.c.bf16 %v535, %v534
      %v548 = vpack.c.bf16 %v537, %v536
      %v549 = vpack.c.bf16 %v539, %v538
      %v550 = vpack.c.bf16 %v541, %v540
      %v551 = vpack.c.bf16 %v543, %v542
      %v552 = vpack.c.bf16 %v545, %v544
      %553 = vst.msk [vmem:[#allocation3] sm:$0xff] %vm447, %v546
      %554 = vst.msk [vmem:[#allocation3 + $0x8] sm:$0xff] %vm447, %v547
      %555 = vst.msk [vmem:[#allocation3 + $0x10] sm:$0xff] %vm447, %v548
      %556 = vst.msk [vmem:[#allocation3 + $0x18] sm:$0xff] %vm447, %v549
      %557 = vst.msk [vmem:[#allocation3 + $0x20] sm:$0xff] %vm447, %v550
      %558 = vst.msk [vmem:[#allocation3 + $0x28] sm:$0xff] %vm447, %v551
      %559 = vst.msk [vmem:[#allocation3 + $0x30] sm:$0xff] %vm447, %v552
      %v560 = vld [vmem:[%s4] sm:$0x1]
      %v562 = vlaneseq
      %v563 = vshrl.u32 %v562, 7
      %v564 = vsub.s32 0, %v563
      %v565 = vrot.slane %v560, %v564
      %v567 = vld [vmem:[#allocation3] sm:$0xf8]
      %v568 = vld [vmem:[#allocation3 + $0x8] sm:$0xff]
      %v569 = vld [vmem:[#allocation3 + $0x10] sm:$0xff]
      %v570 = vld [vmem:[#allocation3 + $0x18] sm:$0xff]
      %v571 = vld [vmem:[#allocation3 + $0x20] sm:$0xff]
      %v572 = vld [vmem:[#allocation3 + $0x28] sm:$0xff]
      %v573 = vld [vmem:[#allocation3 + $0x30] sm:$0xf]
      %v574 = vld [vmem:[%s3] sm:$0xf]
      %v575 = vld [vmem:[%s3 + $0x4] sm:$0xf]
      %vm576 = vsmask.f32 4352
      %v578 = vshrl.u32 %v567, 16
      %v580 = vrot.slane %v578, 3
      %v581 = vshll.u32 %v567, 16
      %v583 = vrot.slane %v581, 4
      %v584 = vor.u32 %v580, %v583
      %v586 = vshrl.u32 %v568, 16
      %v588 = vrot.slane %v586, 3
      %v589 = vshll.u32 %v568, 16
      %v591 = vrot.slane %v589, 4
      %v592 = vor.u32 %v588, %v591
      %v593 = vsel %vm576, %v584, %v592
      %v595 = vshrl.u32 %v569, 16
      %v597 = vrot.slane %v595, 3
      %v598 = vshll.u32 %v569, 16
      %v600 = vrot.slane %v598, 4
      %v601 = vor.u32 %v597, %v600
      %v602 = vsel %vm576, %v592, %v601
      %v604 = vshrl.u32 %v570, 16
      %v606 = vrot.slane %v604, 3
      %v607 = vshll.u32 %v570, 16
      %v609 = vrot.slane %v607, 4
      %v610 = vor.u32 %v606, %v609
      %v611 = vsel %vm576, %v601, %v610
      %v613 = vshrl.u32 %v571, 16
      %v615 = vrot.slane %v613, 3
      %v616 = vshll.u32 %v571, 16
      %v618 = vrot.slane %v616, 4
      %v619 = vor.u32 %v615, %v618
      %v620 = vsel %vm576, %v610, %v619
      %v622 = vshrl.u32 %v572, 16
      %v624 = vrot.slane %v622, 3
      %v625 = vshll.u32 %v572, 16
      %v627 = vrot.slane %v625, 4
      %v628 = vor.u32 %v624, %v627
      %v629 = vsel %vm576, %v619, %v628
      %v631 = vshrl.u32 %v573, 16
      %v633 = vrot.slane %v631, 3
      %v634 = vshll.u32 %v573, 16
      %v636 = vrot.slane %v634, 4
      %v637 = vor.u32 %v633, %v636
      %v638 = vsel %vm576, %v628, %v637
      %v641 = vunpack.c.l.b16 %v574
      %v642 = vunpack.c.l.b16 %v575
      %v643 = vpack.c.b16 %v642, %v641
      %v646 = vsel %vm447, %v593, 0
      %v649 = vsel %vm447, %v602, 0
      %v652 = vsel %vm447, %v611, 0
      %v655 = vsel %vm447, %v620, 0
      %v658 = vsel %vm447, %v629, 0
      %v661 = vsel %vm447, %v638, 0
      %663 = vmatprep.subr.bf16.mxu0 0
      %664 = vmatpush1.bf16.msra.mxu0 %v643
      %665 = vmatprep.subr.bf16.mxu0 0
      %666 = vmatpush1.bf16.msra.mxu0 0
      %667 = vmatprep.subr.bf16.mxu0 0
      %668 = vmatpush1.bf16.msra.mxu0 0
      %669 = vmatprep.subr.bf16.mxu0 0
      %670 = vmatpush1.bf16.msra.mxu0 0
      %671 = vmatprep.subr.bf16.mxu0 0
      %672 = vmatpush1.bf16.msra.mxu0 0
      %673 = vmatprep.subr.bf16.mxu0 0
      %674 = vmatpush1.bf16.msra.mxu0 0
      %675 = vmatprep.subr.bf16.mxu0 0
      %676 = vmatpush1.bf16.msra.mxu0 0
      %677 = vmatprep.subr.bf16.mxu0 0
      %678 = vmatpush1.bf16.msra.mxu0 0
      %679 = vmatprep.subr.bf16.mxu0 0
      %680 = vmatpush1.bf16.msra.mxu0 0
      %681 = vmatprep.subr.bf16.mxu0 0
      %682 = vmatpush1.bf16.msra.mxu0 0
      %683 = vmatprep.subr.bf16.mxu0 0
      %684 = vmatpush1.bf16.msra.mxu0 0
      %685 = vmatprep.subr.bf16.mxu0 0
      %686 = vmatpush1.bf16.msra.mxu0 0
      %687 = vmatprep.subr.bf16.mxu0 0
      %688 = vmatpush1.bf16.msra.mxu0 0
      %689 = vmatprep.subr.bf16.mxu0 0
      %690 = vmatpush1.bf16.msra.mxu0 0
      %691 = vmatprep.subr.bf16.mxu0 0
      %692 = vmatpush1.bf16.msra.mxu0 0
      %693 = vmatprep.subr.bf16.mxu0 0
      %694 = vmatpush1.bf16.msra.mxu0 0
      %695 = vmatprep.mubr.bf16.mxu0 0
      %696 = vmatmul.mubr.bf16.gmra.mrb[0].mxu0 %v646
      %v697 = vpop.f32.mrb[0].mxu0
      %v698 = vadd.f32 0.0, %v697
      %v699 = vpop.f32.mrb[0].mxu0
      %v700 = vpop.f32.mrb[0].mxu0
      %v701 = vadd.f32 0.0, %v700
      %v702 = vpop.f32.mrb[0].mxu0
      %703 = vmatprep.mubr.bf16.mxu0 0
      %704 = vmatmul.mubr.bf16.gmra.mrb[0].mxu0 %v649
      %v705 = vpop.f32.mrb[0].mxu0
      %v706 = vadd.f32 0.0, %v705
      %v707 = vpop.f32.mrb[0].mxu0
      %v708 = vpop.f32.mrb[0].mxu0
      %v709 = vadd.f32 0.0, %v708
      %v710 = vpop.f32.mrb[0].mxu0
      %711 = vmatprep.mubr.bf16.mxu0 0
      %712 = vmatmul.mubr.bf16.gmra.mrb[0].mxu0 %v652
      %v713 = vpop.f32.mrb[0].mxu0
      %v714 = vadd.f32 0.0, %v713
      %v715 = vpop.f32.mrb[0].mxu0
      %v716 = vpop.f32.mrb[0].mxu0
      %v717 = vadd.f32 0.0, %v716
      %v718 = vpop.f32.mrb[0].mxu0
      %719 = vmatprep.mubr.bf16.mxu0 0
      %720 = vmatmul.mubr.bf16.gmra.mrb[0].mxu0 %v655
      %v721 = vpop.f32.mrb[0].mxu0
      %v722 = vadd.f32 0.0, %v721
      %v723 = vpop.f32.mrb[0].mxu0
      %v724 = vpop.f32.mrb[0].mxu0
      %v725 = vadd.f32 0.0, %v724
      %v726 = vpop.f32.mrb[0].mxu0
      %727 = vmatprep.mubr.bf16.mxu0 0
      %728 = vmatmul.mubr.bf16.gmra.mrb[0].mxu0 %v658
      %v729 = vpop.f32.mrb[0].mxu0
      %v730 = vadd.f32 0.0, %v729
      %v731 = vpop.f32.mrb[0].mxu0
      %v732 = vpop.f32.mrb[0].mxu0
      %v733 = vadd.f32 0.0, %v732
      %v734 = vpop.f32.mrb[0].mxu0
      %735 = vmatprep.mubr.bf16.mxu0 0
      %736 = vmatmul.mubr.bf16.gmra.mrb[0].mxu0 %v661
      %v737 = vpop.f32.mrb[0].mxu0
      %v738 = vadd.f32 0.0, %v737
      %v739 = vpop.f32.mrb[0].mxu0
      %v740 = vpop.f32.mrb[0].mxu0
      %v741 = vadd.f32 0.0, %v740
      %v742 = vpop.f32.mrb[0].mxu0
      %743 = vdwg.mxu0
      %v744 = vadd.f32 %v565, %v698
      %v745 = vadd.f32 %v565, %v701
      %v746 = vadd.f32 %v565, %v706
      %v747 = vadd.f32 %v565, %v709
      %v748 = vadd.f32 %v565, %v714
      %v749 = vadd.f32 %v565, %v717
      %v750 = vadd.f32 %v565, %v722
      %v751 = vadd.f32 %v565, %v725
      %v752 = vadd.f32 %v565, %v730
      %v753 = vadd.f32 %v565, %v733
      %v754 = vadd.f32 %v565, %v738
      %v755 = vadd.f32 %v565, %v741
      %v756 = vld [vmem:[#allocation3] sm:$0xf0]
      %s757 = scalar_lea.vmem %s3, 8
      %v758 = vld [vmem:[%s757] sm:$0xf]
      %v759 = vld [vmem:[%s757 + $0x4] sm:$0xf]
      %vm767 = vcmask 1043456
      %v768 = vrot.slane %v756, 4
      %v769 = vrot.slane %v568, 4
      %v770 = vsel %vm767, %v768, %v769
      %v771 = vrot.slane %v569, 4
      %v772 = vsel %vm767, %v769, %v771
      %v773 = vrot.slane %v570, 4
      %v774 = vsel %vm767, %v771, %v773
      %v775 = vrot.slane %v571, 4
      %v776 = vsel %vm767, %v773, %v775
      %v777 = vrot.slane %v572, 4
      %v778 = vsel %vm767, %v775, %v777
      %v779 = vrot.slane %v573, 4
      %v780 = vsel %vm767, %v777, %v779
      %v783 = vunpack.c.l.b16 %v758
      %v784 = vunpack.c.l.b16 %v759
      %v785 = vpack.c.b16 %v784, %v783
      %v788 = vsel %vm447, %v770, 0
      %v791 = vsel %vm447, %v772, 0
      %v794 = vsel %vm447, %v774, 0
      %v797 = vsel %vm447, %v776, 0
      %v800 = vsel %vm447, %v778, 0
      %v803 = vsel %vm447, %v780, 0
      %805 = vmatprep.subr.bf16.mxu0 0
      %806 = vmatpush1.bf16.msra.mxu0 %v785
      %807 = vmatprep.subr.bf16.mxu0 0
      %808 = vmatpush1.bf16.msra.mxu0 0
      %809 = vmatprep.subr.bf16.mxu0 0
      %810 = vmatpush1.bf16.msra.mxu0 0
      %811 = vmatprep.subr.bf16.mxu0 0
      %812 = vmatpush1.bf16.msra.mxu0 0
      %813 = vmatprep.subr.bf16.mxu0 0
      %814 = vmatpush1.bf16.msra.mxu0 0
      %815 = vmatprep.subr.bf16.mxu0 0
      %816 = vmatpush1.bf16.msra.mxu0 0
      %817 = vmatprep.subr.bf16.mxu0 0
      %818 = vmatpush1.bf16.msra.mxu0 0
      %819 = vmatprep.subr.bf16.mxu0 0
      %820 = vmatpush1.bf16.msra.mxu0 0
      %821 = vmatprep.subr.bf16.mxu0 0
      %822 = vmatpush1.bf16.msra.mxu0 0
      %823 = vmatprep.subr.bf16.mxu0 0
      %824 = vmatpush1.bf16.msra.mxu0 0
      %825 = vmatprep.subr.bf16.mxu0 0
      %826 = vmatpush1.bf16.msra.mxu0 0
      %827 = vmatprep.subr.bf16.mxu0 0
      %828 = vmatpush1.bf16.msra.mxu0 0
      %829 = vmatprep.subr.bf16.mxu0 0
      %830 = vmatpush1.bf16.msra.mxu0 0
      %831 = vmatprep.subr.bf16.mxu0 0
      %832 = vmatpush1.bf16.msra.mxu0 0
      %833 = vmatprep.subr.bf16.mxu0 0
      %834 = vmatpush1.bf16.msra.mxu0 0
      %835 = vmatprep.subr.bf16.mxu0 0
      %836 = vmatpush1.bf16.msra.mxu0 0
      %837 = vmatprep.mubr.bf16.mxu0 0
      %838 = vmatmul.mubr.bf16.gmra.mrb[0].mxu0 %v788
      %v839 = vpop.f32.mrb[0].mxu0
      %v840 = vadd.f32 0.0, %v839
      %v841 = vpop.f32.mrb[0].mxu0
      %v842 = vpop.f32.mrb[0].mxu0
      %v843 = vadd.f32 0.0, %v842
      %v844 = vpop.f32.mrb[0].mxu0
      %845 = vmatprep.mubr.bf16.mxu0 0
      %846 = vmatmul.mubr.bf16.gmra.mrb[0].mxu0 %v791
      %v847 = vpop.f32.mrb[0].mxu0
      %v848 = vadd.f32 0.0, %v847
      %v849 = vpop.f32.mrb[0].mxu0
      %v850 = vpop.f32.mrb[0].mxu0
      %v851 = vadd.f32 0.0, %v850
      %v852 = vpop.f32.mrb[0].mxu0
      %853 = vmatprep.mubr.bf16.mxu0 0
      %854 = vmatmul.mubr.bf16.gmra.mrb[0].mxu0 %v794
      %v855 = vpop.f32.mrb[0].mxu0
      %v856 = vadd.f32 0.0, %v855
      %v857 = vpop.f32.mrb[0].mxu0
      %v858 = vpop.f32.mrb[0].mxu0
      %v859 = vadd.f32 0.0, %v858
      %v860 = vpop.f32.mrb[0].mxu0
      %861 = vmatprep.mubr.bf16.mxu0 0
      %862 = vmatmul.mubr.bf16.gmra.mrb[0].mxu0 %v797
      %v863 = vpop.f32.mrb[0].mxu0
      %v864 = vadd.f32 0.0, %v863
      %v865 = vpop.f32.mrb[0].mxu0
      %v866 = vpop.f32.mrb[0].mxu0
      %v867 = vadd.f32 0.0, %v866
      %v868 = vpop.f32.mrb[0].mxu0
      %869 = vmatprep.mubr.bf16.mxu0 0
      %870 = vmatmul.mubr.bf16.gmra.mrb[0].mxu0 %v800
      %v871 = vpop.f32.mrb[0].mxu0
      %v872 = vadd.f32 0.0, %v871
      %v873 = vpop.f32.mrb[0].mxu0
      %v874 = vpop.f32.mrb[0].mxu0
      %v875 = vadd.f32 0.0, %v874
      %v876 = vpop.f32.mrb[0].mxu0
      %877 = vmatprep.mubr.bf16.mxu0 0
      %878 = vmatmul.mubr.bf16.gmra.mrb[0].mxu0 %v803
      %v879 = vpop.f32.mrb[0].mxu0
      %v880 = vadd.f32 0.0, %v879
      %v881 = vpop.f32.mrb[0].mxu0
      %v882 = vpop.f32.mrb[0].mxu0
      %v883 = vadd.f32 0.0, %v882
      %v884 = vpop.f32.mrb[0].mxu0
      %885 = vdwg.mxu0
      %v886 = vadd.f32 %v744, %v840
      %v887 = vadd.f32 %v745, %v843
      %v888 = vadd.f32 %v746, %v848
      %v889 = vadd.f32 %v747, %v851
      %v890 = vadd.f32 %v748, %v856
      %v891 = vadd.f32 %v749, %v859
      %v892 = vadd.f32 %v750, %v864
      %v893 = vadd.f32 %v751, %v867
      %v894 = vadd.f32 %v752, %v872
      %v895 = vadd.f32 %v753, %v875
      %v896 = vadd.f32 %v754, %v880
      %v897 = vadd.f32 %v755, %v883
      %v898 = vld [vmem:[#allocation3 + $0x30] sm:$0x1f]
      %s899 = scalar_lea.vmem %s3, 16
      %v900 = vld [vmem:[%s899] sm:$0xf]
      %v901 = vld [vmem:[%s899 + $0x4] sm:$0xf]
      %vm902 = vsmask.f32 3328
      %v904 = vshrl.u32 %v756, 16
      %v906 = vrot.slane %v904, 4
      %v907 = vshll.u32 %v756, 16
      %v909 = vrot.slane %v907, 5
      %v910 = vor.u32 %v906, %v909
      %v911 = vrot.slane %v586, 4
      %v912 = vrot.slane %v589, 5
      %v913 = vor.u32 %v911, %v912
      %v914 = vsel %vm902, %v910, %v913
      %v915 = vrot.slane %v595, 4
      %v916 = vrot.slane %v598, 5
      %v917 = vor.u32 %v915, %v916
      %v918 = vsel %vm902, %v913, %v917
      %v919 = vrot.slane %v604, 4
      %v920 = vrot.slane %v607, 5
      %v921 = vor.u32 %v919, %v920
      %v922 = vsel %vm902, %v917, %v921
      %v923 = vrot.slane %v613, 4
      %v924 = vrot.slane %v616, 5
      %v925 = vor.u32 %v923, %v924
      %v926 = vsel %vm902, %v921, %v925
      %v927 = vrot.slane %v622, 4
      %v928 = vrot.slane %v625, 5
      %v929 = vor.u32 %v927, %v928
      %v930 = vsel %vm902, %v925, %v929
      %v932 = vshrl.u32 %v898, 16
      %v934 = vrot.slane %v932, 4
      %v935 = vshll.u32 %v898, 16
      %v937 = vrot.slane %v935, 5
      %v938 = vor.u32 %v934, %v937
      %v939 = vsel %vm902, %v929, %v938
      %v942 = vunpack.c.l.b16 %v900
      %v943 = vunpack.c.l.b16 %v901
      %v944 = vpack.c.b16 %v943, %v942
      %v947 = vsel %vm447, %v914, 0
      %v950 = vsel %vm447, %v918, 0
      %v953 = vsel %vm447, %v922, 0
      %v956 = vsel %vm447, %v926, 0
      %v959 = vsel %vm447, %v930, 0
      %v962 = vsel %vm447, %v939, 0
      %964 = vmatprep.subr.bf16.mxu0 0
      %965 = vmatpush1.bf16.msra.mxu0 %v944
      %966 = vmatprep.subr.bf16.mxu0 0
      %967 = vmatpush1.bf16.msra.mxu0 0
      %968 = vmatprep.subr.bf16.mxu0 0
      %969 = vmatpush1.bf16.msra.mxu0 0
      %970 = vmatprep.subr.bf16.mxu0 0
      %971 = vmatpush1.bf16.msra.mxu0 0
      %972 = vmatprep.subr.bf16.mxu0 0
      %973 = vmatpush1.bf16.msra.mxu0 0
      %974 = vmatprep.subr.bf16.mxu0 0
      %975 = vmatpush1.bf16.msra.mxu0 0
      %976 = vmatprep.subr.bf16.mxu0 0
      %977 = vmatpush1.bf16.msra.mxu0 0
      %978 = vmatprep.subr.bf16.mxu0 0
      %979 = vmatpush1.bf16.msra.mxu0 0
      %980 = vmatprep.subr.bf16.mxu0 0
      %981 = vmatpush1.bf16.msra.mxu0 0
      %982 = vmatprep.subr.bf16.mxu0 0
      %983 = vmatpush1.bf16.msra.mxu0 0
      %984 = vmatprep.subr.bf16.mxu0 0
      %985 = vmatpush1.bf16.msra.mxu0 0
      %986 = vmatprep.subr.bf16.mxu0 0
      %987 = vmatpush1.bf16.msra.mxu0 0
      %988 = vmatprep.subr.bf16.mxu0 0
      %989 = vmatpush1.bf16.msra.mxu0 0
      %990 = vmatprep.subr.bf16.mxu0 0
      %991 = vmatpush1.bf16.msra.mxu0 0
      %992 = vmatprep.subr.bf16.mxu0 0
      %993 = vmatpush1.bf16.msra.mxu0 0
      %994 = vmatprep.subr.bf16.mxu0 0
      %995 = vmatpush1.bf16.msra.mxu0 0
      %996 = vmatprep.mubr.bf16.mxu0 0
      %997 = vmatmul.mubr.bf16.gmra.mrb[0].mxu0 %v947
      %v998 = vpop.f32.mrb[0].mxu0
      %v999 = vadd.f32 0.0, %v998
      %v1000 = vpop.f32.mrb[0].mxu0
      %v1001 = vpop.f32.mrb[0].mxu0
      %v1002 = vadd.f32 0.0, %v1001
      %v1003 = vpop.f32.mrb[0].mxu0
      %1004 = vmatprep.mubr.bf16.mxu0 0
      %1005 = vmatmul.mubr.bf16.gmra.mrb[0].mxu0 %v950
      %v1006 = vpop.f32.mrb[0].mxu0
      %v1007 = vadd.f32 0.0, %v1006
      %v1008 = vpop.f32.mrb[0].mxu0
      %v1009 = vpop.f32.mrb[0].mxu0
      %v1010 = vadd.f32 0.0, %v1009
      %v1011 = vpop.f32.mrb[0].mxu0
      %1012 = vmatprep.mubr.bf16.mxu0 0
      %1013 = vmatmul.mubr.bf16.gmra.mrb[0].mxu0 %v953
      %v1014 = vpop.f32.mrb[0].mxu0
      %v1015 = vadd.f32 0.0, %v1014
      %v1016 = vpop.f32.mrb[0].mxu0
      %v1017 = vpop.f32.mrb[0].mxu0
      %v1018 = vadd.f32 0.0, %v1017
      %v1019 = vpop.f32.mrb[0].mxu0
      %1020 = vmatprep.mubr.bf16.mxu0 0
      %1021 = vmatmul.mubr.bf16.gmra.mrb[0].mxu0 %v956
      %v1022 = vpop.f32.mrb[0].mxu0
      %v1023 = vadd.f32 0.0, %v1022
      %v1024 = vpop.f32.mrb[0].mxu0
      %v1025 = vpop.f32.mrb[0].mxu0
      %v1026 = vadd.f32 0.0, %v1025
      %v1027 = vpop.f32.mrb[0].mxu0
      %1028 = vmatprep.mubr.bf16.mxu0 0
      %1029 = vmatmul.mubr.bf16.gmra.mrb[0].mxu0 %v959
      %v1030 = vpop.f32.mrb[0].mxu0
      %v1031 = vadd.f32 0.0, %v1030
      %v1032 = vpop.f32.mrb[0].mxu0
      %v1033 = vpop.f32.mrb[0].mxu0
      %v1034 = vadd.f32 0.0, %v1033
      %v1035 = vpop.f32.mrb[0].mxu0
      %1036 = vmatprep.mubr.bf16.mxu0 0
      %1037 = vmatmul.mubr.bf16.gmra.mrb[0].mxu0 %v962
      %v1038 = vpop.f32.mrb[0].mxu0
      %v1039 = vadd.f32 0.0, %v1038
      %v1040 = vpop.f32.mrb[0].mxu0
      %v1041 = vpop.f32.mrb[0].mxu0
      %v1042 = vadd.f32 0.0, %v1041
      %v1043 = vpop.f32.mrb[0].mxu0
      %1044 = vdwg.mxu0
      %v1045 = vadd.f32 %v886, %v999
      %v1046 = vadd.f32 %v887, %v1002
      %v1047 = vadd.f32 %v888, %v1007
      %v1048 = vadd.f32 %v889, %v1010
      %v1049 = vadd.f32 %v890, %v1015
      %v1050 = vadd.f32 %v891, %v1018
      %v1051 = vadd.f32 %v892, %v1023
      %v1052 = vadd.f32 %v893, %v1026
      %v1053 = vadd.f32 %v894, %v1031
      %v1054 = vadd.f32 %v895, %v1034
      %v1055 = vadd.f32 %v896, %v1039
      %v1056 = vadd.f32 %v897, %v1042
      %vm1057 = vcmp.ge.f32.partialorder %v1045, 0.0
      %vm1058 = vcmp.ge.f32.partialorder %v1046, 0.0
      %vm1059 = vcmp.ge.f32.partialorder %v1047, 0.0
      %vm1060 = vcmp.ge.f32.partialorder %v1048, 0.0
      %vm1061 = vcmp.ge.f32.partialorder %v1049, 0.0
      %vm1062 = vcmp.ge.f32.partialorder %v1050, 0.0
      %vm1063 = vcmp.ge.f32.partialorder %v1051, 0.0
      %vm1064 = vcmp.ge.f32.partialorder %v1052, 0.0
      %vm1065 = vcmp.ge.f32.partialorder %v1053, 0.0
      %vm1066 = vcmp.ge.f32.partialorder %v1054, 0.0
      %vm1067 = vcmp.ge.f32.partialorder %v1055, 0.0
      %vm1068 = vcmp.ge.f32.partialorder %v1056, 0.0
      %v1069 = vmul.f32 %v1045, 0.1
      %v1070 = vmul.f32 %v1046, 0.1
      %v1071 = vmul.f32 %v1047, 0.1
      %v1072 = vmul.f32 %v1048, 0.1
      %v1073 = vmul.f32 %v1049, 0.1
      %v1074 = vmul.f32 %v1050, 0.1
      %v1075 = vmul.f32 %v1051, 0.1
      %v1076 = vmul.f32 %v1052, 0.1
      %v1077 = vmul.f32 %v1053, 0.1
      %v1078 = vmul.f32 %v1054, 0.1
      %v1079 = vmul.f32 %v1055, 0.1
      %v1080 = vmul.f32 %v1056, 0.1
      %v1081 = vsel %vm1057, %v1045, %v1069
      %v1082 = vsel %vm1058, %v1046, %v1070
      %v1083 = vsel %vm1059, %v1047, %v1071
      %v1084 = vsel %vm1060, %v1048, %v1072
      %v1085 = vsel %vm1061, %v1049, %v1073
      %v1086 = vsel %vm1062, %v1050, %v1074
      %v1087 = vsel %vm1063, %v1051, %v1075
      %v1088 = vsel %vm1064, %v1052, %v1076
      %v1089 = vsel %vm1065, %v1053, %v1077
      %v1090 = vsel %vm1066, %v1054, %v1078
      %v1091 = vsel %vm1067, %v1055, %v1079
      %v1092 = vsel %vm1068, %v1056, %v1080
      %v1093 = vpack.c.bf16 %v1082, %v1081
      %v1094 = vpack.c.bf16 %v1084, %v1083
      %v1095 = vpack.c.bf16 %v1086, %v1085
      %v1096 = vpack.c.bf16 %v1088, %v1087
      %v1097 = vpack.c.bf16 %v1090, %v1089
      %v1098 = vpack.c.bf16 %v1092, %v1091
      %v1105 = vrot.slane %v1093, 4
      %v1106 = vrot.slane %v1094, 4
      %v1107 = vsel %vm767, %v1105, %v1106
      %v1108 = vrot.slane %v1095, 4
      %v1109 = vsel %vm767, %v1106, %v1108
      %v1110 = vrot.slane %v1096, 4
      %v1111 = vsel %vm767, %v1108, %v1110
      %v1112 = vrot.slane %v1097, 4
      %v1113 = vsel %vm767, %v1110, %v1112
      %v1114 = vrot.slane %v1098, 4
      %v1115 = vsel %vm767, %v1112, %v1114
      %1123 = vst.msk [vmem:[#allocation4] sm:$0xf0] %vm488, %v1105
      %1124 = vst.msk [vmem:[#allocation4 + $0x8] sm:$0xff] %vm447, %v1107
      %1125 = vst.msk [vmem:[#allocation4 + $0x10] sm:$0xff] %vm447, %v1109
      %1126 = vst.msk [vmem:[#allocation4 + $0x18] sm:$0xff] %vm447, %v1111
      %1127 = vst.msk [vmem:[#allocation4 + $0x20] sm:$0xff] %vm447, %v1113
      %1128 = vst.msk [vmem:[#allocation4 + $0x28] sm:$0xff] %vm447, %v1115
      %1129 = vst.msk [vmem:[#allocation4 + $0x30] sm:$0xf] %vm486, %v1114
      %p1130 = scmp.eq.s32.totalorder %s23, 0
      // Predicated region
      $region57: #{tpu_custom_call.1} parent=47 // pred_check
        %p1131 = pneg %p1130
      $region58: #{tpu_custom_call.1} parent=47 // pred_check_branch
        %1133 = sbr.rel (%p1131) target = $region60
      $region59: #{tpu_custom_call.1} parent=47 // pred_region
        %1134 = vst.msk [vmem:[#allocation4] sm:$0xf0] %vm488, 0
        %1135 = vst.msk [vmem:[#allocation4 + $0x8] sm:$0xf] %vm486, 0
        %1136 = vst.msk [vmem:[#allocation4 + $0x28] sm:$0xf0] %vm488, 0
        %1137 = vst.msk [vmem:[#allocation4 + $0x30] sm:$0xf] %vm486, 0
      $region60: #{tpu_custom_call.1} parent=47 // pred_fallthru
        _
      %v1138 = vld [vmem:[%s6] sm:$0x1]
      %v1140 = vlaneseq
      %v1141 = vshrl.u32 %v1140, 7
      %v1142 = vsub.s32 0, %v1141
      %v1143 = vrot.slane %v1138, %v1142
      %v1145 = vld [vmem:[#allocation4] sm:$0xf8]
      %v1146 = vld [vmem:[#allocation4 + $0x8] sm:$0xff]
      %v1147 = vld [vmem:[#allocation4 + $0x10] sm:$0xff]
      %v1148 = vld [vmem:[#allocation4 + $0x18] sm:$0xff]
      %v1149 = vld [vmem:[#allocation4 + $0x20] sm:$0xff]
      %v1150 = vld [vmem:[#allocation4 + $0x28] sm:$0xff]
      %v1151 = vld [vmem:[#allocation4 + $0x30] sm:$0xf]
      %v1152 = vld [vmem:[%s5] sm:$0xf]
      %v1153 = vld [vmem:[%s5 + $0x4] sm:$0xf]
      %v1155 = vshrl.u32 %v1145, 16
      %v1157 = vrot.slane %v1155, 3
      %v1158 = vshll.u32 %v1145, 16
      %v1160 = vrot.slane %v1158, 4
      %v1161 = vor.u32 %v1157, %v1160
      %v1163 = vshrl.u32 %v1146, 16
      %v1165 = vrot.slane %v1163, 3
      %v1166 = vshll.u32 %v1146, 16
      %v1168 = vrot.slane %v1166, 4
      %v1169 = vor.u32 %v1165, %v1168
      %v1170 = vsel %vm576, %v1161, %v1169
      %v1172 = vshrl.u32 %v1147, 16
      %v1174 = vrot.slane %v1172, 3
      %v1175 = vshll.u32 %v1147, 16
      %v1177 = vrot.slane %v1175, 4
      %v1178 = vor.u32 %v1174, %v1177
      %v1179 = vsel %vm576, %v1169, %v1178
      %v1181 = vshrl.u32 %v1148, 16
      %v1183 = vrot.slane %v1181, 3
      %v1184 = vshll.u32 %v1148, 16
      %v1186 = vrot.slane %v1184, 4
      %v1187 = vor.u32 %v1183, %v1186
      %v1188 = vsel %vm576, %v1178, %v1187
      %v1190 = vshrl.u32 %v1149, 16
      %v1192 = vrot.slane %v1190, 3
      %v1193 = vshll.u32 %v1149, 16
      %v1195 = vrot.slane %v1193, 4
      %v1196 = vor.u32 %v1192, %v1195
      %v1197 = vsel %vm576, %v1187, %v1196
      %v1199 = vshrl.u32 %v1150, 16
      %v1201 = vrot.slane %v1199, 3
      %v1202 = vshll.u32 %v1150, 16
      %v1204 = vrot.slane %v1202, 4
      %v1205 = vor.u32 %v1201, %v1204
      %v1206 = vsel %vm576, %v1196, %v1205
      %v1208 = vshrl.u32 %v1151, 16
      %v1210 = vrot.slane %v1208, 3
      %v1211 = vshll.u32 %v1151, 16
      %v1213 = vrot.slane %v1211, 4
      %v1214 = vor.u32 %v1210, %v1213
      %v1215 = vsel %vm576, %v1205, %v1214
      %v1218 = vunpack.c.l.b16 %v1152
      %v1219 = vunpack.c.l.b16 %v1153
      %v1220 = vpack.c.b16 %v1219, %v1218
      %v1223 = vsel %vm447, %v1170, 0
      %v1226 = vsel %vm447, %v1179, 0
      %v1229 = vsel %vm447, %v1188, 0
      %v1232 = vsel %vm447, %v1197, 0
      %v1235 = vsel %vm447, %v1206, 0
      %v1238 = vsel %vm447, %v1215, 0
      %1240 = vmatprep.subr.bf16.mxu0 0
      %1241 = vmatpush1.bf16.msra.mxu0 %v1220
      %1242 = vmatprep.subr.bf16.mxu0 0
      %1243 = vmatpush1.bf16.msra.mxu0 0
      %1244 = vmatprep.subr.bf16.mxu0 0
      %1245 = vmatpush1.bf16.msra.mxu0 0
      %1246 = vmatprep.subr.bf16.mxu0 0
      %1247 = vmatpush1.bf16.msra.mxu0 0
      %1248 = vmatprep.subr.bf16.mxu0 0
      %1249 = vmatpush1.bf16.msra.mxu0 0
      %1250 = vmatprep.subr.bf16.mxu0 0
      %1251 = vmatpush1.bf16.msra.mxu0 0
      %1252 = vmatprep.subr.bf16.mxu0 0
      %1253 = vmatpush1.bf16.msra.mxu0 0
      %1254 = vmatprep.subr.bf16.mxu0 0
      %1255 = vmatpush1.bf16.msra.mxu0 0
      %1256 = vmatprep.subr.bf16.mxu0 0
      %1257 = vmatpush1.bf16.msra.mxu0 0
      %1258 = vmatprep.subr.bf16.mxu0 0
      %1259 = vmatpush1.bf16.msra.mxu0 0
      %1260 = vmatprep.subr.bf16.mxu0 0
      %1261 = vmatpush1.bf16.msra.mxu0 0
      %1262 = vmatprep.subr.bf16.mxu0 0
      %1263 = vmatpush1.bf16.msra.mxu0 0
      %1264 = vmatprep.subr.bf16.mxu0 0
      %1265 = vmatpush1.bf16.msra.mxu0 0
      %1266 = vmatprep.subr.bf16.mxu0 0
      %1267 = vmatpush1.bf16.msra.mxu0 0
      %1268 = vmatprep.subr.bf16.mxu0 0
      %1269 = vmatpush1.bf16.msra.mxu0 0
      %1270 = vmatprep.subr.bf16.mxu0 0
      %1271 = vmatpush1.bf16.msra.mxu0 0
      %1272 = vmatprep.mubr.bf16.mxu0 0
      %1273 = vmatmul.mubr.bf16.gmra.mrb[0].mxu0 %v1223
      %v1274 = vpop.f32.mrb[0].mxu0
      %v1275 = vadd.f32 0.0, %v1274
      %v1276 = vpop.f32.mrb[0].mxu0
      %v1277 = vpop.f32.mrb[0].mxu0
      %v1278 = vadd.f32 0.0, %v1277
      %v1279 = vpop.f32.mrb[0].mxu0
      %1280 = vmatprep.mubr.bf16.mxu0 0
      %1281 = vmatmul.mubr.bf16.gmra.mrb[0].mxu0 %v1226
      %v1282 = vpop.f32.mrb[0].mxu0
      %v1283 = vadd.f32 0.0, %v1282
      %v1284 = vpop.f32.mrb[0].mxu0
      %v1285 = vpop.f32.mrb[0].mxu0
      %v1286 = vadd.f32 0.0, %v1285
      %v1287 = vpop.f32.mrb[0].mxu0
      %1288 = vmatprep.mubr.bf16.mxu0 0
      %1289 = vmatmul.mubr.bf16.gmra.mrb[0].mxu0 %v1229
      %v1290 = vpop.f32.mrb[0].mxu0
      %v1291 = vadd.f32 0.0, %v1290
      %v1292 = vpop.f32.mrb[0].mxu0
      %v1293 = vpop.f32.mrb[0].mxu0
      %v1294 = vadd.f32 0.0, %v1293
      %v1295 = vpop.f32.mrb[0].mxu0
      %1296 = vmatprep.mubr.bf16.mxu0 0
      %1297 = vmatmul.mubr.bf16.gmra.mrb[0].mxu0 %v1232
      %v1298 = vpop.f32.mrb[0].mxu0
      %v1299 = vadd.f32 0.0, %v1298
      %v1300 = vpop.f32.mrb[0].mxu0
      %v1301 = vpop.f32.mrb[0].mxu0
      %v1302 = vadd.f32 0.0, %v1301
      %v1303 = vpop.f32.mrb[0].mxu0
      %1304 = vmatprep.mubr.bf16.mxu0 0
      %1305 = vmatmul.mubr.bf16.gmra.mrb[0].mxu0 %v1235
      %v1306 = vpop.f32.mrb[0].mxu0
      %v1307 = vadd.f32 0.0, %v1306
      %v1308 = vpop.f32.mrb[0].mxu0
      %v1309 = vpop.f32.mrb[0].mxu0
      %v1310 = vadd.f32 0.0, %v1309
      %v1311 = vpop.f32.mrb[0].mxu0
      %1312 = vmatprep.mubr.bf16.mxu0 0
      %1313 = vmatmul.mubr.bf16.gmra.mrb[0].mxu0 %v1238
      %v1314 = vpop.f32.mrb[0].mxu0
      %v1315 = vadd.f32 0.0, %v1314
      %v1316 = vpop.f32.mrb[0].mxu0
      %v1317 = vpop.f32.mrb[0].mxu0
      %v1318 = vadd.f32 0.0, %v1317
      %v1319 = vpop.f32.mrb[0].mxu0
      %1320 = vdwg.mxu0
      %v1321 = vadd.f32 %v1143, %v1275
      %v1322 = vadd.f32 %v1143, %v1278
      %v1323 = vadd.f32 %v1143, %v1283
      %v1324 = vadd.f32 %v1143, %v1286
      %v1325 = vadd.f32 %v1143, %v1291
      %v1326 = vadd.f32 %v1143, %v1294
      %v1327 = vadd.f32 %v1143, %v1299
      %v1328 = vadd.f32 %v1143, %v1302
      %v1329 = vadd.f32 %v1143, %v1307
      %v1330 = vadd.f32 %v1143, %v1310
      %v1331 = vadd.f32 %v1143, %v1315
      %v1332 = vadd.f32 %v1143, %v1318
      %v1333 = vld [vmem:[#allocation4] sm:$0xf0]
      %s1334 = scalar_lea.vmem %s5, 8
      %v1335 = vld [vmem:[%s1334] sm:$0xf]
      %v1336 = vld [vmem:[%s1334 + $0x4] sm:$0xf]
      %v1344 = vrot.slane %v1333, 4
      %v1345 = vrot.slane %v1146, 4
      %v1346 = vsel %vm767, %v1344, %v1345
      %v1347 = vrot.slane %v1147, 4
      %v1348 = vsel %vm767, %v1345, %v1347
      %v1349 = vrot.slane %v1148, 4
      %v1350 = vsel %vm767, %v1347, %v1349
      %v1351 = vrot.slane %v1149, 4
      %v1352 = vsel %vm767, %v1349, %v1351
      %v1353 = vrot.slane %v1150, 4
      %v1354 = vsel %vm767, %v1351, %v1353
      %v1355 = vrot.slane %v1151, 4
      %v1356 = vsel %vm767, %v1353, %v1355
      %v1359 = vunpack.c.l.b16 %v1335
      %v1360 = vunpack.c.l.b16 %v1336
      %v1361 = vpack.c.b16 %v1360, %v1359
      %v1364 = vsel %vm447, %v1346, 0
      %v1367 = vsel %vm447, %v1348, 0
      %v1370 = vsel %vm447, %v1350, 0
      %v1373 = vsel %vm447, %v1352, 0
      %v1376 = vsel %vm447, %v1354, 0
      %v1379 = vsel %vm447, %v1356, 0
      %1381 = vmatprep.subr.bf16.mxu0 0
      %1382 = vmatpush1.bf16.msra.mxu0 %v1361
      %1383 = vmatprep.subr.bf16.mxu0 0
      %1384 = vmatpush1.bf16.msra.mxu0 0
      %1385 = vmatprep.subr.bf16.mxu0 0
      %1386 = vmatpush1.bf16.msra.mxu0 0
      %1387 = vmatprep.subr.bf16.mxu0 0
      %1388 = vmatpush1.bf16.msra.mxu0 0
      %1389 = vmatprep.subr.bf16.mxu0 0
      %1390 = vmatpush1.bf16.msra.mxu0 0
      %1391 = vmatprep.subr.bf16.mxu0 0
      %1392 = vmatpush1.bf16.msra.mxu0 0
      %1393 = vmatprep.subr.bf16.mxu0 0
      %1394 = vmatpush1.bf16.msra.mxu0 0
      %1395 = vmatprep.subr.bf16.mxu0 0
      %1396 = vmatpush1.bf16.msra.mxu0 0
      %1397 = vmatprep.subr.bf16.mxu0 0
      %1398 = vmatpush1.bf16.msra.mxu0 0
      %1399 = vmatprep.subr.bf16.mxu0 0
      %1400 = vmatpush1.bf16.msra.mxu0 0
      %1401 = vmatprep.subr.bf16.mxu0 0
      %1402 = vmatpush1.bf16.msra.mxu0 0
      %1403 = vmatprep.subr.bf16.mxu0 0
      %1404 = vmatpush1.bf16.msra.mxu0 0
      %1405 = vmatprep.subr.bf16.mxu0 0
      %1406 = vmatpush1.bf16.msra.mxu0 0
      %1407 = vmatprep.subr.bf16.mxu0 0
      %1408 = vmatpush1.bf16.msra.mxu0 0
      %1409 = vmatprep.subr.bf16.mxu0 0
      %1410 = vmatpush1.bf16.msra.mxu0 0
      %1411 = vmatprep.subr.bf16.mxu0 0
      %1412 = vmatpush1.bf16.msra.mxu0 0
      %1413 = vmatprep.mubr.bf16.mxu0 0
      %1414 = vmatmul.mubr.bf16.gmra.mrb[0].mxu0 %v1364
      %v1415 = vpop.f32.mrb[0].mxu0
      %v1416 = vadd.f32 0.0, %v1415
      %v1417 = vpop.f32.mrb[0].mxu0
      %v1418 = vpop.f32.mrb[0].mxu0
      %v1419 = vadd.f32 0.0, %v1418
      %v1420 = vpop.f32.mrb[0].mxu0
      %1421 = vmatprep.mubr.bf16.mxu0 0
      %1422 = vmatmul.mubr.bf16.gmra.mrb[0].mxu0 %v1367
      %v1423 = vpop.f32.mrb[0].mxu0
      %v1424 = vadd.f32 0.0, %v1423
      %v1425 = vpop.f32.mrb[0].mxu0
      %v1426 = vpop.f32.mrb[0].mxu0
      %v1427 = vadd.f32 0.0, %v1426
      %v1428 = vpop.f32.mrb[0].mxu0
      %1429 = vmatprep.mubr.bf16.mxu0 0
      %1430 = vmatmul.mubr.bf16.gmra.mrb[0].mxu0 %v1370
      %v1431 = vpop.f32.mrb[0].mxu0
      %v1432 = vadd.f32 0.0, %v1431
      %v1433 = vpop.f32.mrb[0].mxu0
      %v1434 = vpop.f32.mrb[0].mxu0
      %v1435 = vadd.f32 0.0, %v1434
      %v1436 = vpop.f32.mrb[0].mxu0
      %1437 = vmatprep.mubr.bf16.mxu0 0
      %1438 = vmatmul.mubr.bf16.gmra.mrb[0].mxu0 %v1373
      %v1439 = vpop.f32.mrb[0].mxu0
      %v1440 = vadd.f32 0.0, %v1439
      %v1441 = vpop.f32.mrb[0].mxu0
      %v1442 = vpop.f32.mrb[0].mxu0
      %v1443 = vadd.f32 0.0, %v1442
      %v1444 = vpop.f32.mrb[0].mxu0
      %1445 = vmatprep.mubr.bf16.mxu0 0
      %1446 = vmatmul.mubr.bf16.gmra.mrb[0].mxu0 %v1376
      %v1447 = vpop.f32.mrb[0].mxu0
      %v1448 = vadd.f32 0.0, %v1447
      %v1449 = vpop.f32.mrb[0].mxu0
      %v1450 = vpop.f32.mrb[0].mxu0
      %v1451 = vadd.f32 0.0, %v1450
      %v1452 = vpop.f32.mrb[0].mxu0
      %1453 = vmatprep.mubr.bf16.mxu0 0
      %1454 = vmatmul.mubr.bf16.gmra.mrb[0].mxu0 %v1379
      %v1455 = vpop.f32.mrb[0].mxu0
      %v1456 = vadd.f32 0.0, %v1455
      %v1457 = vpop.f32.mrb[0].mxu0
      %v1458 = vpop.f32.mrb[0].mxu0
      %v1459 = vadd.f32 0.0, %v1458
      %v1460 = vpop.f32.mrb[0].mxu0
      %1461 = vdwg.mxu0
      %v1462 = vadd.f32 %v1321, %v1416
      %v1463 = vadd.f32 %v1322, %v1419
      %v1464 = vadd.f32 %v1323, %v1424
      %v1465 = vadd.f32 %v1324, %v1427
      %v1466 = vadd.f32 %v1325, %v1432
      %v1467 = vadd.f32 %v1326, %v1435
      %v1468 = vadd.f32 %v1327, %v1440
      %v1469 = vadd.f32 %v1328, %v1443
      %v1470 = vadd.f32 %v1329, %v1448
      %v1471 = vadd.f32 %v1330, %v1451
      %v1472 = vadd.f32 %v1331, %v1456
      %v1473 = vadd.f32 %v1332, %v1459
      %v1474 = vld [vmem:[#allocation4 + $0x30] sm:$0x1f]
      %s1475 = scalar_lea.vmem %s5, 16
      %v1476 = vld [vmem:[%s1475] sm:$0xf]
      %v1477 = vld [vmem:[%s1475 + $0x4] sm:$0xf]
      %v1479 = vshrl.u32 %v1333, 16
      %v1481 = vrot.slane %v1479, 4
      %v1482 = vshll.u32 %v1333, 16
      %v1484 = vrot.slane %v1482, 5
      %v1485 = vor.u32 %v1481, %v1484
      %v1486 = vrot.slane %v1163, 4
      %v1487 = vrot.slane %v1166, 5
      %v1488 = vor.u32 %v1486, %v1487
      %v1489 = vsel %vm902, %v1485, %v1488
      %v1490 = vrot.slane %v1172, 4
      %v1491 = vrot.slane %v1175, 5
      %v1492 = vor.u32 %v1490, %v1491
      %v1493 = vsel %vm902, %v1488, %v1492
      %v1494 = vrot.slane %v1181, 4
      %v1495 = vrot.slane %v1184, 5
      %v1496 = vor.u32 %v1494, %v1495
      %v1497 = vsel %vm902, %v1492, %v1496
      %v1498 = vrot.slane %v1190, 4
      %v1499 = vrot.slane %v1193, 5
      %v1500 = vor.u32 %v1498, %v1499
      %v1501 = vsel %vm902, %v1496, %v1500
      %v1502 = vrot.slane %v1199, 4
      %v1503 = vrot.slane %v1202, 5
      %v1504 = vor.u32 %v1502, %v1503
      %v1505 = vsel %vm902, %v1500, %v1504
      %v1507 = vshrl.u32 %v1474, 16
      %v1509 = vrot.slane %v1507, 4
      %v1510 = vshll.u32 %v1474, 16
      %v1512 = vrot.slane %v1510, 5
      %v1513 = vor.u32 %v1509, %v1512
      %v1514 = vsel %vm902, %v1504, %v1513
      %v1517 = vunpack.c.l.b16 %v1476
      %v1518 = vunpack.c.l.b16 %v1477
      %v1519 = vpack.c.b16 %v1518, %v1517
      %v1522 = vsel %vm447, %v1489, 0
      %v1525 = vsel %vm447, %v1493, 0
      %v1528 = vsel %vm447, %v1497, 0
      %v1531 = vsel %vm447, %v1501, 0
      %v1534 = vsel %vm447, %v1505, 0
      %v1537 = vsel %vm447, %v1514, 0
      %1539 = vmatprep.subr.bf16.mxu0 0
      %1540 = vmatpush1.bf16.msra.mxu0 %v1519
      %1541 = vmatprep.subr.bf16.mxu0 0
      %1542 = vmatpush1.bf16.msra.mxu0 0
      %1543 = vmatprep.subr.bf16.mxu0 0
      %1544 = vmatpush1.bf16.msra.mxu0 0
      %1545 = vmatprep.subr.bf16.mxu0 0
      %1546 = vmatpush1.bf16.msra.mxu0 0
      %1547 = vmatprep.subr.bf16.mxu0 0
      %1548 = vmatpush1.bf16.msra.mxu0 0
      %1549 = vmatprep.subr.bf16.mxu0 0
      %1550 = vmatpush1.bf16.msra.mxu0 0
      %1551 = vmatprep.subr.bf16.mxu0 0
      %1552 = vmatpush1.bf16.msra.mxu0 0
      %1553 = vmatprep.subr.bf16.mxu0 0
      %1554 = vmatpush1.bf16.msra.mxu0 0
      %1555 = vmatprep.subr.bf16.mxu0 0
      %1556 = vmatpush1.bf16.msra.mxu0 0
      %1557 = vmatprep.subr.bf16.mxu0 0
      %1558 = vmatpush1.bf16.msra.mxu0 0
      %1559 = vmatprep.subr.bf16.mxu0 0
      %1560 = vmatpush1.bf16.msra.mxu0 0
      %1561 = vmatprep.subr.bf16.mxu0 0
      %1562 = vmatpush1.bf16.msra.mxu0 0
      %1563 = vmatprep.subr.bf16.mxu0 0
      %1564 = vmatpush1.bf16.msra.mxu0 0
      %1565 = vmatprep.subr.bf16.mxu0 0
      %1566 = vmatpush1.bf16.msra.mxu0 0
      %1567 = vmatprep.subr.bf16.mxu0 0
      %1568 = vmatpush1.bf16.msra.mxu0 0
      %1569 = vmatprep.subr.bf16.mxu0 0
      %1570 = vmatpush1.bf16.msra.mxu0 0
      %1571 = vmatprep.mubr.bf16.mxu0 0
      %1572 = vmatmul.mubr.bf16.gmra.mrb[0].mxu0 %v1522
      %v1573 = vpop.f32.mrb[0].mxu0
      %v1574 = vadd.f32 0.0, %v1573
      %v1575 = vpop.f32.mrb[0].mxu0
      %v1576 = vpop.f32.mrb[0].mxu0
      %v1577 = vadd.f32 0.0, %v1576
      %v1578 = vpop.f32.mrb[0].mxu0
      %1579 = vmatprep.mubr.bf16.mxu0 0
      %1580 = vmatmul.mubr.bf16.gmra.mrb[0].mxu0 %v1525
      %v1581 = vpop.f32.mrb[0].mxu0
      %v1582 = vadd.f32 0.0, %v1581
      %v1583 = vpop.f32.mrb[0].mxu0
      %v1584 = vpop.f32.mrb[0].mxu0
      %v1585 = vadd.f32 0.0, %v1584
      %v1586 = vpop.f32.mrb[0].mxu0
      %1587 = vmatprep.mubr.bf16.mxu0 0
      %1588 = vmatmul.mubr.bf16.gmra.mrb[0].mxu0 %v1528
      %v1589 = vpop.f32.mrb[0].mxu0
      %v1590 = vadd.f32 0.0, %v1589
      %v1591 = vpop.f32.mrb[0].mxu0
      %v1592 = vpop.f32.mrb[0].mxu0
      %v1593 = vadd.f32 0.0, %v1592
      %v1594 = vpop.f32.mrb[0].mxu0
      %1595 = vmatprep.mubr.bf16.mxu0 0
      %1596 = vmatmul.mubr.bf16.gmra.mrb[0].mxu0 %v1531
      %v1597 = vpop.f32.mrb[0].mxu0
      %v1598 = vadd.f32 0.0, %v1597
      %v1599 = vpop.f32.mrb[0].mxu0
      %v1600 = vpop.f32.mrb[0].mxu0
      %v1601 = vadd.f32 0.0, %v1600
      %v1602 = vpop.f32.mrb[0].mxu0
      %1603 = vmatprep.mubr.bf16.mxu0 0
      %1604 = vmatmul.mubr.bf16.gmra.mrb[0].mxu0 %v1534
      %v1605 = vpop.f32.mrb[0].mxu0
      %v1606 = vadd.f32 0.0, %v1605
      %v1607 = vpop.f32.mrb[0].mxu0
      %v1608 = vpop.f32.mrb[0].mxu0
      %v1609 = vadd.f32 0.0, %v1608
      %v1610 = vpop.f32.mrb[0].mxu0
      %1611 = vmatprep.mubr.bf16.mxu0 0
      %1612 = vmatmul.mubr.bf16.gmra.mrb[0].mxu0 %v1537
      %v1613 = vpop.f32.mrb[0].mxu0
      %v1614 = vadd.f32 0.0, %v1613
      %v1615 = vpop.f32.mrb[0].mxu0
      %v1616 = vpop.f32.mrb[0].mxu0
      %v1617 = vadd.f32 0.0, %v1616
      %v1618 = vpop.f32.mrb[0].mxu0
      %1619 = vdwg.mxu0
      %v1620 = vadd.f32 %v1462, %v1574
      %v1621 = vadd.f32 %v1463, %v1577
      %v1622 = vadd.f32 %v1464, %v1582
      %v1623 = vadd.f32 %v1465, %v1585
      %v1624 = vadd.f32 %v1466, %v1590
      %v1625 = vadd.f32 %v1467, %v1593
      %v1626 = vadd.f32 %v1468, %v1598
      %v1627 = vadd.f32 %v1469, %v1601
      %v1628 = vadd.f32 %v1470, %v1606
      %v1629 = vadd.f32 %v1471, %v1609
      %v1630 = vadd.f32 %v1472, %v1614
      %v1631 = vadd.f32 %v1473, %v1617
      %v1632 = vld [vmem:[#allocation2 + $0x8] sm:$0xff]
      %v1633 = vld [vmem:[#allocation2 + $0x10] sm:$0xff]
      %v1634 = vld [vmem:[#allocation2 + $0x18] sm:$0xff]
      %v1635 = vld [vmem:[#allocation2 + $0x20] sm:$0xff]
      %v1636 = vld [vmem:[#allocation2 + $0x28] sm:$0xff]
      %v1637 = vld [vmem:[#allocation2 + $0x30] sm:$0xff]
      %v1638 = vld [vmem:[#allocation2 + $0x38] sm:$0xff]
      %v1639 = vld [vmem:[#allocation2 + $0x40] sm:$0xff]
      %v1640 = vld [vmem:[#allocation2 + $0x48] sm:$0xff]
      %v1641 = vld [vmem:[#allocation2 + $0x50] sm:$0xff]
      %v1642 = vld [vmem:[#allocation2 + $0x58] sm:$0xff]
      %v1643 = vld [vmem:[#allocation2 + $0x60] sm:$0xff]
      %v1644 = vadd.f32 %v1632, %v1620
      %v1645 = vadd.f32 %v1633, %v1621
      %v1646 = vadd.f32 %v1634, %v1622
      %v1647 = vadd.f32 %v1635, %v1623
      %v1648 = vadd.f32 %v1636, %v1624
      %v1649 = vadd.f32 %v1637, %v1625
      %v1650 = vadd.f32 %v1638, %v1626
      %v1651 = vadd.f32 %v1639, %v1627
      %v1652 = vadd.f32 %v1640, %v1628
      %v1653 = vadd.f32 %v1641, %v1629
      %v1654 = vadd.f32 %v1642, %v1630
      %v1655 = vadd.f32 %v1643, %v1631
      %1656 = vst.msk [vmem:[#allocation2 + $0x8] sm:$0xff] %vm447, %v1644
      %1657 = vst.msk [vmem:[#allocation2 + $0x10] sm:$0xff] %vm447, %v1645
      %1658 = vst.msk [vmem:[#allocation2 + $0x18] sm:$0xff] %vm447, %v1646
      %1659 = vst.msk [vmem:[#allocation2 + $0x20] sm:$0xff] %vm447, %v1647
      %1660 = vst.msk [vmem:[#allocation2 + $0x28] sm:$0xff] %vm447, %v1648
      %1661 = vst.msk [vmem:[#allocation2 + $0x30] sm:$0xff] %vm447, %v1649
      %1662 = vst.msk [vmem:[#allocation2 + $0x38] sm:$0xff] %vm447, %v1650
      %1663 = vst.msk [vmem:[#allocation2 + $0x40] sm:$0xff] %vm447, %v1651
      %1664 = vst.msk [vmem:[#allocation2 + $0x48] sm:$0xff] %vm447, %v1652
      %1665 = vst.msk [vmem:[#allocation2 + $0x50] sm:$0xff] %vm447, %v1653
      %1666 = vst.msk [vmem:[#allocation2 + $0x58] sm:$0xff] %vm447, %v1654
      %1667 = vst.msk [vmem:[#allocation2 + $0x60] sm:$0xff] %vm447, %v1655
      // Predicated region
      $region61: #{tpu_custom_call.1} parent=47 // pred_check
        %p1668 = pneg %p1130
      $region62: #{tpu_custom_call.1} parent=47 // pred_check_branch
        %1670 = sbr.rel (%p1668) target = $region64
      $region63: #{tpu_custom_call.1} parent=47 // pred_region
        %1671 = vst.msk [vmem:[#allocation2 + $0x8] sm:$0xff] %vm447, 0.0
        %1672 = vst.msk [vmem:[#allocation2 + $0x10] sm:$0xff] %vm447, 0.0
        %1673 = vst.msk [vmem:[#allocation2 + $0x58] sm:$0xff] %vm447, 0.0
        %1674 = vst.msk [vmem:[#allocation2 + $0x60] sm:$0xff] %vm447, 0.0
      $region64: #{tpu_custom_call.1} parent=47 // pred_fallthru
        _
      %v1675 = vld [vmem:[#allocation2] sm:$0xff]
      %v1676 = vld [vmem:[#allocation2 + $0x8] sm:$0xff]
      %v1677 = vld [vmem:[#allocation2 + $0x10] sm:$0xff]
      %v1678 = vld [vmem:[#allocation2 + $0x18] sm:$0xff]
      %v1679 = vld [vmem:[#allocation2 + $0x20] sm:$0xff]
      %v1680 = vld [vmem:[#allocation2 + $0x28] sm:$0xff]
      %v1681 = vld [vmem:[#allocation2 + $0x30] sm:$0xff]
      %v1682 = vld [vmem:[#allocation2 + $0x38] sm:$0xff]
      %v1683 = vld [vmem:[#allocation2 + $0x40] sm:$0xff]
      %v1684 = vld [vmem:[#allocation2 + $0x48] sm:$0xff]
      %v1685 = vld [vmem:[#allocation2 + $0x50] sm:$0xff]
      %v1686 = vld [vmem:[#allocation2 + $0x58] sm:$0xff]
      %v1687 = vld [vmem:[#allocation2 + $0x60] sm:$0xff]
      %v1688 = vld [vmem:[#allocation2 + $0x68] sm:$0xff]
      %vm1689 = vcmp.ge.f32.partialorder %v1675, 0.0
      %vm1690 = vcmp.ge.f32.partialorder %v1676, 0.0
      %vm1691 = vcmp.ge.f32.partialorder %v1677, 0.0
      %vm1692 = vcmp.ge.f32.partialorder %v1678, 0.0
      %vm1693 = vcmp.ge.f32.partialorder %v1679, 0.0
      %vm1694 = vcmp.ge.f32.partialorder %v1680, 0.0
      %vm1695 = vcmp.ge.f32.partialorder %v1681, 0.0
      %vm1696 = vcmp.ge.f32.partialorder %v1682, 0.0
      %vm1697 = vcmp.ge.f32.partialorder %v1683, 0.0
      %vm1698 = vcmp.ge.f32.partialorder %v1684, 0.0
      %vm1699 = vcmp.ge.f32.partialorder %v1685, 0.0
      %vm1700 = vcmp.ge.f32.partialorder %v1686, 0.0
      %vm1701 = vcmp.ge.f32.partialorder %v1687, 0.0
      %vm1702 = vcmp.ge.f32.partialorder %v1688, 0.0
      %v1703 = vmul.f32 %v1675, 0.1
      %v1704 = vmul.f32 %v1676, 0.1
      %v1705 = vmul.f32 %v1677, 0.1
      %v1706 = vmul.f32 %v1678, 0.1
      %v1707 = vmul.f32 %v1679, 0.1
      %v1708 = vmul.f32 %v1680, 0.1
      %v1709 = vmul.f32 %v1681, 0.1
      %v1710 = vmul.f32 %v1682, 0.1
      %v1711 = vmul.f32 %v1683, 0.1
      %v1712 = vmul.f32 %v1684, 0.1
      %v1713 = vmul.f32 %v1685, 0.1
      %v1714 = vmul.f32 %v1686, 0.1
      %v1715 = vmul.f32 %v1687, 0.1
      %v1716 = vmul.f32 %v1688, 0.1
      %v1717 = vsel %vm1689, %v1675, %v1703
      %v1718 = vsel %vm1690, %v1676, %v1704
      %v1719 = vsel %vm1691, %v1677, %v1705
      %v1720 = vsel %vm1692, %v1678, %v1706
      %v1721 = vsel %vm1693, %v1679, %v1707
      %v1722 = vsel %vm1694, %v1680, %v1708
      %v1723 = vsel %vm1695, %v1681, %v1709
      %v1724 = vsel %vm1696, %v1682, %v1710
      %v1725 = vsel %vm1697, %v1683, %v1711
      %v1726 = vsel %vm1698, %v1684, %v1712
      %v1727 = vsel %vm1699, %v1685, %v1713
      %v1728 = vsel %vm1700, %v1686, %v1714
      %v1729 = vsel %vm1701, %v1687, %v1715
      %v1730 = vsel %vm1702, %v1688, %v1716
      %v1731 = vpack.c.bf16 %v1718, %v1717
      %v1732 = vpack.c.bf16 %v1720, %v1719
      %v1733 = vpack.c.bf16 %v1722, %v1721
      %v1734 = vpack.c.bf16 %v1724, %v1723
      %v1735 = vpack.c.bf16 %v1726, %v1725
      %v1736 = vpack.c.bf16 %v1728, %v1727
      %v1737 = vpack.c.bf16 %v1730, %v1729
      %1738 = vst.msk [vmem:[#allocation3] sm:$0xff] %vm447, %v1731
      %1739 = vst.msk [vmem:[#allocation3 + $0x8] sm:$0xff] %vm447, %v1732
      %1740 = vst.msk [vmem:[#allocation3 + $0x10] sm:$0xff] %vm447, %v1733
      %1741 = vst.msk [vmem:[#allocation3 + $0x18] sm:$0xff] %vm447, %v1734
      %1742 = vst.msk [vmem:[#allocation3 + $0x20] sm:$0xff] %vm447, %v1735
      %1743 = vst.msk [vmem:[#allocation3 + $0x28] sm:$0xff] %vm447, %v1736
      %1744 = vst.msk [vmem:[#allocation3 + $0x30] sm:$0xff] %vm447, %v1737
      %s1745 = scalar_lea.vmem %s4, 1
      %v1746 = vld [vmem:[%s1745] sm:$0x1]
      %v1748 = vlaneseq
      %v1749 = vshrl.u32 %v1748, 7
      %v1750 = vsub.s32 0, %v1749
      %v1751 = vrot.slane %v1746, %v1750
      %v1753 = vld [vmem:[#allocation3] sm:$0xfc]
      %v1754 = vld [vmem:[#allocation3 + $0x8] sm:$0xff]
      %v1755 = vld [vmem:[#allocation3 + $0x10] sm:$0xff]
      %v1756 = vld [vmem:[#allocation3 + $0x18] sm:$0xff]
      %v1757 = vld [vmem:[#allocation3 + $0x20] sm:$0xff]
      %v1758 = vld [vmem:[#allocation3 + $0x28] sm:$0xff]
      %v1759 = vld [vmem:[#allocation3 + $0x30] sm:$0x7]
      %s1760 = scalar_lea.vmem %s3, 24
      %v1761 = vld [vmem:[%s1760] sm:$0xf]
      %v1762 = vld [vmem:[%s1760 + $0x4] sm:$0xf]
      %vm1763 = vsmask.f32 5376
      %v1765 = vshrl.u32 %v1753, 16
      %v1767 = vrot.slane %v1765, 2
      %v1768 = vshll.u32 %v1753, 16
      %v1770 = vrot.slane %v1768, 3
      %v1771 = vor.u32 %v1767, %v1770
      %v1773 = vshrl.u32 %v1754, 16
      %v1775 = vrot.slane %v1773, 2
      %v1776 = vshll.u32 %v1754, 16
      %v1778 = vrot.slane %v1776, 3
      %v1779 = vor.u32 %v1775, %v1778
      %v1780 = vsel %vm1763, %v1771, %v1779
      %v1782 = vshrl.u32 %v1755, 16
      %v1784 = vrot.slane %v1782, 2
      %v1785 = vshll.u32 %v1755, 16
      %v1787 = vrot.slane %v1785, 3
      %v1788 = vor.u32 %v1784, %v1787
      %v1789 = vsel %vm1763, %v1779, %v1788
      %v1791 = vshrl.u32 %v1756, 16
      %v1793 = vrot.slane %v1791, 2
      %v1794 = vshll.u32 %v1756, 16
      %v1796 = vrot.slane %v1794, 3
      %v1797 = vor.u32 %v1793, %v1796
      %v1798 = vsel %vm1763, %v1788, %v1797
      %v1800 = vshrl.u32 %v1757, 16
      %v1802 = vrot.slane %v1800, 2
      %v1803 = vshll.u32 %v1757, 16
      %v1805 = vrot.slane %v1803, 3
      %v1806 = vor.u32 %v1802, %v1805
      %v1807 = vsel %vm1763, %v1797, %v1806
      %v1809 = vshrl.u32 %v1758, 16
      %v1811 = vrot.slane %v1809, 2
      %v1812 = vshll.u32 %v1758, 16
      %v1814 = vrot.slane %v1812, 3
      %v1815 = vor.u32 %v1811, %v1814
      %v1816 = vsel %vm1763, %v1806, %v1815
      %v1818 = vshrl.u32 %v1759, 16
      %v1820 = vrot.slane %v1818, 2
      %v1821 = vshll.u32 %v1759, 16
      %v1823 = vrot.slane %v1821, 3
      %v1824 = vor.u32 %v1820, %v1823
      %v1825 = vsel %vm1763, %v1815, %v1824
      %v1828 = vunpack.c.l.b16 %v1761
      %v1829 = vunpack.c.l.b16 %v1762
      %v1830 = vpack.c.b16 %v1829, %v1828
      %v1833 = vsel %vm447, %v1780, 0
      %v1836 = vsel %vm447, %v1789, 0
      %v1839 = vsel %vm447, %v1798, 0
      %v1842 = vsel %vm447, %v1807, 0
      %v1845 = vsel %vm447, %v1816, 0
      %v1848 = vsel %vm447, %v1825, 0
      %1850 = vmatprep.subr.bf16.mxu0 0
      %1851 = vmatpush1.bf16.msra.mxu0 %v1830
      %1852 = vmatprep.subr.bf16.mxu0 0
      %1853 = vmatpush1.bf16.msra.mxu0 0
      %1854 = vmatprep.subr.bf16.mxu0 0
      %1855 = vmatpush1.bf16.msra.mxu0 0
      %1856 = vmatprep.subr.bf16.mxu0 0
      %1857 = vmatpush1.bf16.msra.mxu0 0
      %1858 = vmatprep.subr.bf16.mxu0 0
      %1859 = vmatpush1.bf16.msra.mxu0 0
      %1860 = vmatprep.subr.bf16.mxu0 0
      %1861 = vmatpush1.bf16.msra.mxu0 0
      %1862 = vmatprep.subr.bf16.mxu0 0
      %1863 = vmatpush1.bf16.msra.mxu0 0
      %1864 = vmatprep.subr.bf16.mxu0 0
      %1865 = vmatpush1.bf16.msra.mxu0 0
      %1866 = vmatprep.subr.bf16.mxu0 0
      %1867 = vmatpush1.bf16.msra.mxu0 0
      %1868 = vmatprep.subr.bf16.mxu0 0
      %1869 = vmatpush1.bf16.msra.mxu0 0
      %1870 = vmatprep.subr.bf16.mxu0 0
      %1871 = vmatpush1.bf16.msra.mxu0 0
      %1872 = vmatprep.subr.bf16.mxu0 0
      %1873 = vmatpush1.bf16.msra.mxu0 0
      %1874 = vmatprep.subr.bf16.mxu0 0
      %1875 = vmatpush1.bf16.msra.mxu0 0
      %1876 = vmatprep.subr.bf16.mxu0 0
      %1877 = vmatpush1.bf16.msra.mxu0 0
      %1878 = vmatprep.subr.bf16.mxu0 0
      %1879 = vmatpush1.bf16.msra.mxu0 0
      %1880 = vmatprep.subr.bf16.mxu0 0
      %1881 = vmatpush1.bf16.msra.mxu0 0
      %1882 = vmatprep.mubr.bf16.mxu0 0
      %1883 = vmatmul.mubr.bf16.gmra.mrb[0].mxu0 %v1833
      %v1884 = vpop.f32.mrb[0].mxu0
      %v1885 = vadd.f32 0.0, %v1884
      %v1886 = vpop.f32.mrb[0].mxu0
      %v1887 = vpop.f32.mrb[0].mxu0
      %v1888 = vadd.f32 0.0, %v1887
      %v1889 = vpop.f32.mrb[0].mxu0
      %1890 = vmatprep.mubr.bf16.mxu0 0
      %1891 = vmatmul.mubr.bf16.gmra.mrb[0].mxu0 %v1836
      %v1892 = vpop.f32.mrb[0].mxu0
      %v1893 = vadd.f32 0.0, %v1892
      %v1894 = vpop.f32.mrb[0].mxu0
      %v1895 = vpop.f32.mrb[0].mxu0
      %v1896 = vadd.f32 0.0, %v1895
      %v1897 = vpop.f32.mrb[0].mxu0
      %1898 = vmatprep.mubr.bf16.mxu0 0
      %1899 = vmatmul.mubr.bf16.gmra.mrb[0].mxu0 %v1839
      %v1900 = vpop.f32.mrb[0].mxu0
      %v1901 = vadd.f32 0.0, %v1900
      %v1902 = vpop.f32.mrb[0].mxu0
      %v1903 = vpop.f32.mrb[0].mxu0
      %v1904 = vadd.f32 0.0, %v1903
      %v1905 = vpop.f32.mrb[0].mxu0
      %1906 = vmatprep.mubr.bf16.mxu0 0
      %1907 = vmatmul.mubr.bf16.gmra.mrb[0].mxu0 %v1842
      %v1908 = vpop.f32.mrb[0].mxu0
      %v1909 = vadd.f32 0.0, %v1908
      %v1910 = vpop.f32.mrb[0].mxu0
      %v1911 = vpop.f32.mrb[0].mxu0
      %v1912 = vadd.f32 0.0, %v1911
      %v1913 = vpop.f32.mrb[0].mxu0
      %1914 = vmatprep.mubr.bf16.mxu0 0
      %1915 = vmatmul.mubr.bf16.gmra.mrb[0].mxu0 %v1845
      %v1916 = vpop.f32.mrb[0].mxu0
      %v1917 = vadd.f32 0.0, %v1916
      %v1918 = vpop.f32.mrb[0].mxu0
      %v1919 = vpop.f32.mrb[0].mxu0
      %v1920 = vadd.f32 0.0, %v1919
      %v1921 = vpop.f32.mrb[0].mxu0
      %1922 = vmatprep.mubr.bf16.mxu0 0
      %1923 = vmatmul.mubr.bf16.gmra.mrb[0].mxu0 %v1848
      %v1924 = vpop.f32.mrb[0].mxu0
      %v1925 = vadd.f32 0.0, %v1924
      %v1926 = vpop.f32.mrb[0].mxu0
      %v1927 = vpop.f32.mrb[0].mxu0
      %v1928 = vadd.f32 0.0, %v1927
      %v1929 = vpop.f32.mrb[0].mxu0
      %1930 = vdwg.mxu0
      %v1931 = vadd.f32 %v1751, %v1885
      %v1932 = vadd.f32 %v1751, %v1888
      %v1933 = vadd.f32 %v1751, %v1893
      %v1934 = vadd.f32 %v1751, %v1896
      %v1935 = vadd.f32 %v1751, %v1901
      %v1936 = vadd.f32 %v1751, %v1904
      %v1937 = vadd.f32 %v1751, %v1909
      %v1938 = vadd.f32 %v1751, %v1912
      %v1939 = vadd.f32 %v1751, %v1917
      %v1940 = vadd.f32 %v1751, %v1920
      %v1941 = vadd.f32 %v1751, %v1925
      %v1942 = vadd.f32 %v1751, %v1928
      %v1943 = vld [vmem:[#allocation3] sm:$0xf0]
      %v1944 = vld [vmem:[#allocation3 + $0x30] sm:$0xf]
      %s1945 = scalar_lea.vmem %s3, 32
      %v1946 = vld [vmem:[%s1945] sm:$0xf]
      %v1947 = vld [vmem:[%s1945 + $0x4] sm:$0xf]
      %v1955 = vrot.slane %v1943, 4
      %v1956 = vrot.slane %v1754, 4
      %v1957 = vsel %vm767, %v1955, %v1956
      %v1958 = vrot.slane %v1755, 4
      %v1959 = vsel %vm767, %v1956, %v1958
      %v1960 = vrot.slane %v1756, 4
      %v1961 = vsel %vm767, %v1958, %v1960
      %v1962 = vrot.slane %v1757, 4
      %v1963 = vsel %vm767, %v1960, %v1962
      %v1964 = vrot.slane %v1758, 4
      %v1965 = vsel %vm767, %v1962, %v1964
      %v1966 = vrot.slane %v1944, 4
      %v1967 = vsel %vm767, %v1964, %v1966
      %v1970 = vunpack.c.l.b16 %v1946
      %v1971 = vunpack.c.l.b16 %v1947
      %v1972 = vpack.c.b16 %v1971, %v1970
      %v1975 = vsel %vm447, %v1957, 0
      %v1978 = vsel %vm447, %v1959, 0
      %v1981 = vsel %vm447, %v1961, 0
      %v1984 = vsel %vm447, %v1963, 0
      %v1987 = vsel %vm447, %v1965, 0
      %v1990 = vsel %vm447, %v1967, 0
      %1992 = vmatprep.subr.bf16.mxu0 0
      %1993 = vmatpush1.bf16.msra.mxu0 %v1972
      %1994 = vmatprep.subr.bf16.mxu0 0
      %1995 = vmatpush1.bf16.msra.mxu0 0
      %1996 = vmatprep.subr.bf16.mxu0 0
      %1997 = vmatpush1.bf16.msra.mxu0 0
      %1998 = vmatprep.subr.bf16.mxu0 0
      %1999 = vmatpush1.bf16.msra.mxu0 0
      %2000 = vmatprep.subr.bf16.mxu0 0
      %2001 = vmatpush1.bf16.msra.mxu0 0
      %2002 = vmatprep.subr.bf16.mxu0 0
      %2003 = vmatpush1.bf16.msra.mxu0 0
      %2004 = vmatprep.subr.bf16.mxu0 0
      %2005 = vmatpush1.bf16.msra.mxu0 0
      %2006 = vmatprep.subr.bf16.mxu0 0
      %2007 = vmatpush1.bf16.msra.mxu0 0
      %2008 = vmatprep.subr.bf16.mxu0 0
      %2009 = vmatpush1.bf16.msra.mxu0 0
      %2010 = vmatprep.subr.bf16.mxu0 0
      %2011 = vmatpush1.bf16.msra.mxu0 0
      %2012 = vmatprep.subr.bf16.mxu0 0
      %2013 = vmatpush1.bf16.msra.mxu0 0
      %2014 = vmatprep.subr.bf16.mxu0 0
      %2015 = vmatpush1.bf16.msra.mxu0 0
      %2016 = vmatprep.subr.bf16.mxu0 0
      %2017 = vmatpush1.bf16.msra.mxu0 0
      %2018 = vmatprep.subr.bf16.mxu0 0
      %2019 = vmatpush1.bf16.msra.mxu0 0
      %2020 = vmatprep.subr.bf16.mxu0 0
      %2021 = vmatpush1.bf16.msra.mxu0 0
      %2022 = vmatprep.subr.bf16.mxu0 0
      %2023 = vmatpush1.bf16.msra.mxu0 0
      %2024 = vmatprep.mubr.bf16.mxu0 0
      %2025 = vmatmul.mubr.bf16.gmra.mrb[0].mxu0 %v1975
      %v2026 = vpop.f32.mrb[0].mxu0
      %v2027 = vadd.f32 0.0, %v2026
      %v2028 = vpop.f32.mrb[0].mxu0
      %v2029 = vpop.f32.mrb[0].mxu0
      %v2030 = vadd.f32 0.0, %v2029
      %v2031 = vpop.f32.mrb[0].mxu0
      %2032 = vmatprep.mubr.bf16.mxu0 0
      %2033 = vmatmul.mubr.bf16.gmra.mrb[0].mxu0 %v1978
      %v2034 = vpop.f32.mrb[0].mxu0
      %v2035 = vadd.f32 0.0, %v2034
      %v2036 = vpop.f32.mrb[0].mxu0
      %v2037 = vpop.f32.mrb[0].mxu0
      %v2038 = vadd.f32 0.0, %v2037
      %v2039 = vpop.f32.mrb[0].mxu0
      %2040 = vmatprep.mubr.bf16.mxu0 0
      %2041 = vmatmul.mubr.bf16.gmra.mrb[0].mxu0 %v1981
      %v2042 = vpop.f32.mrb[0].mxu0
      %v2043 = vadd.f32 0.0, %v2042
      %v2044 = vpop.f32.mrb[0].mxu0
      %v2045 = vpop.f32.mrb[0].mxu0
      %v2046 = vadd.f32 0.0, %v2045
      %v2047 = vpop.f32.mrb[0].mxu0
      %2048 = vmatprep.mubr.bf16.mxu0 0
      %2049 = vmatmul.mubr.bf16.gmra.mrb[0].mxu0 %v1984
      %v2050 = vpop.f32.mrb[0].mxu0
      %v2051 = vadd.f32 0.0, %v2050
      %v2052 = vpop.f32.mrb[0].mxu0
      %v2053 = vpop.f32.mrb[0].mxu0
      %v2054 = vadd.f32 0.0, %v2053
      %v2055 = vpop.f32.mrb[0].mxu0
      %2056 = vmatprep.mubr.bf16.mxu0 0
      %2057 = vmatmul.mubr.bf16.gmra.mrb[0].mxu0 %v1987
      %v2058 = vpop.f32.mrb[0].mxu0
      %v2059 = vadd.f32 0.0, %v2058
      %v2060 = vpop.f32.mrb[0].mxu0
      %v2061 = vpop.f32.mrb[0].mxu0
      %v2062 = vadd.f32 0.0, %v2061
      %v2063 = vpop.f32.mrb[0].mxu0
      %2064 = vmatprep.mubr.bf16.mxu0 0
      %2065 = vmatmul.mubr.bf16.gmra.mrb[0].mxu0 %v1990
      %v2066 = vpop.f32.mrb[0].mxu0
      %v2067 = vadd.f32 0.0, %v2066
      %v2068 = vpop.f32.mrb[0].mxu0
      %v2069 = vpop.f32.mrb[0].mxu0
      %v2070 = vadd.f32 0.0, %v2069
      %v2071 = vpop.f32.mrb[0].mxu0
      %2072 = vdwg.mxu0
      %v2073 = vadd.f32 %v1931, %v2027
      %v2074 = vadd.f32 %v1932, %v2030
      %v2075 = vadd.f32 %v1933, %v2035
      %v2076 = vadd.f32 %v1934, %v2038
      %v2077 = vadd.f32 %v1935, %v2043
      %v2078 = vadd.f32 %v1936, %v2046
      %v2079 = vadd.f32 %v1937, %v2051
      %v2080 = vadd.f32 %v1938, %v2054
      %v2081 = vadd.f32 %v1939, %v2059
      %v2082 = vadd.f32 %v1940, %v2062
      %v2083 = vadd.f32 %v1941, %v2067
      %v2084 = vadd.f32 %v1942, %v2070
      %v2085 = vld [vmem:[#allocation3] sm:$0xe0]
      %v2086 = vld [vmem:[#allocation3 + $0x30] sm:$0x3f]
      %s2087 = scalar_lea.vmem %s3, 40
      %v2088 = vld [vmem:[%s2087] sm:$0xf]
      %v2089 = vld [vmem:[%s2087 + $0x4] sm:$0xf]
      %vm2090 = vsmask.f32 2304
      %v2092 = vshrl.u32 %v2085, 16
      %v2094 = vrot.slane %v2092, 5
      %v2095 = vshll.u32 %v2085, 16
      %v2097 = vrot.slane %v2095, 6
      %v2098 = vor.u32 %v2094, %v2097
      %v2099 = vrot.slane %v1773, 5
      %v2100 = vrot.slane %v1776, 6
      %v2101 = vor.u32 %v2099, %v2100
      %v2102 = vsel %vm2090, %v2098, %v2101
      %v2103 = vrot.slane %v1782, 5
      %v2104 = vrot.slane %v1785, 6
      %v2105 = vor.u32 %v2103, %v2104
      %v2106 = vsel %vm2090, %v2101, %v2105
      %v2107 = vrot.slane %v1791, 5
      %v2108 = vrot.slane %v1794, 6
      %v2109 = vor.u32 %v2107, %v2108
      %v2110 = vsel %vm2090, %v2105, %v2109
      %v2111 = vrot.slane %v1800, 5
      %v2112 = vrot.slane %v1803, 6
      %v2113 = vor.u32 %v2111, %v2112
      %v2114 = vsel %vm2090, %v2109, %v2113
      %v2115 = vrot.slane %v1809, 5
      %v2116 = vrot.slane %v1812, 6
      %v2117 = vor.u32 %v2115, %v2116
      %v2118 = vsel %vm2090, %v2113, %v2117
      %v2120 = vshrl.u32 %v2086, 16
      %v2122 = vrot.slane %v2120, 5
      %v2123 = vshll.u32 %v2086, 16
      %v2125 = vrot.slane %v2123, 6
      %v2126 = vor.u32 %v2122, %v2125
      %v2127 = vsel %vm2090, %v2117, %v2126
      %v2130 = vunpack.c.l.b16 %v2088
      %v2131 = vunpack.c.l.b16 %v2089
      %v2132 = vpack.c.b16 %v2131, %v2130
      %v2135 = vsel %vm447, %v2102, 0
      %v2138 = vsel %vm447, %v2106, 0
      %v2141 = vsel %vm447, %v2110, 0
      %v2144 = vsel %vm447, %v2114, 0
      %v2147 = vsel %vm447, %v2118, 0
      %v2150 = vsel %vm447, %v2127, 0
      %2152 = vmatprep.subr.bf16.mxu0 0
      %2153 = vmatpush1.bf16.msra.mxu0 %v2132
      %2154 = vmatprep.subr.bf16.mxu0 0
      %2155 = vmatpush1.bf16.msra.mxu0 0
      %2156 = vmatprep.subr.bf16.mxu0 0
      %2157 = vmatpush1.bf16.msra.mxu0 0
      %2158 = vmatprep.subr.bf16.mxu0 0
      %2159 = vmatpush1.bf16.msra.mxu0 0
      %2160 = vmatprep.subr.bf16.mxu0 0
      %2161 = vmatpush1.bf16.msra.mxu0 0
      %2162 = vmatprep.subr.bf16.mxu0 0
      %2163 = vmatpush1.bf16.msra.mxu0 0
      %2164 = vmatprep.subr.bf16.mxu0 0
      %2165 = vmatpush1.bf16.msra.mxu0 0
      %2166 = vmatprep.subr.bf16.mxu0 0
      %2167 = vmatpush1.bf16.msra.mxu0 0
      %2168 = vmatprep.subr.bf16.mxu0 0
      %2169 = vmatpush1.bf16.msra.mxu0 0
      %2170 = vmatprep.subr.bf16.mxu0 0
      %2171 = vmatpush1.bf16.msra.mxu0 0
      %2172 = vmatprep.subr.bf16.mxu0 0
      %2173 = vmatpush1.bf16.msra.mxu0 0
      %2174 = vmatprep.subr.bf16.mxu0 0
      %2175 = vmatpush1.bf16.msra.mxu0 0
      %2176 = vmatprep.subr.bf16.mxu0 0
      %2177 = vmatpush1.bf16.msra.mxu0 0
      %2178 = vmatprep.subr.bf16.mxu0 0
      %2179 = vmatpush1.bf16.msra.mxu0 0
      %2180 = vmatprep.subr.bf16.mxu0 0
      %2181 = vmatpush1.bf16.msra.mxu0 0
      %2182 = vmatprep.subr.bf16.mxu0 0
      %2183 = vmatpush1.bf16.msra.mxu0 0
      %2184 = vmatprep.mubr.bf16.mxu0 0
      %2185 = vmatmul.mubr.bf16.gmra.mrb[0].mxu0 %v2135
      %v2186 = vpop.f32.mrb[0].mxu0
      %v2187 = vadd.f32 0.0, %v2186
      %v2188 = vpop.f32.mrb[0].mxu0
      %v2189 = vpop.f32.mrb[0].mxu0
      %v2190 = vadd.f32 0.0, %v2189
      %v2191 = vpop.f32.mrb[0].mxu0
      %2192 = vmatprep.mubr.bf16.mxu0 0
      %2193 = vmatmul.mubr.bf16.gmra.mrb[0].mxu0 %v2138
      %v2194 = vpop.f32.mrb[0].mxu0
      %v2195 = vadd.f32 0.0, %v2194
      %v2196 = vpop.f32.mrb[0].mxu0
      %v2197 = vpop.f32.mrb[0].mxu0
      %v2198 = vadd.f32 0.0, %v2197
      %v2199 = vpop.f32.mrb[0].mxu0
      %2200 = vmatprep.mubr.bf16.mxu0 0
      %2201 = vmatmul.mubr.bf16.gmra.mrb[0].mxu0 %v2141
      %v2202 = vpop.f32.mrb[0].mxu0
      %v2203 = vadd.f32 0.0, %v2202
      %v2204 = vpop.f32.mrb[0].mxu0
      %v2205 = vpop.f32.mrb[0].mxu0
      %v2206 = vadd.f32 0.0, %v2205
      %v2207 = vpop.f32.mrb[0].mxu0
      %2208 = vmatprep.mubr.bf16.mxu0 0
      %2209 = vmatmul.mubr.bf16.gmra.mrb[0].mxu0 %v2144
      %v2210 = vpop.f32.mrb[0].mxu0
      %v2211 = vadd.f32 0.0, %v2210
      %v2212 = vpop.f32.mrb[0].mxu0
      %v2213 = vpop.f32.mrb[0].mxu0
      %v2214 = vadd.f32 0.0, %v2213
      %v2215 = vpop.f32.mrb[0].mxu0
      %2216 = vmatprep.mubr.bf16.mxu0 0
      %2217 = vmatmul.mubr.bf16.gmra.mrb[0].mxu0 %v2147
      %v2218 = vpop.f32.mrb[0].mxu0
      %v2219 = vadd.f32 0.0, %v2218
      %v2220 = vpop.f32.mrb[0].mxu0
      %v2221 = vpop.f32.mrb[0].mxu0
      %v2222 = vadd.f32 0.0, %v2221
      %v2223 = vpop.f32.mrb[0].mxu0
      %2224 = vmatprep.mubr.bf16.mxu0 0
      %2225 = vmatmul.mubr.bf16.gmra.mrb[0].mxu0 %v2150
      %v2226 = vpop.f32.mrb[0].mxu0
      %v2227 = vadd.f32 0.0, %v2226
      %v2228 = vpop.f32.mrb[0].mxu0
      %v2229 = vpop.f32.mrb[0].mxu0
      %v2230 = vadd.f32 0.0, %v2229
      %v2231 = vpop.f32.mrb[0].mxu0
      %2232 = vdwg.mxu0
      %v2233 = vadd.f32 %v2073, %v2187
      %v2234 = vadd.f32 %v2074, %v2190
      %v2235 = vadd.f32 %v2075, %v2195
      %v2236 = vadd.f32 %v2076, %v2198
      %v2237 = vadd.f32 %v2077, %v2203
      %v2238 = vadd.f32 %v2078, %v2206
      %v2239 = vadd.f32 %v2079, %v2211
      %v2240 = vadd.f32 %v2080, %v2214
      %v2241 = vadd.f32 %v2081, %v2219
      %v2242 = vadd.f32 %v2082, %v2222
      %v2243 = vadd.f32 %v2083, %v2227
      %v2244 = vadd.f32 %v2084, %v2230
      %vm2245 = vcmp.ge.f32.partialorder %v2233, 0.0
      %vm2246 = vcmp.ge.f32.partialorder %v2234, 0.0
      %vm2247 = vcmp.ge.f32.partialorder %v2235, 0.0
      %vm2248 = vcmp.ge.f32.partialorder %v2236, 0.0
      %vm2249 = vcmp.ge.f32.partialorder %v2237, 0.0
      %vm2250 = vcmp.ge.f32.partialorder %v2238, 0.0
      %vm2251 = vcmp.ge.f32.partialorder %v2239, 0.0
      %vm2252 = vcmp.ge.f32.partialorder %v2240, 0.0
      %vm2253 = vcmp.ge.f32.partialorder %v2241, 0.0
      %vm2254 = vcmp.ge.f32.partialorder %v2242, 0.0
      %vm2255 = vcmp.ge.f32.partialorder %v2243, 0.0
      %vm2256 = vcmp.ge.f32.partialorder %v2244, 0.0
      %v2257 = vmul.f32 %v2233, 0.1
      %v2258 = vmul.f32 %v2234, 0.1
      %v2259 = vmul.f32 %v2235, 0.1
      %v2260 = vmul.f32 %v2236, 0.1
      %v2261 = vmul.f32 %v2237, 0.1
      %v2262 = vmul.f32 %v2238, 0.1
      %v2263 = vmul.f32 %v2239, 0.1
      %v2264 = vmul.f32 %v2240, 0.1
      %v2265 = vmul.f32 %v2241, 0.1
      %v2266 = vmul.f32 %v2242, 0.1
      %v2267 = vmul.f32 %v2243, 0.1
      %v2268 = vmul.f32 %v2244, 0.1
      %v2269 = vsel %vm2245, %v2233, %v2257
      %v2270 = vsel %vm2246, %v2234, %v2258
      %v2271 = vsel %vm2247, %v2235, %v2259
      %v2272 = vsel %vm2248, %v2236, %v2260
      %v2273 = vsel %vm2249, %v2237, %v2261
      %v2274 = vsel %vm2250, %v2238, %v2262
      %v2275 = vsel %vm2251, %v2239, %v2263
      %v2276 = vsel %vm2252, %v2240, %v2264
      %v2277 = vsel %vm2253, %v2241, %v2265
      %v2278 = vsel %vm2254, %v2242, %v2266
      %v2279 = vsel %vm2255, %v2243, %v2267
      %v2280 = vsel %vm2256, %v2244, %v2268
      %v2281 = vpack.c.bf16 %v2270, %v2269
      %v2282 = vpack.c.bf16 %v2272, %v2271
      %v2283 = vpack.c.bf16 %v2274, %v2273
      %v2284 = vpack.c.bf16 %v2276, %v2275
      %v2285 = vpack.c.bf16 %v2278, %v2277
      %v2286 = vpack.c.bf16 %v2280, %v2279
      %v2293 = vrot.slane %v2281, 4
      %v2294 = vrot.slane %v2282, 4
      %v2295 = vsel %vm767, %v2293, %v2294
      %v2296 = vrot.slane %v2283, 4
      %v2297 = vsel %vm767, %v2294, %v2296
      %v2298 = vrot.slane %v2284, 4
      %v2299 = vsel %vm767, %v2296, %v2298
      %v2300 = vrot.slane %v2285, 4
      %v2301 = vsel %vm767, %v2298, %v2300
      %v2302 = vrot.slane %v2286, 4
      %v2303 = vsel %vm767, %v2300, %v2302
      %2311 = vst.msk [vmem:[#allocation4] sm:$0xf0] %vm488, %v2293
      %2312 = vst.msk [vmem:[#allocation4 + $0x8] sm:$0xff] %vm447, %v2295
      %2313 = vst.msk [vmem:[#allocation4 + $0x10] sm:$0xff] %vm447, %v2297
      %2314 = vst.msk [vmem:[#allocation4 + $0x18] sm:$0xff] %vm447, %v2299
      %2315 = vst.msk [vmem:[#allocation4 + $0x20] sm:$0xff] %vm447, %v2301
      %2316 = vst.msk [vmem:[#allocation4 + $0x28] sm:$0xff] %vm447, %v2303
      %2317 = vst.msk [vmem:[#allocation4 + $0x30] sm:$0xf] %vm486, %v2302
      // Predicated region
      $region65: #{tpu_custom_call.1} parent=47 // pred_check
        %p2318 = pneg %p1130
      $region66: #{tpu_custom_call.1} parent=47 // pred_check_branch
        %2320 = sbr.rel (%p2318) target = $region68
      $region67: #{tpu_custom_call.1} parent=47 // pred_region
        %2321 = vst.msk [vmem:[#allocation4] sm:$0xf0] %vm488, 0
        %2322 = vst.msk [vmem:[#allocation4 + $0x8] sm:$0xf] %vm486, 0
        %2323 = vst.msk [vmem:[#allocation4 + $0x28] sm:$0xf0] %vm488, 0
        %2324 = vst.msk [vmem:[#allocation4 + $0x30] sm:$0xf] %vm486, 0
      $region68: #{tpu_custom_call.1} parent=47 // pred_fallthru
        _
      %s2325 = scalar_lea.vmem %s6, 1
      %v2326 = vld [vmem:[%s2325] sm:$0x1]
      %v2328 = vlaneseq
      %v2329 = vshrl.u32 %v2328, 7
      %v2330 = vsub.s32 0, %v2329
      %v2331 = vrot.slane %v2326, %v2330
      %v2333 = vld [vmem:[#allocation4] sm:$0xf8]
      %v2334 = vld [vmem:[#allocation4 + $0x8] sm:$0xff]
      %v2335 = vld [vmem:[#allocation4 + $0x10] sm:$0xff]
      %v2336 = vld [vmem:[#allocation4 + $0x18] sm:$0xff]
      %v2337 = vld [vmem:[#allocation4 + $0x20] sm:$0xff]
      %v2338 = vld [vmem:[#allocation4 + $0x28] sm:$0xff]
      %v2339 = vld [vmem:[#allocation4 + $0x30] sm:$0xf]
      %s2340 = scalar_lea.vmem %s5, 24
      %v2341 = vld [vmem:[%s2340] sm:$0xf]
      %v2342 = vld [vmem:[%s2340 + $0x4] sm:$0xf]
      %v2344 = vshrl.u32 %v2333, 16
      %v2346 = vrot.slane %v2344, 3
      %v2347 = vshll.u32 %v2333, 16
      %v2349 = vrot.slane %v2347, 4
      %v2350 = vor.u32 %v2346, %v2349
      %v2352 = vshrl.u32 %v2334, 16
      %v2354 = vrot.slane %v2352, 3
      %v2355 = vshll.u32 %v2334, 16
      %v2357 = vrot.slane %v2355, 4
      %v2358 = vor.u32 %v2354, %v2357
      %v2359 = vsel %vm576, %v2350, %v2358
      %v2361 = vshrl.u32 %v2335, 16
      %v2363 = vrot.slane %v2361, 3
      %v2364 = vshll.u32 %v2335, 16
      %v2366 = vrot.slane %v2364, 4
      %v2367 = vor.u32 %v2363, %v2366
      %v2368 = vsel %vm576, %v2358, %v2367
      %v2370 = vshrl.u32 %v2336, 16
      %v2372 = vrot.slane %v2370, 3
      %v2373 = vshll.u32 %v2336, 16
      %v2375 = vrot.slane %v2373, 4
      %v2376 = vor.u32 %v2372, %v2375
      %v2377 = vsel %vm576, %v2367, %v2376
      %v2379 = vshrl.u32 %v2337, 16
      %v2381 = vrot.slane %v2379, 3
      %v2382 = vshll.u32 %v2337, 16
      %v2384 = vrot.slane %v2382, 4
      %v2385 = vor.u32 %v2381, %v2384
      %v2386 = vsel %vm576, %v2376, %v2385
      %v2388 = vshrl.u32 %v2338, 16
      %v2390 = vrot.slane %v2388, 3
      %v2391 = vshll.u32 %v2338, 16
      %v2393 = vrot.slane %v2391, 4
      %v2394 = vor.u32 %v2390, %v2393
      %v2395 = vsel %vm576, %v2385, %v2394
      %v2397 = vshrl.u32 %v2339, 16
      %v2399 = vrot.slane %v2397, 3
      %v2400 = vshll.u32 %v2339, 16
      %v2402 = vrot.slane %v2400, 4
      %v2403 = vor.u32 %v2399, %v2402
      %v2404 = vsel %vm576, %v2394, %v2403
      %v2407 = vunpack.c.l.b16 %v2341
      %v2408 = vunpack.c.l.b16 %v2342
      %v2409 = vpack.c.b16 %v2408, %v2407
      %v2412 = vsel %vm447, %v2359, 0
      %v2415 = vsel %vm447, %v2368, 0
      %v2418 = vsel %vm447, %v2377, 0
      %v2421 = vsel %vm447, %v2386, 0
      %v2424 = vsel %vm447, %v2395, 0
      %v2427 = vsel %vm447, %v2404, 0
      %2429 = vmatprep.subr.bf16.mxu0 0
      %2430 = vmatpush1.bf16.msra.mxu0 %v2409
      %2431 = vmatprep.subr.bf16.mxu0 0
      %2432 = vmatpush1.bf16.msra.mxu0 0
      %2433 = vmatprep.subr.bf16.mxu0 0
      %2434 = vmatpush1.bf16.msra.mxu0 0
      %2435 = vmatprep.subr.bf16.mxu0 0
      %2436 = vmatpush1.bf16.msra.mxu0 0
      %2437 = vmatprep.subr.bf16.mxu0 0
      %2438 = vmatpush1.bf16.msra.mxu0 0
      %2439 = vmatprep.subr.bf16.mxu0 0
      %2440 = vmatpush1.bf16.msra.mxu0 0
      %2441 = vmatprep.subr.bf16.mxu0 0
      %2442 = vmatpush1.bf16.msra.mxu0 0
      %2443 = vmatprep.subr.bf16.mxu0 0
      %2444 = vmatpush1.bf16.msra.mxu0 0
      %2445 = vmatprep.subr.bf16.mxu0 0
      %2446 = vmatpush1.bf16.msra.mxu0 0
      %2447 = vmatprep.subr.bf16.mxu0 0
      %2448 = vmatpush1.bf16.msra.mxu0 0
      %2449 = vmatprep.subr.bf16.mxu0 0
      %2450 = vmatpush1.bf16.msra.mxu0 0
      %2451 = vmatprep.subr.bf16.mxu0 0
      %2452 = vmatpush1.bf16.msra.mxu0 0
      %2453 = vmatprep.subr.bf16.mxu0 0
      %2454 = vmatpush1.bf16.msra.mxu0 0
      %2455 = vmatprep.subr.bf16.mxu0 0
      %2456 = vmatpush1.bf16.msra.mxu0 0
      %2457 = vmatprep.subr.bf16.mxu0 0
      %2458 = vmatpush1.bf16.msra.mxu0 0
      %2459 = vmatprep.subr.bf16.mxu0 0
      %2460 = vmatpush1.bf16.msra.mxu0 0
      %2461 = vmatprep.mubr.bf16.mxu0 0
      %2462 = vmatmul.mubr.bf16.gmra.mrb[0].mxu0 %v2412
      %v2463 = vpop.f32.mrb[0].mxu0
      %v2464 = vadd.f32 0.0, %v2463
      %v2465 = vpop.f32.mrb[0].mxu0
      %v2466 = vpop.f32.mrb[0].mxu0
      %v2467 = vadd.f32 0.0, %v2466
      %v2468 = vpop.f32.mrb[0].mxu0
      %2469 = vmatprep.mubr.bf16.mxu0 0
      %2470 = vmatmul.mubr.bf16.gmra.mrb[0].mxu0 %v2415
      %v2471 = vpop.f32.mrb[0].mxu0
      %v2472 = vadd.f32 0.0, %v2471
      %v2473 = vpop.f32.mrb[0].mxu0
      %v2474 = vpop.f32.mrb[0].mxu0
      %v2475 = vadd.f32 0.0, %v2474
      %v2476 = vpop.f32.mrb[0].mxu0
      %2477 = vmatprep.mubr.bf16.mxu0 0
      %2478 = vmatmul.mubr.bf16.gmra.mrb[0].mxu0 %v2418
      %v2479 = vpop.f32.mrb[0].mxu0
      %v2480 = vadd.f32 0.0, %v2479
      %v2481 = vpop.f32.mrb[0].mxu0
      %v2482 = vpop.f32.mrb[0].mxu0
      %v2483 = vadd.f32 0.0, %v2482
      %v2484 = vpop.f32.mrb[0].mxu0
      %2485 = vmatprep.mubr.bf16.mxu0 0
      %2486 = vmatmul.mubr.bf16.gmra.mrb[0].mxu0 %v2421
      %v2487 = vpop.f32.mrb[0].mxu0
      %v2488 = vadd.f32 0.0, %v2487
      %v2489 = vpop.f32.mrb[0].mxu0
      %v2490 = vpop.f32.mrb[0].mxu0
      %v2491 = vadd.f32 0.0, %v2490
      %v2492 = vpop.f32.mrb[0].mxu0
      %2493 = vmatprep.mubr.bf16.mxu0 0
      %2494 = vmatmul.mubr.bf16.gmra.mrb[0].mxu0 %v2424
      %v2495 = vpop.f32.mrb[0].mxu0
      %v2496 = vadd.f32 0.0, %v2495
      %v2497 = vpop.f32.mrb[0].mxu0
      %v2498 = vpop.f32.mrb[0].mxu0
      %v2499 = vadd.f32 0.0, %v2498
      %v2500 = vpop.f32.mrb[0].mxu0
      %2501 = vmatprep.mubr.bf16.mxu0 0
      %2502 = vmatmul.mubr.bf16.gmra.mrb[0].mxu0 %v2427
      %v2503 = vpop.f32.mrb[0].mxu0
      %v2504 = vadd.f32 0.0, %v2503
      %v2505 = vpop.f32.mrb[0].mxu0
      %v2506 = vpop.f32.mrb[0].mxu0
      %v2507 = vadd.f32 0.0, %v2506
      %v2508 = vpop.f32.mrb[0].mxu0
      %2509 = vdwg.mxu0
      %v2510 = vadd.f32 %v2331, %v2464
      %v2511 = vadd.f32 %v2331, %v2467
      %v2512 = vadd.f32 %v2331, %v2472
      %v2513 = vadd.f32 %v2331, %v2475
      %v2514 = vadd.f32 %v2331, %v2480
      %v2515 = vadd.f32 %v2331, %v2483
      %v2516 = vadd.f32 %v2331, %v2488
      %v2517 = vadd.f32 %v2331, %v2491
      %v2518 = vadd.f32 %v2331, %v2496
      %v2519 = vadd.f32 %v2331, %v2499
      %v2520 = vadd.f32 %v2331, %v2504
      %v2521 = vadd.f32 %v2331, %v2507
      %v2522 = vld [vmem:[#allocation4] sm:$0xf0]
      %s2523 = scalar_lea.vmem %s5, 32
      %v2524 = vld [vmem:[%s2523] sm:$0xf]
      %v2525 = vld [vmem:[%s2523 + $0x4] sm:$0xf]
      %v2533 = vrot.slane %v2522, 4
      %v2534 = vrot.slane %v2334, 4
      %v2535 = vsel %vm767, %v2533, %v2534
      %v2536 = vrot.slane %v2335, 4
      %v2537 = vsel %vm767, %v2534, %v2536
      %v2538 = vrot.slane %v2336, 4
      %v2539 = vsel %vm767, %v2536, %v2538
      %v2540 = vrot.slane %v2337, 4
      %v2541 = vsel %vm767, %v2538, %v2540
      %v2542 = vrot.slane %v2338, 4
      %v2543 = vsel %vm767, %v2540, %v2542
      %v2544 = vrot.slane %v2339, 4
      %v2545 = vsel %vm767, %v2542, %v2544
      %v2548 = vunpack.c.l.b16 %v2524
      %v2549 = vunpack.c.l.b16 %v2525
      %v2550 = vpack.c.b16 %v2549, %v2548
      %v2553 = vsel %vm447, %v2535, 0
      %v2556 = vsel %vm447, %v2537, 0
      %v2559 = vsel %vm447, %v2539, 0
      %v2562 = vsel %vm447, %v2541, 0
      %v2565 = vsel %vm447, %v2543, 0
      %v2568 = vsel %vm447, %v2545, 0
      %2570 = vmatprep.subr.bf16.mxu0 0
      %2571 = vmatpush1.bf16.msra.mxu0 %v2550
      %2572 = vmatprep.subr.bf16.mxu0 0
      %2573 = vmatpush1.bf16.msra.mxu0 0
      %2574 = vmatprep.subr.bf16.mxu0 0
      %2575 = vmatpush1.bf16.msra.mxu0 0
      %2576 = vmatprep.subr.bf16.mxu0 0
      %2577 = vmatpush1.bf16.msra.mxu0 0
      %2578 = vmatprep.subr.bf16.mxu0 0
      %2579 = vmatpush1.bf16.msra.mxu0 0
      %2580 = vmatprep.subr.bf16.mxu0 0
      %2581 = vmatpush1.bf16.msra.mxu0 0
      %2582 = vmatprep.subr.bf16.mxu0 0
      %2583 = vmatpush1.bf16.msra.mxu0 0
      %2584 = vmatprep.subr.bf16.mxu0 0
      %2585 = vmatpush1.bf16.msra.mxu0 0
      %2586 = vmatprep.subr.bf16.mxu0 0
      %2587 = vmatpush1.bf16.msra.mxu0 0
      %2588 = vmatprep.subr.bf16.mxu0 0
      %2589 = vmatpush1.bf16.msra.mxu0 0
      %2590 = vmatprep.subr.bf16.mxu0 0
      %2591 = vmatpush1.bf16.msra.mxu0 0
      %2592 = vmatprep.subr.bf16.mxu0 0
      %2593 = vmatpush1.bf16.msra.mxu0 0
      %2594 = vmatprep.subr.bf16.mxu0 0
      %2595 = vmatpush1.bf16.msra.mxu0 0
      %2596 = vmatprep.subr.bf16.mxu0 0
      %2597 = vmatpush1.bf16.msra.mxu0 0
      %2598 = vmatprep.subr.bf16.mxu0 0
      %2599 = vmatpush1.bf16.msra.mxu0 0
      %2600 = vmatprep.subr.bf16.mxu0 0
      %2601 = vmatpush1.bf16.msra.mxu0 0
      %2602 = vmatprep.mubr.bf16.mxu0 0
      %2603 = vmatmul.mubr.bf16.gmra.mrb[0].mxu0 %v2553
      %v2604 = vpop.f32.mrb[0].mxu0
      %v2605 = vadd.f32 0.0, %v2604
      %v2606 = vpop.f32.mrb[0].mxu0
      %v2607 = vpop.f32.mrb[0].mxu0
      %v2608 = vadd.f32 0.0, %v2607
      %v2609 = vpop.f32.mrb[0].mxu0
      %2610 = vmatprep.mubr.bf16.mxu0 0
      %2611 = vmatmul.mubr.bf16.gmra.mrb[0].mxu0 %v2556
      %v2612 = vpop.f32.mrb[0].mxu0
      %v2613 = vadd.f32 0.0, %v2612
      %v2614 = vpop.f32.mrb[0].mxu0
      %v2615 = vpop.f32.mrb[0].mxu0
      %v2616 = vadd.f32 0.0, %v2615
      %v2617 = vpop.f32.mrb[0].mxu0
      %2618 = vmatprep.mubr.bf16.mxu0 0
      %2619 = vmatmul.mubr.bf16.gmra.mrb[0].mxu0 %v2559
      %v2620 = vpop.f32.mrb[0].mxu0
      %v2621 = vadd.f32 0.0, %v2620
      %v2622 = vpop.f32.mrb[0].mxu0
      %v2623 = vpop.f32.mrb[0].mxu0
      %v2624 = vadd.f32 0.0, %v2623
      %v2625 = vpop.f32.mrb[0].mxu0
      %2626 = vmatprep.mubr.bf16.mxu0 0
      %2627 = vmatmul.mubr.bf16.gmra.mrb[0].mxu0 %v2562
      %v2628 = vpop.f32.mrb[0].mxu0
      %v2629 = vadd.f32 0.0, %v2628
      %v2630 = vpop.f32.mrb[0].mxu0
      %v2631 = vpop.f32.mrb[0].mxu0
      %v2632 = vadd.f32 0.0, %v2631
      %v2633 = vpop.f32.mrb[0].mxu0
      %2634 = vmatprep.mubr.bf16.mxu0 0
      %2635 = vmatmul.mubr.bf16.gmra.mrb[0].mxu0 %v2565
      %v2636 = vpop.f32.mrb[0].mxu0
      %v2637 = vadd.f32 0.0, %v2636
      %v2638 = vpop.f32.mrb[0].mxu0
      %v2639 = vpop.f32.mrb[0].mxu0
      %v2640 = vadd.f32 0.0, %v2639
      %v2641 = vpop.f32.mrb[0].mxu0
      %2642 = vmatprep.mubr.bf16.mxu0 0
      %2643 = vmatmul.mubr.bf16.gmra.mrb[0].mxu0 %v2568
      %v2644 = vpop.f32.mrb[0].mxu0
      %v2645 = vadd.f32 0.0, %v2644
      %v2646 = vpop.f32.mrb[0].mxu0
      %v2647 = vpop.f32.mrb[0].mxu0
      %v2648 = vadd.f32 0.0, %v2647
      %v2649 = vpop.f32.mrb[0].mxu0
      %2650 = vdwg.mxu0
      %v2651 = vadd.f32 %v2510, %v2605
      %v2652 = vadd.f32 %v2511, %v2608
      %v2653 = vadd.f32 %v2512, %v2613
      %v2654 = vadd.f32 %v2513, %v2616
      %v2655 = vadd.f32 %v2514, %v2621
      %v2656 = vadd.f32 %v2515, %v2624
      %v2657 = vadd.f32 %v2516, %v2629
      %v2658 = vadd.f32 %v2517, %v2632
      %v2659 = vadd.f32 %v2518, %v2637
      %v2660 = vadd.f32 %v2519, %v2640
      %v2661 = vadd.f32 %v2520, %v2645
      %v2662 = vadd.f32 %v2521, %v2648
      %v2663 = vld [vmem:[#allocation4 + $0x30] sm:$0x1f]
      %s2664 = scalar_lea.vmem %s5, 40
      %v2665 = vld [vmem:[%s2664] sm:$0xf]
      %v2666 = vld [vmem:[%s2664 + $0x4] sm:$0xf]
      %v2668 = vshrl.u32 %v2522, 16
      %v2670 = vrot.slane %v2668, 4
      %v2671 = vshll.u32 %v2522, 16
      %v2673 = vrot.slane %v2671, 5
      %v2674 = vor.u32 %v2670, %v2673
      %v2675 = vrot.slane %v2352, 4
      %v2676 = vrot.slane %v2355, 5
      %v2677 = vor.u32 %v2675, %v2676
      %v2678 = vsel %vm902, %v2674, %v2677
      %v2679 = vrot.slane %v2361, 4
      %v2680 = vrot.slane %v2364, 5
      %v2681 = vor.u32 %v2679, %v2680
      %v2682 = vsel %vm902, %v2677, %v2681
      %v2683 = vrot.slane %v2370, 4
      %v2684 = vrot.slane %v2373, 5
      %v2685 = vor.u32 %v2683, %v2684
      %v2686 = vsel %vm902, %v2681, %v2685
      %v2687 = vrot.slane %v2379, 4
      %v2688 = vrot.slane %v2382, 5
      %v2689 = vor.u32 %v2687, %v2688
      %v2690 = vsel %vm902, %v2685, %v2689
      %v2691 = vrot.slane %v2388, 4
      %v2692 = vrot.slane %v2391, 5
      %v2693 = vor.u32 %v2691, %v2692
      %v2694 = vsel %vm902, %v2689, %v2693
      %v2696 = vshrl.u32 %v2663, 16
      %v2698 = vrot.slane %v2696, 4
      %v2699 = vshll.u32 %v2663, 16
      %v2701 = vrot.slane %v2699, 5
      %v2702 = vor.u32 %v2698, %v2701
      %v2703 = vsel %vm902, %v2693, %v2702
      %v2706 = vunpack.c.l.b16 %v2665
      %v2707 = vunpack.c.l.b16 %v2666
      %v2708 = vpack.c.b16 %v2707, %v2706
      %v2711 = vsel %vm447, %v2678, 0
      %v2714 = vsel %vm447, %v2682, 0
      %v2717 = vsel %vm447, %v2686, 0
      %v2720 = vsel %vm447, %v2690, 0
      %v2723 = vsel %vm447, %v2694, 0
      %v2726 = vsel %vm447, %v2703, 0
      %2728 = vmatprep.subr.bf16.mxu0 0
      %2729 = vmatpush1.bf16.msra.mxu0 %v2708
      %2730 = vmatprep.subr.bf16.mxu0 0
      %2731 = vmatpush1.bf16.msra.mxu0 0
      %2732 = vmatprep.subr.bf16.mxu0 0
      %2733 = vmatpush1.bf16.msra.mxu0 0
      %2734 = vmatprep.subr.bf16.mxu0 0
      %2735 = vmatpush1.bf16.msra.mxu0 0
      %2736 = vmatprep.subr.bf16.mxu0 0
      %2737 = vmatpush1.bf16.msra.mxu0 0
      %2738 = vmatprep.subr.bf16.mxu0 0
      %2739 = vmatpush1.bf16.msra.mxu0 0
      %2740 = vmatprep.subr.bf16.mxu0 0
      %2741 = vmatpush1.bf16.msra.mxu0 0
      %2742 = vmatprep.subr.bf16.mxu0 0
      %2743 = vmatpush1.bf16.msra.mxu0 0
      %2744 = vmatprep.subr.bf16.mxu0 0
      %2745 = vmatpush1.bf16.msra.mxu0 0
      %2746 = vmatprep.subr.bf16.mxu0 0
      %2747 = vmatpush1.bf16.msra.mxu0 0
      %2748 = vmatprep.subr.bf16.mxu0 0
      %2749 = vmatpush1.bf16.msra.mxu0 0
      %2750 = vmatprep.subr.bf16.mxu0 0
      %2751 = vmatpush1.bf16.msra.mxu0 0
      %2752 = vmatprep.subr.bf16.mxu0 0
      %2753 = vmatpush1.bf16.msra.mxu0 0
      %2754 = vmatprep.subr.bf16.mxu0 0
      %2755 = vmatpush1.bf16.msra.mxu0 0
      %2756 = vmatprep.subr.bf16.mxu0 0
      %2757 = vmatpush1.bf16.msra.mxu0 0
      %2758 = vmatprep.subr.bf16.mxu0 0
      %2759 = vmatpush1.bf16.msra.mxu0 0
      %2760 = vmatprep.mubr.bf16.mxu0 0
      %2761 = vmatmul.mubr.bf16.gmra.mrb[0].mxu0 %v2711
      %v2762 = vpop.f32.mrb[0].mxu0
      %v2763 = vadd.f32 0.0, %v2762
      %v2764 = vpop.f32.mrb[0].mxu0
      %v2765 = vpop.f32.mrb[0].mxu0
      %v2766 = vadd.f32 0.0, %v2765
      %v2767 = vpop.f32.mrb[0].mxu0
      %2768 = vmatprep.mubr.bf16.mxu0 0
      %2769 = vmatmul.mubr.bf16.gmra.mrb[0].mxu0 %v2714
      %v2770 = vpop.f32.mrb[0].mxu0
      %v2771 = vadd.f32 0.0, %v2770
      %v2772 = vpop.f32.mrb[0].mxu0
      %v2773 = vpop.f32.mrb[0].mxu0
      %v2774 = vadd.f32 0.0, %v2773
      %v2775 = vpop.f32.mrb[0].mxu0
      %2776 = vmatprep.mubr.bf16.mxu0 0
      %2777 = vmatmul.mubr.bf16.gmra.mrb[0].mxu0 %v2717
      %v2778 = vpop.f32.mrb[0].mxu0
      %v2779 = vadd.f32 0.0, %v2778
      %v2780 = vpop.f32.mrb[0].mxu0
      %v2781 = vpop.f32.mrb[0].mxu0
      %v2782 = vadd.f32 0.0, %v2781
      %v2783 = vpop.f32.mrb[0].mxu0
      %2784 = vmatprep.mubr.bf16.mxu0 0
      %2785 = vmatmul.mubr.bf16.gmra.mrb[0].mxu0 %v2720
      %v2786 = vpop.f32.mrb[0].mxu0
      %v2787 = vadd.f32 0.0, %v2786
      %v2788 = vpop.f32.mrb[0].mxu0
      %v2789 = vpop.f32.mrb[0].mxu0
      %v2790 = vadd.f32 0.0, %v2789
      %v2791 = vpop.f32.mrb[0].mxu0
      %2792 = vmatprep.mubr.bf16.mxu0 0
      %2793 = vmatmul.mubr.bf16.gmra.mrb[0].mxu0 %v2723
      %v2794 = vpop.f32.mrb[0].mxu0
      %v2795 = vadd.f32 0.0, %v2794
      %v2796 = vpop.f32.mrb[0].mxu0
      %v2797 = vpop.f32.mrb[0].mxu0
      %v2798 = vadd.f32 0.0, %v2797
      %v2799 = vpop.f32.mrb[0].mxu0
      %2800 = vmatprep.mubr.bf16.mxu0 0
      %2801 = vmatmul.mubr.bf16.gmra.mrb[0].mxu0 %v2726
      %v2802 = vpop.f32.mrb[0].mxu0
      %v2803 = vadd.f32 0.0, %v2802
      %v2804 = vpop.f32.mrb[0].mxu0
      %v2805 = vpop.f32.mrb[0].mxu0
      %v2806 = vadd.f32 0.0, %v2805
      %v2807 = vpop.f32.mrb[0].mxu0
      %2808 = vdwg.mxu0
      %v2809 = vadd.f32 %v2651, %v2763
      %v2810 = vadd.f32 %v2652, %v2766
      %v2811 = vadd.f32 %v2653, %v2771
      %v2812 = vadd.f32 %v2654, %v2774
      %v2813 = vadd.f32 %v2655, %v2779
      %v2814 = vadd.f32 %v2656, %v2782
      %v2815 = vadd.f32 %v2657, %v2787
      %v2816 = vadd.f32 %v2658, %v2790
      %v2817 = vadd.f32 %v2659, %v2795
      %v2818 = vadd.f32 %v2660, %v2798
      %v2819 = vadd.f32 %v2661, %v2803
      %v2820 = vadd.f32 %v2662, %v2806
      %v2821 = vld [vmem:[#allocation2 + $0x8] sm:$0xff]
      %v2822 = vld [vmem:[#allocation2 + $0x10] sm:$0xff]
      %v2823 = vld [vmem:[#allocation2 + $0x18] sm:$0xff]
      %v2824 = vld [vmem:[#allocation2 + $0x20] sm:$0xff]
      %v2825 = vld [vmem:[#allocation2 + $0x28] sm:$0xff]
      %v2826 = vld [vmem:[#allocation2 + $0x30] sm:$0xff]
      %v2827 = vld [vmem:[#allocation2 + $0x38] sm:$0xff]
      %v2828 = vld [vmem:[#allocation2 + $0x40] sm:$0xff]
      %v2829 = vld [vmem:[#allocation2 + $0x48] sm:$0xff]
      %v2830 = vld [vmem:[#allocation2 + $0x50] sm:$0xff]
      %v2831 = vld [vmem:[#allocation2 + $0x58] sm:$0xff]
      %v2832 = vld [vmem:[#allocation2 + $0x60] sm:$0xff]
      %v2833 = vadd.f32 %v2821, %v2809
      %v2834 = vadd.f32 %v2822, %v2810
      %v2835 = vadd.f32 %v2823, %v2811
      %v2836 = vadd.f32 %v2824, %v2812
      %v2837 = vadd.f32 %v2825, %v2813
      %v2838 = vadd.f32 %v2826, %v2814
      %v2839 = vadd.f32 %v2827, %v2815
      %v2840 = vadd.f32 %v2828, %v2816
      %v2841 = vadd.f32 %v2829, %v2817
      %v2842 = vadd.f32 %v2830, %v2818
      %v2843 = vadd.f32 %v2831, %v2819
      %v2844 = vadd.f32 %v2832, %v2820
      %2845 = vst.msk [vmem:[#allocation2 + $0x8] sm:$0xff] %vm447, %v2833
      %2846 = vst.msk [vmem:[#allocation2 + $0x10] sm:$0xff] %vm447, %v2834
      %2847 = vst.msk [vmem:[#allocation2 + $0x18] sm:$0xff] %vm447, %v2835
      %2848 = vst.msk [vmem:[#allocation2 + $0x20] sm:$0xff] %vm447, %v2836
      %2849 = vst.msk [vmem:[#allocation2 + $0x28] sm:$0xff] %vm447, %v2837
      %2850 = vst.msk [vmem:[#allocation2 + $0x30] sm:$0xff] %vm447, %v2838
      %2851 = vst.msk [vmem:[#allocation2 + $0x38] sm:$0xff] %vm447, %v2839
      %2852 = vst.msk [vmem:[#allocation2 + $0x40] sm:$0xff] %vm447, %v2840
      %2853 = vst.msk [vmem:[#allocation2 + $0x48] sm:$0xff] %vm447, %v2841
      %2854 = vst.msk [vmem:[#allocation2 + $0x50] sm:$0xff] %vm447, %v2842
      %2855 = vst.msk [vmem:[#allocation2 + $0x58] sm:$0xff] %vm447, %v2843
      %2856 = vst.msk [vmem:[#allocation2 + $0x60] sm:$0xff] %vm447, %v2844
      // Predicated region
      $region69: #{tpu_custom_call.1} parent=47 // pred_check
        %p2857 = pneg %p1130
      $region70: #{tpu_custom_call.1} parent=47 // pred_check_branch
        %2859 = sbr.rel (%p2857) target = $region72
      $region71: #{tpu_custom_call.1} parent=47 // pred_region
        %2860 = vst.msk [vmem:[#allocation2 + $0x8] sm:$0xff] %vm447, 0.0
        %2861 = vst.msk [vmem:[#allocation2 + $0x10] sm:$0xff] %vm447, 0.0
        %2862 = vst.msk [vmem:[#allocation2 + $0x58] sm:$0xff] %vm447, 0.0
        %2863 = vst.msk [vmem:[#allocation2 + $0x60] sm:$0xff] %vm447, 0.0
      $region72: #{tpu_custom_call.1} parent=47 // pred_fallthru
        _
      %v2864 = vld [vmem:[#allocation2] sm:$0xff]
      %v2865 = vld [vmem:[#allocation2 + $0x8] sm:$0xff]
      %v2866 = vld [vmem:[#allocation2 + $0x10] sm:$0xff]
      %v2867 = vld [vmem:[#allocation2 + $0x18] sm:$0xff]
      %v2868 = vld [vmem:[#allocation2 + $0x20] sm:$0xff]
      %v2869 = vld [vmem:[#allocation2 + $0x28] sm:$0xff]
      %v2870 = vld [vmem:[#allocation2 + $0x30] sm:$0xff]
      %v2871 = vld [vmem:[#allocation2 + $0x38] sm:$0xff]
      %v2872 = vld [vmem:[#allocation2 + $0x40] sm:$0xff]
      %v2873 = vld [vmem:[#allocation2 + $0x48] sm:$0xff]
      %v2874 = vld [vmem:[#allocation2 + $0x50] sm:$0xff]
      %v2875 = vld [vmem:[#allocation2 + $0x58] sm:$0xff]
      %v2876 = vld [vmem:[#allocation2 + $0x60] sm:$0xff]
      %v2877 = vld [vmem:[#allocation2 + $0x68] sm:$0xff]
      %vm2878 = vcmp.ge.f32.partialorder %v2864, 0.0
      %vm2879 = vcmp.ge.f32.partialorder %v2865, 0.0
      %vm2880 = vcmp.ge.f32.partialorder %v2866, 0.0
      %vm2881 = vcmp.ge.f32.partialorder %v2867, 0.0
      %vm2882 = vcmp.ge.f32.partialorder %v2868, 0.0
      %vm2883 = vcmp.ge.f32.partialorder %v2869, 0.0
      %vm2884 = vcmp.ge.f32.partialorder %v2870, 0.0
      %vm2885 = vcmp.ge.f32.partialorder %v2871, 0.0
      %vm2886 = vcmp.ge.f32.partialorder %v2872, 0.0
      %vm2887 = vcmp.ge.f32.partialorder %v2873, 0.0
      %vm2888 = vcmp.ge.f32.partialorder %v2874, 0.0
      %vm2889 = vcmp.ge.f32.partialorder %v2875, 0.0
      %vm2890 = vcmp.ge.f32.partialorder %v2876, 0.0
      %vm2891 = vcmp.ge.f32.partialorder %v2877, 0.0
      %v2892 = vmul.f32 %v2864, 0.1
      %v2893 = vmul.f32 %v2865, 0.1
      %v2894 = vmul.f32 %v2866, 0.1
      %v2895 = vmul.f32 %v2867, 0.1
      %v2896 = vmul.f32 %v2868, 0.1
      %v2897 = vmul.f32 %v2869, 0.1
      %v2898 = vmul.f32 %v2870, 0.1
      %v2899 = vmul.f32 %v2871, 0.1
      %v2900 = vmul.f32 %v2872, 0.1
      %v2901 = vmul.f32 %v2873, 0.1
      %v2902 = vmul.f32 %v2874, 0.1
      %v2903 = vmul.f32 %v2875, 0.1
      %v2904 = vmul.f32 %v2876, 0.1
      %v2905 = vmul.f32 %v2877, 0.1
      %v2906 = vsel %vm2878, %v2864, %v2892
      %v2907 = vsel %vm2879, %v2865, %v2893
      %v2908 = vsel %vm2880, %v2866, %v2894
      %v2909 = vsel %vm2881, %v2867, %v2895
      %v2910 = vsel %vm2882, %v2868, %v2896
      %v2911 = vsel %vm2883, %v2869, %v2897
      %v2912 = vsel %vm2884, %v2870, %v2898
      %v2913 = vsel %vm2885, %v2871, %v2899
      %v2914 = vsel %vm2886, %v2872, %v2900
      %v2915 = vsel %vm2887, %v2873, %v2901
      %v2916 = vsel %vm2888, %v2874, %v2902
      %v2917 = vsel %vm2889, %v2875, %v2903
      %v2918 = vsel %vm2890, %v2876, %v2904
      %v2919 = vsel %vm2891, %v2877, %v2905
      %v2920 = vpack.c.bf16 %v2907, %v2906
      %v2921 = vpack.c.bf16 %v2909, %v2908
      %v2922 = vpack.c.bf16 %v2911, %v2910
      %v2923 = vpack.c.bf16 %v2913, %v2912
      %v2924 = vpack.c.bf16 %v2915, %v2914
      %v2925 = vpack.c.bf16 %v2917, %v2916
      %v2926 = vpack.c.bf16 %v2919, %v2918
      %2927 = vst.msk [vmem:[#allocation3] sm:$0xff] %vm447, %v2920
      %2928 = vst.msk [vmem:[#allocation3 + $0x8] sm:$0xff] %vm447, %v2921
      %2929 = vst.msk [vmem:[#allocation3 + $0x10] sm:$0xff] %vm447, %v2922
      %2930 = vst.msk [vmem:[#allocation3 + $0x18] sm:$0xff] %vm447, %v2923
      %2931 = vst.msk [vmem:[#allocation3 + $0x20] sm:$0xff] %vm447, %v2924
      %2932 = vst.msk [vmem:[#allocation3 + $0x28] sm:$0xff] %vm447, %v2925
      %2933 = vst.msk [vmem:[#allocation3 + $0x30] sm:$0xff] %vm447, %v2926
      %s2934 = scalar_lea.vmem %s4, 2
      %v2935 = vld [vmem:[%s2934] sm:$0x1]
      %v2937 = vlaneseq
      %v2938 = vshrl.u32 %v2937, 7
      %v2939 = vsub.s32 0, %v2938
      %v2940 = vrot.slane %v2935, %v2939
      %v2942 = vld [vmem:[#allocation3] sm:$0xfe]
      %v2943 = vld [vmem:[#allocation3 + $0x8] sm:$0xff]
      %v2944 = vld [vmem:[#allocation3 + $0x10] sm:$0xff]
      %v2945 = vld [vmem:[#allocation3 + $0x18] sm:$0xff]
      %v2946 = vld [vmem:[#allocation3 + $0x20] sm:$0xff]
      %v2947 = vld [vmem:[#allocation3 + $0x28] sm:$0xff]
      %v2948 = vld [vmem:[#allocation3 + $0x30] sm:$0x3]
      %s2949 = scalar_lea.vmem %s3, 48
      %v2950 = vld [vmem:[%s2949] sm:$0xf]
      %v2951 = vld [vmem:[%s2949 + $0x4] sm:$0xf]
      %vm2952 = vsmask.f32 6400
      %v2954 = vshrl.u32 %v2942, 16
      %v2956 = vrot.slane %v2954, 1
      %v2957 = vshll.u32 %v2942, 16
      %v2959 = vrot.slane %v2957, 2
      %v2960 = vor.u32 %v2956, %v2959
      %v2962 = vshrl.u32 %v2943, 16
      %v2964 = vrot.slane %v2962, 1
      %v2965 = vshll.u32 %v2943, 16
      %v2967 = vrot.slane %v2965, 2
      %v2968 = vor.u32 %v2964, %v2967
      %v2969 = vsel %vm2952, %v2960, %v2968
      %v2971 = vshrl.u32 %v2944, 16
      %v2973 = vrot.slane %v2971, 1
      %v2974 = vshll.u32 %v2944, 16
      %v2976 = vrot.slane %v2974, 2
      %v2977 = vor.u32 %v2973, %v2976
      %v2978 = vsel %vm2952, %v2968, %v2977
      %v2980 = vshrl.u32 %v2945, 16
      %v2982 = vrot.slane %v2980, 1
      %v2983 = vshll.u32 %v2945, 16
      %v2985 = vrot.slane %v2983, 2
      %v2986 = vor.u32 %v2982, %v2985
      %v2987 = vsel %vm2952, %v2977, %v2986
      %v2989 = vshrl.u32 %v2946, 16
      %v2991 = vrot.slane %v2989, 1
      %v2992 = vshll.u32 %v2946, 16
      %v2994 = vrot.slane %v2992, 2
      %v2995 = vor.u32 %v2991, %v2994
      %v2996 = vsel %vm2952, %v2986, %v2995
      %v2998 = vshrl.u32 %v2947, 16
      %v3000 = vrot.slane %v2998, 1
      %v3001 = vshll.u32 %v2947, 16
      %v3003 = vrot.slane %v3001, 2
      %v3004 = vor.u32 %v3000, %v3003
      %v3005 = vsel %vm2952, %v2995, %v3004
      %v3007 = vshrl.u32 %v2948, 16
      %v3009 = vrot.slane %v3007, 1
      %v3010 = vshll.u32 %v2948, 16
      %v3012 = vrot.slane %v3010, 2
      %v3013 = vor.u32 %v3009, %v3012
      %v3014 = vsel %vm2952, %v3004, %v3013
      %v3017 = vunpack.c.l.b16 %v2950
      %v3018 = vunpack.c.l.b16 %v2951
      %v3019 = vpack.c.b16 %v3018, %v3017
      %v3022 = vsel %vm447, %v2969, 0
      %v3025 = vsel %vm447, %v2978, 0
      %v3028 = vsel %vm447, %v2987, 0
      %v3031 = vsel %vm447, %v2996, 0
      %v3034 = vsel %vm447, %v3005, 0
      %v3037 = vsel %vm447, %v3014, 0
      %3039 = vmatprep.subr.bf16.mxu0 0
      %3040 = vmatpush1.bf16.msra.mxu0 %v3019
      %3041 = vmatprep.subr.bf16.mxu0 0
      %3042 = vmatpush1.bf16.msra.mxu0 0
      %3043 = vmatprep.subr.bf16.mxu0 0
      %3044 = vmatpush1.bf16.msra.mxu0 0
      %3045 = vmatprep.subr.bf16.mxu0 0
      %3046 = vmatpush1.bf16.msra.mxu0 0
      %3047 = vmatprep.subr.bf16.mxu0 0
      %3048 = vmatpush1.bf16.msra.mxu0 0
      %3049 = vmatprep.subr.bf16.mxu0 0
      %3050 = vmatpush1.bf16.msra.mxu0 0
      %3051 = vmatprep.subr.bf16.mxu0 0
      %3052 = vmatpush1.bf16.msra.mxu0 0
      %3053 = vmatprep.subr.bf16.mxu0 0
      %3054 = vmatpush1.bf16.msra.mxu0 0
      %3055 = vmatprep.subr.bf16.mxu0 0
      %3056 = vmatpush1.bf16.msra.mxu0 0
      %3057 = vmatprep.subr.bf16.mxu0 0
      %3058 = vmatpush1.bf16.msra.mxu0 0
      %3059 = vmatprep.subr.bf16.mxu0 0
      %3060 = vmatpush1.bf16.msra.mxu0 0
      %3061 = vmatprep.subr.bf16.mxu0 0
      %3062 = vmatpush1.bf16.msra.mxu0 0
      %3063 = vmatprep.subr.bf16.mxu0 0
      %3064 = vmatpush1.bf16.msra.mxu0 0
      %3065 = vmatprep.subr.bf16.mxu0 0
      %3066 = vmatpush1.bf16.msra.mxu0 0
      %3067 = vmatprep.subr.bf16.mxu0 0
      %3068 = vmatpush1.bf16.msra.mxu0 0
      %3069 = vmatprep.subr.bf16.mxu0 0
      %3070 = vmatpush1.bf16.msra.mxu0 0
      %3071 = vmatprep.mubr.bf16.mxu0 0
      %3072 = vmatmul.mubr.bf16.gmra.mrb[0].mxu0 %v3022
      %v3073 = vpop.f32.mrb[0].mxu0
      %v3074 = vadd.f32 0.0, %v3073
      %v3075 = vpop.f32.mrb[0].mxu0
      %v3076 = vpop.f32.mrb[0].mxu0
      %v3077 = vadd.f32 0.0, %v3076
      %v3078 = vpop.f32.mrb[0].mxu0
      %3079 = vmatprep.mubr.bf16.mxu0 0
      %3080 = vmatmul.mubr.bf16.gmra.mrb[0].mxu0 %v3025
      %v3081 = vpop.f32.mrb[0].mxu0
      %v3082 = vadd.f32 0.0, %v3081
      %v3083 = vpop.f32.mrb[0].mxu0
      %v3084 = vpop.f32.mrb[0].mxu0
      %v3085 = vadd.f32 0.0, %v3084
      %v3086 = vpop.f32.mrb[0].mxu0
      %3087 = vmatprep.mubr.bf16.mxu0 0
      %3088 = vmatmul.mubr.bf16.gmra.mrb[0].mxu0 %v3028
      %v3089 = vpop.f32.mrb[0].mxu0
      %v3090 = vadd.f32 0.0, %v3089
      %v3091 = vpop.f32.mrb[0].mxu0
      %v3092 = vpop.f32.mrb[0].mxu0
      %v3093 = vadd.f32 0.0, %v3092
      %v3094 = vpop.f32.mrb[0].mxu0
      %3095 = vmatprep.mubr.bf16.mxu0 0
      %3096 = vmatmul.mubr.bf16.gmra.mrb[0].mxu0 %v3031
      %v3097 = vpop.f32.mrb[0].mxu0
      %v3098 = vadd.f32 0.0, %v3097
      %v3099 = vpop.f32.mrb[0].mxu0
      %v3100 = vpop.f32.mrb[0].mxu0
      %v3101 = vadd.f32 0.0, %v3100
      %v3102 = vpop.f32.mrb[0].mxu0
      %3103 = vmatprep.mubr.bf16.mxu0 0
      %3104 = vmatmul.mubr.bf16.gmra.mrb[0].mxu0 %v3034
      %v3105 = vpop.f32.mrb[0].mxu0
      %v3106 = vadd.f32 0.0, %v3105
      %v3107 = vpop.f32.mrb[0].mxu0
      %v3108 = vpop.f32.mrb[0].mxu0
      %v3109 = vadd.f32 0.0, %v3108
      %v3110 = vpop.f32.mrb[0].mxu0
      %3111 = vmatprep.mubr.bf16.mxu0 0
      %3112 = vmatmul.mubr.bf16.gmra.mrb[0].mxu0 %v3037
      %v3113 = vpop.f32.mrb[0].mxu0
      %v3114 = vadd.f32 0.0, %v3113
      %v3115 = vpop.f32.mrb[0].mxu0
      %v3116 = vpop.f32.mrb[0].mxu0
      %v3117 = vadd.f32 0.0, %v3116
      %v3118 = vpop.f32.mrb[0].mxu0
      %3119 = vdwg.mxu0
      %v3120 = vadd.f32 %v2940, %v3074
      %v3121 = vadd.f32 %v2940, %v3077
      %v3122 = vadd.f32 %v2940, %v3082
      %v3123 = vadd.f32 %v2940, %v3085
      %v3124 = vadd.f32 %v2940, %v3090
      %v3125 = vadd.f32 %v2940, %v3093
      %v3126 = vadd.f32 %v2940, %v3098
      %v3127 = vadd.f32 %v2940, %v3101
      %v3128 = vadd.f32 %v2940, %v3106
      %v3129 = vadd.f32 %v2940, %v3109
      %v3130 = vadd.f32 %v2940, %v3114
      %v3131 = vadd.f32 %v2940, %v3117
      %v3132 = vld [vmem:[#allocation3] sm:$0xf0]
      %v3133 = vld [vmem:[#allocation3 + $0x30] sm:$0xf]
      %s3134 = scalar_lea.vmem %s3, 56
      %v3135 = vld [vmem:[%s3134] sm:$0xf]
      %v3136 = vld [vmem:[%s3134 + $0x4] sm:$0xf]
      %v3144 = vrot.slane %v3132, 4
      %v3145 = vrot.slane %v2943, 4
      %v3146 = vsel %vm767, %v3144, %v3145
      %v3147 = vrot.slane %v2944, 4
      %v3148 = vsel %vm767, %v3145, %v3147
      %v3149 = vrot.slane %v2945, 4
      %v3150 = vsel %vm767, %v3147, %v3149
      %v3151 = vrot.slane %v2946, 4
      %v3152 = vsel %vm767, %v3149, %v3151
      %v3153 = vrot.slane %v2947, 4
      %v3154 = vsel %vm767, %v3151, %v3153
      %v3155 = vrot.slane %v3133, 4
      %v3156 = vsel %vm767, %v3153, %v3155
      %v3159 = vunpack.c.l.b16 %v3135
      %v3160 = vunpack.c.l.b16 %v3136
      %v3161 = vpack.c.b16 %v3160, %v3159
      %v3164 = vsel %vm447, %v3146, 0
      %v3167 = vsel %vm447, %v3148, 0
      %v3170 = vsel %vm447, %v3150, 0
      %v3173 = vsel %vm447, %v3152, 0
      %v3176 = vsel %vm447, %v3154, 0
      %v3179 = vsel %vm447, %v3156, 0
      %3181 = vmatprep.subr.bf16.mxu0 0
      %3182 = vmatpush1.bf16.msra.mxu0 %v3161
      %3183 = vmatprep.subr.bf16.mxu0 0
      %3184 = vmatpush1.bf16.msra.mxu0 0
      %3185 = vmatprep.subr.bf16.mxu0 0
      %3186 = vmatpush1.bf16.msra.mxu0 0
      %3187 = vmatprep.subr.bf16.mxu0 0
      %3188 = vmatpush1.bf16.msra.mxu0 0
      %3189 = vmatprep.subr.bf16.mxu0 0
      %3190 = vmatpush1.bf16.msra.mxu0 0
      %3191 = vmatprep.subr.bf16.mxu0 0
      %3192 = vmatpush1.bf16.msra.mxu0 0
      %3193 = vmatprep.subr.bf16.mxu0 0
      %3194 = vmatpush1.bf16.msra.mxu0 0
      %3195 = vmatprep.subr.bf16.mxu0 0
      %3196 = vmatpush1.bf16.msra.mxu0 0
      %3197 = vmatprep.subr.bf16.mxu0 0
      %3198 = vmatpush1.bf16.msra.mxu0 0
      %3199 = vmatprep.subr.bf16.mxu0 0
      %3200 = vmatpush1.bf16.msra.mxu0 0
      %3201 = vmatprep.subr.bf16.mxu0 0
      %3202 = vmatpush1.bf16.msra.mxu0 0
      %3203 = vmatprep.subr.bf16.mxu0 0
      %3204 = vmatpush1.bf16.msra.mxu0 0
      %3205 = vmatprep.subr.bf16.mxu0 0
      %3206 = vmatpush1.bf16.msra.mxu0 0
      %3207 = vmatprep.subr.bf16.mxu0 0
      %3208 = vmatpush1.bf16.msra.mxu0 0
      %3209 = vmatprep.subr.bf16.mxu0 0
      %3210 = vmatpush1.bf16.msra.mxu0 0
      %3211 = vmatprep.subr.bf16.mxu0 0
      %3212 = vmatpush1.bf16.msra.mxu0 0
      %3213 = vmatprep.mubr.bf16.mxu0 0
      %3214 = vmatmul.mubr.bf16.gmra.mrb[0].mxu0 %v3164
      %v3215 = vpop.f32.mrb[0].mxu0
      %v3216 = vadd.f32 0.0, %v3215
      %v3217 = vpop.f32.mrb[0].mxu0
      %v3218 = vpop.f32.mrb[0].mxu0
      %v3219 = vadd.f32 0.0, %v3218
      %v3220 = vpop.f32.mrb[0].mxu0
      %3221 = vmatprep.mubr.bf16.mxu0 0
      %3222 = vmatmul.mubr.bf16.gmra.mrb[0].mxu0 %v3167
      %v3223 = vpop.f32.mrb[0].mxu0
      %v3224 = vadd.f32 0.0, %v3223
      %v3225 = vpop.f32.mrb[0].mxu0
      %v3226 = vpop.f32.mrb[0].mxu0
      %v3227 = vadd.f32 0.0, %v3226
      %v3228 = vpop.f32.mrb[0].mxu0
      %3229 = vmatprep.mubr.bf16.mxu0 0
      %3230 = vmatmul.mubr.bf16.gmra.mrb[0].mxu0 %v3170
      %v3231 = vpop.f32.mrb[0].mxu0
      %v3232 = vadd.f32 0.0, %v3231
      %v3233 = vpop.f32.mrb[0].mxu0
      %v3234 = vpop.f32.mrb[0].mxu0
      %v3235 = vadd.f32 0.0, %v3234
      %v3236 = vpop.f32.mrb[0].mxu0
      %3237 = vmatprep.mubr.bf16.mxu0 0
      %3238 = vmatmul.mubr.bf16.gmra.mrb[0].mxu0 %v3173
      %v3239 = vpop.f32.mrb[0].mxu0
      %v3240 = vadd.f32 0.0, %v3239
      %v3241 = vpop.f32.mrb[0].mxu0
      %v3242 = vpop.f32.mrb[0].mxu0
      %v3243 = vadd.f32 0.0, %v3242
      %v3244 = vpop.f32.mrb[0].mxu0
      %3245 = vmatprep.mubr.bf16.mxu0 0
      %3246 = vmatmul.mubr.bf16.gmra.mrb[0].mxu0 %v3176
      %v3247 = vpop.f32.mrb[0].mxu0
      %v3248 = vadd.f32 0.0, %v3247
      %v3249 = vpop.f32.mrb[0].mxu0
      %v3250 = vpop.f32.mrb[0].mxu0
      %v3251 = vadd.f32 0.0, %v3250
      %v3252 = vpop.f32.mrb[0].mxu0
      %3253 = vmatprep.mubr.bf16.mxu0 0
      %3254 = vmatmul.mubr.bf16.gmra.mrb[0].mxu0 %v3179
      %v3255 = vpop.f32.mrb[0].mxu0
      %v3256 = vadd.f32 0.0, %v3255
      %v3257 = vpop.f32.mrb[0].mxu0
      %v3258 = vpop.f32.mrb[0].mxu0
      %v3259 = vadd.f32 0.0, %v3258
      %v3260 = vpop.f32.mrb[0].mxu0
      %3261 = vdwg.mxu0
      %v3262 = vadd.f32 %v3120, %v3216
      %v3263 = vadd.f32 %v3121, %v3219
      %v3264 = vadd.f32 %v3122, %v3224
      %v3265 = vadd.f32 %v3123, %v3227
      %v3266 = vadd.f32 %v3124, %v3232
      %v3267 = vadd.f32 %v3125, %v3235
      %v3268 = vadd.f32 %v3126, %v3240
      %v3269 = vadd.f32 %v3127, %v3243
      %v3270 = vadd.f32 %v3128, %v3248
      %v3271 = vadd.f32 %v3129, %v3251
      %v3272 = vadd.f32 %v3130, %v3256
      %v3273 = vadd.f32 %v3131, %v3259
      %v3274 = vld [vmem:[#allocation3] sm:$0xc0]
      %v3275 = vld [vmem:[#allocation3 + $0x30] sm:$0x7f]
      %s3276 = scalar_lea.vmem %s3, 64
      %v3277 = vld [vmem:[%s3276] sm:$0xf]
      %v3278 = vld [vmem:[%s3276 + $0x4] sm:$0xf]
      %vm3279 = vsmask.f32 1280
      %v3281 = vshrl.u32 %v3274, 16
      %v3283 = vrot.slane %v3281, 6
      %v3284 = vshll.u32 %v3274, 16
      %v3286 = vrot.slane %v3284, 7
      %v3287 = vor.u32 %v3283, %v3286
      %v3288 = vrot.slane %v2962, 6
      %v3289 = vrot.slane %v2965, 7
      %v3290 = vor.u32 %v3288, %v3289
      %v3291 = vsel %vm3279, %v3287, %v3290
      %v3292 = vrot.slane %v2971, 6
      %v3293 = vrot.slane %v2974, 7
      %v3294 = vor.u32 %v3292, %v3293
      %v3295 = vsel %vm3279, %v3290, %v3294
      %v3296 = vrot.slane %v2980, 6
      %v3297 = vrot.slane %v2983, 7
      %v3298 = vor.u32 %v3296, %v3297
      %v3299 = vsel %vm3279, %v3294, %v3298
      %v3300 = vrot.slane %v2989, 6
      %v3301 = vrot.slane %v2992, 7
      %v3302 = vor.u32 %v3300, %v3301
      %v3303 = vsel %vm3279, %v3298, %v3302
      %v3304 = vrot.slane %v2998, 6
      %v3305 = vrot.slane %v3001, 7
      %v3306 = vor.u32 %v3304, %v3305
      %v3307 = vsel %vm3279, %v3302, %v3306
      %v3309 = vshrl.u32 %v3275, 16
      %v3311 = vrot.slane %v3309, 6
      %v3312 = vshll.u32 %v3275, 16
      %v3314 = vrot.slane %v3312, 7
      %v3315 = vor.u32 %v3311, %v3314
      %v3316 = vsel %vm3279, %v3306, %v3315
      %v3319 = vunpack.c.l.b16 %v3277
      %v3320 = vunpack.c.l.b16 %v3278
      %v3321 = vpack.c.b16 %v3320, %v3319
      %v3324 = vsel %vm447, %v3291, 0
      %v3327 = vsel %vm447, %v3295, 0
      %v3330 = vsel %vm447, %v3299, 0
      %v3333 = vsel %vm447, %v3303, 0
      %v3336 = vsel %vm447, %v3307, 0
      %v3339 = vsel %vm447, %v3316, 0
      %3341 = vmatprep.subr.bf16.mxu0 0
      %3342 = vmatpush1.bf16.msra.mxu0 %v3321
      %3343 = vmatprep.subr.bf16.mxu0 0
      %3344 = vmatpush1.bf16.msra.mxu0 0
      %3345 = vmatprep.subr.bf16.mxu0 0
      %3346 = vmatpush1.bf16.msra.mxu0 0
      %3347 = vmatprep.subr.bf16.mxu0 0
      %3348 = vmatpush1.bf16.msra.mxu0 0
      %3349 = vmatprep.subr.bf16.mxu0 0
      %3350 = vmatpush1.bf16.msra.mxu0 0
      %3351 = vmatprep.subr.bf16.mxu0 0
      %3352 = vmatpush1.bf16.msra.mxu0 0
      %3353 = vmatprep.subr.bf16.mxu0 0
      %3354 = vmatpush1.bf16.msra.mxu0 0
      %3355 = vmatprep.subr.bf16.mxu0 0
      %3356 = vmatpush1.bf16.msra.mxu0 0
      %3357 = vmatprep.subr.bf16.mxu0 0
      %3358 = vmatpush1.bf16.msra.mxu0 0
      %3359 = vmatprep.subr.bf16.mxu0 0
      %3360 = vmatpush1.bf16.msra.mxu0 0
      %3361 = vmatprep.subr.bf16.mxu0 0
      %3362 = vmatpush1.bf16.msra.mxu0 0
      %3363 = vmatprep.subr.bf16.mxu0 0
      %3364 = vmatpush1.bf16.msra.mxu0 0
      %3365 = vmatprep.subr.bf16.mxu0 0
      %3366 = vmatpush1.bf16.msra.mxu0 0
      %3367 = vmatprep.subr.bf16.mxu0 0
      %3368 = vmatpush1.bf16.msra.mxu0 0
      %3369 = vmatprep.subr.bf16.mxu0 0
      %3370 = vmatpush1.bf16.msra.mxu0 0
      %3371 = vmatprep.subr.bf16.mxu0 0
      %3372 = vmatpush1.bf16.msra.mxu0 0
      %3373 = vmatprep.mubr.bf16.mxu0 0
      %3374 = vmatmul.mubr.bf16.gmra.mrb[0].mxu0 %v3324
      %v3375 = vpop.f32.mrb[0].mxu0
      %v3376 = vadd.f32 0.0, %v3375
      %v3377 = vpop.f32.mrb[0].mxu0
      %v3378 = vpop.f32.mrb[0].mxu0
      %v3379 = vadd.f32 0.0, %v3378
      %v3380 = vpop.f32.mrb[0].mxu0
      %3381 = vmatprep.mubr.bf16.mxu0 0
      %3382 = vmatmul.mubr.bf16.gmra.mrb[0].mxu0 %v3327
      %v3383 = vpop.f32.mrb[0].mxu0
      %v3384 = vadd.f32 0.0, %v3383
      %v3385 = vpop.f32.mrb[0].mxu0
      %v3386 = vpop.f32.mrb[0].mxu0
      %v3387 = vadd.f32 0.0, %v3386
      %v3388 = vpop.f32.mrb[0].mxu0
      %3389 = vmatprep.mubr.bf16.mxu0 0
      %3390 = vmatmul.mubr.bf16.gmra.mrb[0].mxu0 %v3330
      %v3391 = vpop.f32.mrb[0].mxu0
      %v3392 = vadd.f32 0.0, %v3391
      %v3393 = vpop.f32.mrb[0].mxu0
      %v3394 = vpop.f32.mrb[0].mxu0
      %v3395 = vadd.f32 0.0, %v3394
      %v3396 = vpop.f32.mrb[0].mxu0
      %3397 = vmatprep.mubr.bf16.mxu0 0
      %3398 = vmatmul.mubr.bf16.gmra.mrb[0].mxu0 %v3333
      %v3399 = vpop.f32.mrb[0].mxu0
      %v3400 = vadd.f32 0.0, %v3399
      %v3401 = vpop.f32.mrb[0].mxu0
      %v3402 = vpop.f32.mrb[0].mxu0
      %v3403 = vadd.f32 0.0, %v3402
      %v3404 = vpop.f32.mrb[0].mxu0
      %3405 = vmatprep.mubr.bf16.mxu0 0
      %3406 = vmatmul.mubr.bf16.gmra.mrb[0].mxu0 %v3336
      %v3407 = vpop.f32.mrb[0].mxu0
      %v3408 = vadd.f32 0.0, %v3407
      %v3409 = vpop.f32.mrb[0].mxu0
      %v3410 = vpop.f32.mrb[0].mxu0
      %v3411 = vadd.f32 0.0, %v3410
      %v3412 = vpop.f32.mrb[0].mxu0
      %3413 = vmatprep.mubr.bf16.mxu0 0
      %3414 = vmatmul.mubr.bf16.gmra.mrb[0].mxu0 %v3339
      %v3415 = vpop.f32.mrb[0].mxu0
      %v3416 = vadd.f32 0.0, %v3415
      %v3417 = vpop.f32.mrb[0].mxu0
      %v3418 = vpop.f32.mrb[0].mxu0
      %v3419 = vadd.f32 0.0, %v3418
      %v3420 = vpop.f32.mrb[0].mxu0
      %3421 = vdwg.mxu0
      %v3422 = vadd.f32 %v3262, %v3376
      %v3423 = vadd.f32 %v3263, %v3379
      %v3424 = vadd.f32 %v3264, %v3384
      %v3425 = vadd.f32 %v3265, %v3387
      %v3426 = vadd.f32 %v3266, %v3392
      %v3427 = vadd.f32 %v3267, %v3395
      %v3428 = vadd.f32 %v3268, %v3400
      %v3429 = vadd.f32 %v3269, %v3403
      %v3430 = vadd.f32 %v3270, %v3408
      %v3431 = vadd.f32 %v3271, %v3411
      %v3432 = vadd.f32 %v3272, %v3416
      %v3433 = vadd.f32 %v3273, %v3419
      %vm3434 = vcmp.ge.f32.partialorder %v3422, 0.0
      %vm3435 = vcmp.ge.f32.partialorder %v3423, 0.0
      %vm3436 = vcmp.ge.f32.partialorder %v3424, 0.0
      %vm3437 = vcmp.ge.f32.partialorder %v3425, 0.0
      %vm3438 = vcmp.ge.f32.partialorder %v3426, 0.0
      %vm3439 = vcmp.ge.f32.partialorder %v3427, 0.0
      %vm3440 = vcmp.ge.f32.partialorder %v3428, 0.0
      %vm3441 = vcmp.ge.f32.partialorder %v3429, 0.0
      %vm3442 = vcmp.ge.f32.partialorder %v3430, 0.0
      %vm3443 = vcmp.ge.f32.partialorder %v3431, 0.0
      %vm3444 = vcmp.ge.f32.partialorder %v3432, 0.0
      %vm3445 = vcmp.ge.f32.partialorder %v3433, 0.0
      %v3446 = vmul.f32 %v3422, 0.1
      %v3447 = vmul.f32 %v3423, 0.1
      %v3448 = vmul.f32 %v3424, 0.1
      %v3449 = vmul.f32 %v3425, 0.1
      %v3450 = vmul.f32 %v3426, 0.1
      %v3451 = vmul.f32 %v3427, 0.1
      %v3452 = vmul.f32 %v3428, 0.1
      %v3453 = vmul.f32 %v3429, 0.1
      %v3454 = vmul.f32 %v3430, 0.1
      %v3455 = vmul.f32 %v3431, 0.1
      %v3456 = vmul.f32 %v3432, 0.1
      %v3457 = vmul.f32 %v3433, 0.1
      %v3458 = vsel %vm3434, %v3422, %v3446
      %v3459 = vsel %vm3435, %v3423, %v3447
      %v3460 = vsel %vm3436, %v3424, %v3448
      %v3461 = vsel %vm3437, %v3425, %v3449
      %v3462 = vsel %vm3438, %v3426, %v3450
      %v3463 = vsel %vm3439, %v3427, %v3451
      %v3464 = vsel %vm3440, %v3428, %v3452
      %v3465 = vsel %vm3441, %v3429, %v3453
      %v3466 = vsel %vm3442, %v3430, %v3454
      %v3467 = vsel %vm3443, %v3431, %v3455
      %v3468 = vsel %vm3444, %v3432, %v3456
      %v3469 = vsel %vm3445, %v3433, %v3457
      %v3470 = vpack.c.bf16 %v3459, %v3458
      %v3471 = vpack.c.bf16 %v3461, %v3460
      %v3472 = vpack.c.bf16 %v3463, %v3462
      %v3473 = vpack.c.bf16 %v3465, %v3464
      %v3474 = vpack.c.bf16 %v3467, %v3466
      %v3475 = vpack.c.bf16 %v3469, %v3468
      %v3482 = vrot.slane %v3470, 4
      %v3483 = vrot.slane %v3471, 4
      %v3484 = vsel %vm767, %v3482, %v3483
      %v3485 = vrot.slane %v3472, 4
      %v3486 = vsel %vm767, %v3483, %v3485
      %v3487 = vrot.slane %v3473, 4
      %v3488 = vsel %vm767, %v3485, %v3487
      %v3489 = vrot.slane %v3474, 4
      %v3490 = vsel %vm767, %v3487, %v3489
      %v3491 = vrot.slane %v3475, 4
      %v3492 = vsel %vm767, %v3489, %v3491
      %3500 = vst.msk [vmem:[#allocation4] sm:$0xf0] %vm488, %v3482
      %3501 = vst.msk [vmem:[#allocation4 + $0x8] sm:$0xff] %vm447, %v3484
      %3502 = vst.msk [vmem:[#allocation4 + $0x10] sm:$0xff] %vm447, %v3486
      %3503 = vst.msk [vmem:[#allocation4 + $0x18] sm:$0xff] %vm447, %v3488
      %3504 = vst.msk [vmem:[#allocation4 + $0x20] sm:$0xff] %vm447, %v3490
      %3505 = vst.msk [vmem:[#allocation4 + $0x28] sm:$0xff] %vm447, %v3492
      %3506 = vst.msk [vmem:[#allocation4 + $0x30] sm:$0xf] %vm486, %v3491
      // Predicated region
      $region73: #{tpu_custom_call.1} parent=47 // pred_check
        %p3507 = pneg %p1130
      $region74: #{tpu_custom_call.1} parent=47 // pred_check_branch
        %3509 = sbr.rel (%p3507) target = $region76
      $region75: #{tpu_custom_call.1} parent=47 // pred_region
        %3510 = vst.msk [vmem:[#allocation4] sm:$0xf0] %vm488, 0
        %3511 = vst.msk [vmem:[#allocation4 + $0x8] sm:$0xf] %vm486, 0
        %3512 = vst.msk [vmem:[#allocation4 + $0x28] sm:$0xf0] %vm488, 0
        %3513 = vst.msk [vmem:[#allocation4 + $0x30] sm:$0xf] %vm486, 0
      $region76: #{tpu_custom_call.1} parent=47 // pred_fallthru
        _
      %s3514 = scalar_lea.vmem %s6, 2
      %v3515 = vld [vmem:[%s3514] sm:$0x1]
      %v3517 = vlaneseq
      %v3518 = vshrl.u32 %v3517, 7
      %v3519 = vsub.s32 0, %v3518
      %v3520 = vrot.slane %v3515, %v3519
      %v3522 = vld [vmem:[#allocation4] sm:$0xf8]
      %v3523 = vld [vmem:[#allocation4 + $0x8] sm:$0xff]
      %v3524 = vld [vmem:[#allocation4 + $0x10] sm:$0xff]
      %v3525 = vld [vmem:[#allocation4 + $0x18] sm:$0xff]
      %v3526 = vld [vmem:[#allocation4 + $0x20] sm:$0xff]
      %v3527 = vld [vmem:[#allocation4 + $0x28] sm:$0xff]
      %v3528 = vld [vmem:[#allocation4 + $0x30] sm:$0xf]
      %s3529 = scalar_lea.vmem %s5, 48
      %v3530 = vld [vmem:[%s3529] sm:$0xf]
      %v3531 = vld [vmem:[%s3529 + $0x4] sm:$0xf]
      %v3533 = vshrl.u32 %v3522, 16
      %v3535 = vrot.slane %v3533, 3
      %v3536 = vshll.u32 %v3522, 16
      %v3538 = vrot.slane %v3536, 4
      %v3539 = vor.u32 %v3535, %v3538
      %v3541 = vshrl.u32 %v3523, 16
      %v3543 = vrot.slane %v3541, 3
      %v3544 = vshll.u32 %v3523, 16
      %v3546 = vrot.slane %v3544, 4
      %v3547 = vor.u32 %v3543, %v3546
      %v3548 = vsel %vm576, %v3539, %v3547
      %v3550 = vshrl.u32 %v3524, 16
      %v3552 = vrot.slane %v3550, 3
      %v3553 = vshll.u32 %v3524, 16
      %v3555 = vrot.slane %v3553, 4
      %v3556 = vor.u32 %v3552, %v3555
      %v3557 = vsel %vm576, %v3547, %v3556
      %v3559 = vshrl.u32 %v3525, 16
      %v3561 = vrot.slane %v3559, 3
      %v3562 = vshll.u32 %v3525, 16
      %v3564 = vrot.slane %v3562, 4
      %v3565 = vor.u32 %v3561, %v3564
      %v3566 = vsel %vm576, %v3556, %v3565
      %v3568 = vshrl.u32 %v3526, 16
      %v3570 = vrot.slane %v3568, 3
      %v3571 = vshll.u32 %v3526, 16
      %v3573 = vrot.slane %v3571, 4
      %v3574 = vor.u32 %v3570, %v3573
      %v3575 = vsel %vm576, %v3565, %v3574
      %v3577 = vshrl.u32 %v3527, 16
      %v3579 = vrot.slane %v3577, 3
      %v3580 = vshll.u32 %v3527, 16
      %v3582 = vrot.slane %v3580, 4
      %v3583 = vor.u32 %v3579, %v3582
      %v3584 = vsel %vm576, %v3574, %v3583
      %v3586 = vshrl.u32 %v3528, 16
      %v3588 = vrot.slane %v3586, 3
      %v3589 = vshll.u32 %v3528, 16
      %v3591 = vrot.slane %v3589, 4
      %v3592 = vor.u32 %v3588, %v3591
      %v3593 = vsel %vm576, %v3583, %v3592
      %v3596 = vunpack.c.l.b16 %v3530
      %v3597 = vunpack.c.l.b16 %v3531
      %v3598 = vpack.c.b16 %v3597, %v3596
      %v3601 = vsel %vm447, %v3548, 0
      %v3604 = vsel %vm447, %v3557, 0
      %v3607 = vsel %vm447, %v3566, 0
      %v3610 = vsel %vm447, %v3575, 0
      %v3613 = vsel %vm447, %v3584, 0
      %v3616 = vsel %vm447, %v3593, 0
      %3618 = vmatprep.subr.bf16.mxu0 0
      %3619 = vmatpush1.bf16.msra.mxu0 %v3598
      %3620 = vmatprep.subr.bf16.mxu0 0
      %3621 = vmatpush1.bf16.msra.mxu0 0
      %3622 = vmatprep.subr.bf16.mxu0 0
      %3623 = vmatpush1.bf16.msra.mxu0 0
      %3624 = vmatprep.subr.bf16.mxu0 0
      %3625 = vmatpush1.bf16.msra.mxu0 0
      %3626 = vmatprep.subr.bf16.mxu0 0
      %3627 = vmatpush1.bf16.msra.mxu0 0
      %3628 = vmatprep.subr.bf16.mxu0 0
      %3629 = vmatpush1.bf16.msra.mxu0 0
      %3630 = vmatprep.subr.bf16.mxu0 0
      %3631 = vmatpush1.bf16.msra.mxu0 0
      %3632 = vmatprep.subr.bf16.mxu0 0
      %3633 = vmatpush1.bf16.msra.mxu0 0
      %3634 = vmatprep.subr.bf16.mxu0 0
      %3635 = vmatpush1.bf16.msra.mxu0 0
      %3636 = vmatprep.subr.bf16.mxu0 0
      %3637 = vmatpush1.bf16.msra.mxu0 0
      %3638 = vmatprep.subr.bf16.mxu0 0
      %3639 = vmatpush1.bf16.msra.mxu0 0
      %3640 = vmatprep.subr.bf16.mxu0 0
      %3641 = vmatpush1.bf16.msra.mxu0 0
      %3642 = vmatprep.subr.bf16.mxu0 0
      %3643 = vmatpush1.bf16.msra.mxu0 0
      %3644 = vmatprep.subr.bf16.mxu0 0
      %3645 = vmatpush1.bf16.msra.mxu0 0
      %3646 = vmatprep.subr.bf16.mxu0 0
      %3647 = vmatpush1.bf16.msra.mxu0 0
      %3648 = vmatprep.subr.bf16.mxu0 0
      %3649 = vmatpush1.bf16.msra.mxu0 0
      %3650 = vmatprep.mubr.bf16.mxu0 0
      %3651 = vmatmul.mubr.bf16.gmra.mrb[0].mxu0 %v3601
      %v3652 = vpop.f32.mrb[0].mxu0
      %v3653 = vadd.f32 0.0, %v3652
      %v3654 = vpop.f32.mrb[0].mxu0
      %v3655 = vpop.f32.mrb[0].mxu0
      %v3656 = vadd.f32 0.0, %v3655
      %v3657 = vpop.f32.mrb[0].mxu0
      %3658 = vmatprep.mubr.bf16.mxu0 0
      %3659 = vmatmul.mubr.bf16.gmra.mrb[0].mxu0 %v3604
      %v3660 = vpop.f32.mrb[0].mxu0
      %v3661 = vadd.f32 0.0, %v3660
      %v3662 = vpop.f32.mrb[0].mxu0
      %v3663 = vpop.f32.mrb[0].mxu0
      %v3664 = vadd.f32 0.0, %v3663
      %v3665 = vpop.f32.mrb[0].mxu0
      %3666 = vmatprep.mubr.bf16.mxu0 0
      %3667 = vmatmul.mubr.bf16.gmra.mrb[0].mxu0 %v3607
      %v3668 = vpop.f32.mrb[0].mxu0
      %v3669 = vadd.f32 0.0, %v3668
      %v3670 = vpop.f32.mrb[0].mxu0
      %v3671 = vpop.f32.mrb[0].mxu0
      %v3672 = vadd.f32 0.0, %v3671
      %v3673 = vpop.f32.mrb[0].mxu0
      %3674 = vmatprep.mubr.bf16.mxu0 0
      %3675 = vmatmul.mubr.bf16.gmra.mrb[0].mxu0 %v3610
      %v3676 = vpop.f32.mrb[0].mxu0
      %v3677 = vadd.f32 0.0, %v3676
      %v3678 = vpop.f32.mrb[0].mxu0
      %v3679 = vpop.f32.mrb[0].mxu0
      %v3680 = vadd.f32 0.0, %v3679
      %v3681 = vpop.f32.mrb[0].mxu0
      %3682 = vmatprep.mubr.bf16.mxu0 0
      %3683 = vmatmul.mubr.bf16.gmra.mrb[0].mxu0 %v3613
      %v3684 = vpop.f32.mrb[0].mxu0
      %v3685 = vadd.f32 0.0, %v3684
      %v3686 = vpop.f32.mrb[0].mxu0
      %v3687 = vpop.f32.mrb[0].mxu0
      %v3688 = vadd.f32 0.0, %v3687
      %v3689 = vpop.f32.mrb[0].mxu0
      %3690 = vmatprep.mubr.bf16.mxu0 0
      %3691 = vmatmul.mubr.bf16.gmra.mrb[0].mxu0 %v3616
      %v3692 = vpop.f32.mrb[0].mxu0
      %v3693 = vadd.f32 0.0, %v3692
      %v3694 = vpop.f32.mrb[0].mxu0
      %v3695 = vpop.f32.mrb[0].mxu0
      %v3696 = vadd.f32 0.0, %v3695
      %v3697 = vpop.f32.mrb[0].mxu0
      %3698 = vdwg.mxu0
      %v3699 = vadd.f32 %v3520, %v3653
      %v3700 = vadd.f32 %v3520, %v3656
      %v3701 = vadd.f32 %v3520, %v3661
      %v3702 = vadd.f32 %v3520, %v3664
      %v3703 = vadd.f32 %v3520, %v3669
      %v3704 = vadd.f32 %v3520, %v3672
      %v3705 = vadd.f32 %v3520, %v3677
      %v3706 = vadd.f32 %v3520, %v3680
      %v3707 = vadd.f32 %v3520, %v3685
      %v3708 = vadd.f32 %v3520, %v3688
      %v3709 = vadd.f32 %v3520, %v3693
      %v3710 = vadd.f32 %v3520, %v3696
      %v3711 = vld [vmem:[#allocation4] sm:$0xf0]
      %s3712 = scalar_lea.vmem %s5, 56
      %v3713 = vld [vmem:[%s3712] sm:$0xf]
      %v3714 = vld [vmem:[%s3712 + $0x4] sm:$0xf]
      %v3722 = vrot.slane %v3711, 4
      %v3723 = vrot.slane %v3523, 4
      %v3724 = vsel %vm767, %v3722, %v3723
      %v3725 = vrot.slane %v3524, 4
      %v3726 = vsel %vm767, %v3723, %v3725
      %v3727 = vrot.slane %v3525, 4
      %v3728 = vsel %vm767, %v3725, %v3727
      %v3729 = vrot.slane %v3526, 4
      %v3730 = vsel %vm767, %v3727, %v3729
      %v3731 = vrot.slane %v3527, 4
      %v3732 = vsel %vm767, %v3729, %v3731
      %v3733 = vrot.slane %v3528, 4
      %v3734 = vsel %vm767, %v3731, %v3733
      %v3737 = vunpack.c.l.b16 %v3713
      %v3738 = vunpack.c.l.b16 %v3714
      %v3739 = vpack.c.b16 %v3738, %v3737
      %v3742 = vsel %vm447, %v3724, 0
      %v3745 = vsel %vm447, %v3726, 0
      %v3748 = vsel %vm447, %v3728, 0
      %v3751 = vsel %vm447, %v3730, 0
      %v3754 = vsel %vm447, %v3732, 0
      %v3757 = vsel %vm447, %v3734, 0
      %3759 = vmatprep.subr.bf16.mxu0 0
      %3760 = vmatpush1.bf16.msra.mxu0 %v3739
      %3761 = vmatprep.subr.bf16.mxu0 0
      %3762 = vmatpush1.bf16.msra.mxu0 0
      %3763 = vmatprep.subr.bf16.mxu0 0
      %3764 = vmatpush1.bf16.msra.mxu0 0
      %3765 = vmatprep.subr.bf16.mxu0 0
      %3766 = vmatpush1.bf16.msra.mxu0 0
      %3767 = vmatprep.subr.bf16.mxu0 0
      %3768 = vmatpush1.bf16.msra.mxu0 0
      %3769 = vmatprep.subr.bf16.mxu0 0
      %3770 = vmatpush1.bf16.msra.mxu0 0
      %3771 = vmatprep.subr.bf16.mxu0 0
      %3772 = vmatpush1.bf16.msra.mxu0 0
      %3773 = vmatprep.subr.bf16.mxu0 0
      %3774 = vmatpush1.bf16.msra.mxu0 0
      %3775 = vmatprep.subr.bf16.mxu0 0
      %3776 = vmatpush1.bf16.msra.mxu0 0
      %3777 = vmatprep.subr.bf16.mxu0 0
      %3778 = vmatpush1.bf16.msra.mxu0 0
      %3779 = vmatprep.subr.bf16.mxu0 0
      %3780 = vmatpush1.bf16.msra.mxu0 0
      %3781 = vmatprep.subr.bf16.mxu0 0
      %3782 = vmatpush1.bf16.msra.mxu0 0
      %3783 = vmatprep.subr.bf16.mxu0 0
      %3784 = vmatpush1.bf16.msra.mxu0 0
      %3785 = vmatprep.subr.bf16.mxu0 0
      %3786 = vmatpush1.bf16.msra.mxu0 0
      %3787 = vmatprep.subr.bf16.mxu0 0
      %3788 = vmatpush1.bf16.msra.mxu0 0
      %3789 = vmatprep.subr.bf16.mxu0 0
      %3790 = vmatpush1.bf16.msra.mxu0 0
      %3791 = vmatprep.mubr.bf16.mxu0 0
      %3792 = vmatmul.mubr.bf16.gmra.mrb[0].mxu0 %v3742
      %v3793 = vpop.f32.mrb[0].mxu0
      %v3794 = vadd.f32 0.0, %v3793
      %v3795 = vpop.f32.mrb[0].mxu0
      %v3796 = vpop.f32.mrb[0].mxu0
      %v3797 = vadd.f32 0.0, %v3796
      %v3798 = vpop.f32.mrb[0].mxu0
      %3799 = vmatprep.mubr.bf16.mxu0 0
      %3800 = vmatmul.mubr.bf16.gmra.mrb[0].mxu0 %v3745
      %v3801 = vpop.f32.mrb[0].mxu0
      %v3802 = vadd.f32 0.0, %v3801
      %v3803 = vpop.f32.mrb[0].mxu0
      %v3804 = vpop.f32.mrb[0].mxu0
      %v3805 = vadd.f32 0.0, %v3804
      %v3806 = vpop.f32.mrb[0].mxu0
      %3807 = vmatprep.mubr.bf16.mxu0 0
      %3808 = vmatmul.mubr.bf16.gmra.mrb[0].mxu0 %v3748
      %v3809 = vpop.f32.mrb[0].mxu0
      %v3810 = vadd.f32 0.0, %v3809
      %v3811 = vpop.f32.mrb[0].mxu0
      %v3812 = vpop.f32.mrb[0].mxu0
      %v3813 = vadd.f32 0.0, %v3812
      %v3814 = vpop.f32.mrb[0].mxu0
      %3815 = vmatprep.mubr.bf16.mxu0 0
      %3816 = vmatmul.mubr.bf16.gmra.mrb[0].mxu0 %v3751
      %v3817 = vpop.f32.mrb[0].mxu0
      %v3818 = vadd.f32 0.0, %v3817
      %v3819 = vpop.f32.mrb[0].mxu0
      %v3820 = vpop.f32.mrb[0].mxu0
      %v3821 = vadd.f32 0.0, %v3820
      %v3822 = vpop.f32.mrb[0].mxu0
      %3823 = vmatprep.mubr.bf16.mxu0 0
      %3824 = vmatmul.mubr.bf16.gmra.mrb[0].mxu0 %v3754
      %v3825 = vpop.f32.mrb[0].mxu0
      %v3826 = vadd.f32 0.0, %v3825
      %v3827 = vpop.f32.mrb[0].mxu0
      %v3828 = vpop.f32.mrb[0].mxu0
      %v3829 = vadd.f32 0.0, %v3828
      %v3830 = vpop.f32.mrb[0].mxu0
      %3831 = vmatprep.mubr.bf16.mxu0 0
      %3832 = vmatmul.mubr.bf16.gmra.mrb[0].mxu0 %v3757
      %v3833 = vpop.f32.mrb[0].mxu0
      %v3834 = vadd.f32 0.0, %v3833
      %v3835 = vpop.f32.mrb[0].mxu0
      %v3836 = vpop.f32.mrb[0].mxu0
      %v3837 = vadd.f32 0.0, %v3836
      %v3838 = vpop.f32.mrb[0].mxu0
      %3839 = vdwg.mxu0
      %v3840 = vadd.f32 %v3699, %v3794
      %v3841 = vadd.f32 %v3700, %v3797
      %v3842 = vadd.f32 %v3701, %v3802
      %v3843 = vadd.f32 %v3702, %v3805
      %v3844 = vadd.f32 %v3703, %v3810
      %v3845 = vadd.f32 %v3704, %v3813
      %v3846 = vadd.f32 %v3705, %v3818
      %v3847 = vadd.f32 %v3706, %v3821
      %v3848 = vadd.f32 %v3707, %v3826
      %v3849 = vadd.f32 %v3708, %v3829
      %v3850 = vadd.f32 %v3709, %v3834
      %v3851 = vadd.f32 %v3710, %v3837
      %v3852 = vld [vmem:[#allocation4 + $0x30] sm:$0x1f]
      %s3853 = scalar_lea.vmem %s5, 64
      %v3854 = vld [vmem:[%s3853] sm:$0xf]
      %v3855 = vld [vmem:[%s3853 + $0x4] sm:$0xf]
      %v3857 = vshrl.u32 %v3711, 16
      %v3859 = vrot.slane %v3857, 4
      %v3860 = vshll.u32 %v3711, 16
      %v3862 = vrot.slane %v3860, 5
      %v3863 = vor.u32 %v3859, %v3862
      %v3864 = vrot.slane %v3541, 4
      %v3865 = vrot.slane %v3544, 5
      %v3866 = vor.u32 %v3864, %v3865
      %v3867 = vsel %vm902, %v3863, %v3866
      %v3868 = vrot.slane %v3550, 4
      %v3869 = vrot.slane %v3553, 5
      %v3870 = vor.u32 %v3868, %v3869
      %v3871 = vsel %vm902, %v3866, %v3870
      %v3872 = vrot.slane %v3559, 4
      %v3873 = vrot.slane %v3562, 5
      %v3874 = vor.u32 %v3872, %v3873
      %v3875 = vsel %vm902, %v3870, %v3874
      %v3876 = vrot.slane %v3568, 4
      %v3877 = vrot.slane %v3571, 5
      %v3878 = vor.u32 %v3876, %v3877
      %v3879 = vsel %vm902, %v3874, %v3878
      %v3880 = vrot.slane %v3577, 4
      %v3881 = vrot.slane %v3580, 5
      %v3882 = vor.u32 %v3880, %v3881
      %v3883 = vsel %vm902, %v3878, %v3882
      %v3885 = vshrl.u32 %v3852, 16
      %v3887 = vrot.slane %v3885, 4
      %v3888 = vshll.u32 %v3852, 16
      %v3890 = vrot.slane %v3888, 5
      %v3891 = vor.u32 %v3887, %v3890
      %v3892 = vsel %vm902, %v3882, %v3891
      %v3895 = vunpack.c.l.b16 %v3854
      %v3896 = vunpack.c.l.b16 %v3855
      %v3897 = vpack.c.b16 %v3896, %v3895
      %v3900 = vsel %vm447, %v3867, 0
      %v3903 = vsel %vm447, %v3871, 0
      %v3906 = vsel %vm447, %v3875, 0
      %v3909 = vsel %vm447, %v3879, 0
      %v3912 = vsel %vm447, %v3883, 0
      %v3915 = vsel %vm447, %v3892, 0
      %3917 = vmatprep.subr.bf16.mxu0 0
      %3918 = vmatpush1.bf16.msra.mxu0 %v3897
      %3919 = vmatprep.subr.bf16.mxu0 0
      %3920 = vmatpush1.bf16.msra.mxu0 0
      %3921 = vmatprep.subr.bf16.mxu0 0
      %3922 = vmatpush1.bf16.msra.mxu0 0
      %3923 = vmatprep.subr.bf16.mxu0 0
      %3924 = vmatpush1.bf16.msra.mxu0 0
      %3925 = vmatprep.subr.bf16.mxu0 0
      %3926 = vmatpush1.bf16.msra.mxu0 0
      %3927 = vmatprep.subr.bf16.mxu0 0
      %3928 = vmatpush1.bf16.msra.mxu0 0
      %3929 = vmatprep.subr.bf16.mxu0 0
      %3930 = vmatpush1.bf16.msra.mxu0 0
      %3931 = vmatprep.subr.bf16.mxu0 0
      %3932 = vmatpush1.bf16.msra.mxu0 0
      %3933 = vmatprep.subr.bf16.mxu0 0
      %3934 = vmatpush1.bf16.msra.mxu0 0
      %3935 = vmatprep.subr.bf16.mxu0 0
      %3936 = vmatpush1.bf16.msra.mxu0 0
      %3937 = vmatprep.subr.bf16.mxu0 0
      %3938 = vmatpush1.bf16.msra.mxu0 0
      %3939 = vmatprep.subr.bf16.mxu0 0
      %3940 = vmatpush1.bf16.msra.mxu0 0
      %3941 = vmatprep.subr.bf16.mxu0 0
      %3942 = vmatpush1.bf16.msra.mxu0 0
      %3943 = vmatprep.subr.bf16.mxu0 0
      %3944 = vmatpush1.bf16.msra.mxu0 0
      %3945 = vmatprep.subr.bf16.mxu0 0
      %3946 = vmatpush1.bf16.msra.mxu0 0
      %3947 = vmatprep.subr.bf16.mxu0 0
      %3948 = vmatpush1.bf16.msra.mxu0 0
      %3949 = vmatprep.mubr.bf16.mxu0 0
      %3950 = vmatmul.mubr.bf16.gmra.mrb[0].mxu0 %v3900
      %v3951 = vpop.f32.mrb[0].mxu0
      %v3952 = vadd.f32 0.0, %v3951
      %v3953 = vpop.f32.mrb[0].mxu0
      %v3954 = vpop.f32.mrb[0].mxu0
      %v3955 = vadd.f32 0.0, %v3954
      %v3956 = vpop.f32.mrb[0].mxu0
      %3957 = vmatprep.mubr.bf16.mxu0 0
      %3958 = vmatmul.mubr.bf16.gmra.mrb[0].mxu0 %v3903
      %v3959 = vpop.f32.mrb[0].mxu0
      %v3960 = vadd.f32 0.0, %v3959
      %v3961 = vpop.f32.mrb[0].mxu0
      %v3962 = vpop.f32.mrb[0].mxu0
      %v3963 = vadd.f32 0.0, %v3962
      %v3964 = vpop.f32.mrb[0].mxu0
      %3965 = vmatprep.mubr.bf16.mxu0 0
      %3966 = vmatmul.mubr.bf16.gmra.mrb[0].mxu0 %v3906
      %v3967 = vpop.f32.mrb[0].mxu0
      %v3968 = vadd.f32 0.0, %v3967
      %v3969 = vpop.f32.mrb[0].mxu0
      %v3970 = vpop.f32.mrb[0].mxu0
      %v3971 = vadd.f32 0.0, %v3970
      %v3972 = vpop.f32.mrb[0].mxu0
      %3973 = vmatprep.mubr.bf16.mxu0 0
      %3974 = vmatmul.mubr.bf16.gmra.mrb[0].mxu0 %v3909
      %v3975 = vpop.f32.mrb[0].mxu0
      %v3976 = vadd.f32 0.0, %v3975
      %v3977 = vpop.f32.mrb[0].mxu0
      %v3978 = vpop.f32.mrb[0].mxu0
      %v3979 = vadd.f32 0.0, %v3978
      %v3980 = vpop.f32.mrb[0].mxu0
      %3981 = vmatprep.mubr.bf16.mxu0 0
      %3982 = vmatmul.mubr.bf16.gmra.mrb[0].mxu0 %v3912
      %v3983 = vpop.f32.mrb[0].mxu0
      %v3984 = vadd.f32 0.0, %v3983
      %v3985 = vpop.f32.mrb[0].mxu0
      %v3986 = vpop.f32.mrb[0].mxu0
      %v3987 = vadd.f32 0.0, %v3986
      %v3988 = vpop.f32.mrb[0].mxu0
      %3989 = vmatprep.mubr.bf16.mxu0 0
      %3990 = vmatmul.mubr.bf16.gmra.mrb[0].mxu0 %v3915
      %v3991 = vpop.f32.mrb[0].mxu0
      %v3992 = vadd.f32 0.0, %v3991
      %v3993 = vpop.f32.mrb[0].mxu0
      %v3994 = vpop.f32.mrb[0].mxu0
      %v3995 = vadd.f32 0.0, %v3994
      %v3996 = vpop.f32.mrb[0].mxu0
      %3997 = vdwg.mxu0
      %v3998 = vadd.f32 %v3840, %v3952
      %v3999 = vadd.f32 %v3841, %v3955
      %v4000 = vadd.f32 %v3842, %v3960
      %v4001 = vadd.f32 %v3843, %v3963
      %v4002 = vadd.f32 %v3844, %v3968
      %v4003 = vadd.f32 %v3845, %v3971
      %v4004 = vadd.f32 %v3846, %v3976
      %v4005 = vadd.f32 %v3847, %v3979
      %v4006 = vadd.f32 %v3848, %v3984
      %v4007 = vadd.f32 %v3849, %v3987
      %v4008 = vadd.f32 %v3850, %v3992
      %v4009 = vadd.f32 %v3851, %v3995
      %v4010 = vld [vmem:[#allocation2 + $0x8] sm:$0xff]
      %v4011 = vld [vmem:[#allocation2 + $0x10] sm:$0xff]
      %v4012 = vld [vmem:[#allocation2 + $0x18] sm:$0xff]
      %v4013 = vld [vmem:[#allocation2 + $0x20] sm:$0xff]
      %v4014 = vld [vmem:[#allocation2 + $0x28] sm:$0xff]
      %v4015 = vld [vmem:[#allocation2 + $0x30] sm:$0xff]
      %v4016 = vld [vmem:[#allocation2 + $0x38] sm:$0xff]
      %v4017 = vld [vmem:[#allocation2 + $0x40] sm:$0xff]
      %v4018 = vld [vmem:[#allocation2 + $0x48] sm:$0xff]
      %v4019 = vld [vmem:[#allocation2 + $0x50] sm:$0xff]
      %v4020 = vld [vmem:[#allocation2 + $0x58] sm:$0xff]
      %v4021 = vld [vmem:[#allocation2 + $0x60] sm:$0xff]
      %v4022 = vadd.f32 %v4010, %v3998
      %v4023 = vadd.f32 %v4011, %v3999
      %v4024 = vadd.f32 %v4012, %v4000
      %v4025 = vadd.f32 %v4013, %v4001
      %v4026 = vadd.f32 %v4014, %v4002
      %v4027 = vadd.f32 %v4015, %v4003
      %v4028 = vadd.f32 %v4016, %v4004
      %v4029 = vadd.f32 %v4017, %v4005
      %v4030 = vadd.f32 %v4018, %v4006
      %v4031 = vadd.f32 %v4019, %v4007
      %v4032 = vadd.f32 %v4020, %v4008
      %v4033 = vadd.f32 %v4021, %v4009
      %4034 = vst.msk [vmem:[#allocation2 + $0x8] sm:$0xff] %vm447, %v4022
      %4035 = vst.msk [vmem:[#allocation2 + $0x10] sm:$0xff] %vm447, %v4023
      %4036 = vst.msk [vmem:[#allocation2 + $0x18] sm:$0xff] %vm447, %v4024
      %4037 = vst.msk [vmem:[#allocation2 + $0x20] sm:$0xff] %vm447, %v4025
      %4038 = vst.msk [vmem:[#allocation2 + $0x28] sm:$0xff] %vm447, %v4026
      %4039 = vst.msk [vmem:[#allocation2 + $0x30] sm:$0xff] %vm447, %v4027
      %4040 = vst.msk [vmem:[#allocation2 + $0x38] sm:$0xff] %vm447, %v4028
      %4041 = vst.msk [vmem:[#allocation2 + $0x40] sm:$0xff] %vm447, %v4029
      %4042 = vst.msk [vmem:[#allocation2 + $0x48] sm:$0xff] %vm447, %v4030
      %4043 = vst.msk [vmem:[#allocation2 + $0x50] sm:$0xff] %vm447, %v4031
      %4044 = vst.msk [vmem:[#allocation2 + $0x58] sm:$0xff] %vm447, %v4032
      %4045 = vst.msk [vmem:[#allocation2 + $0x60] sm:$0xff] %vm447, %v4033
      // Predicated region
      $region77: #{tpu_custom_call.1} parent=47 // pred_check
        %p4046 = pneg %p1130
      $region78: #{tpu_custom_call.1} parent=47 // pred_check_branch
        %4048 = sbr.rel (%p4046) target = $region80
      $region79: #{tpu_custom_call.1} parent=47 // pred_region
        %4049 = vst.msk [vmem:[#allocation2 + $0x8] sm:$0xff] %vm447, 0.0
        %4050 = vst.msk [vmem:[#allocation2 + $0x10] sm:$0xff] %vm447, 0.0
        %4051 = vst.msk [vmem:[#allocation2 + $0x58] sm:$0xff] %vm447, 0.0
        %4052 = vst.msk [vmem:[#allocation2 + $0x60] sm:$0xff] %vm447, 0.0
      $region80: #{tpu_custom_call.1} parent=47 // pred_fallthru
        _
      %v4053 = vld [vmem:[#allocation2 + $0x18] sm:$0xff]
      %v4054 = vld [vmem:[#allocation2 + $0x20] sm:$0xff]
      %v4055 = vld [vmem:[#allocation2 + $0x28] sm:$0xff]
      %v4056 = vld [vmem:[#allocation2 + $0x30] sm:$0xff]
      %v4057 = vld [vmem:[#allocation2 + $0x38] sm:$0xff]
      %v4058 = vld [vmem:[#allocation2 + $0x40] sm:$0xff]
      %v4059 = vld [vmem:[#allocation2 + $0x48] sm:$0xff]
      %v4060 = vld [vmem:[#allocation2 + $0x50] sm:$0xff]
      %4061 = vst.msk [vmem:[%s444] sm:$0xff] %vm447, %v4053
      %4062 = vst.msk [vmem:[%s444 + $0x8] sm:$0xff] %vm447, %v4054
      %4063 = vst.msk [vmem:[%s444 + $0x10] sm:$0xff] %vm447, %v4055
      %4064 = vst.msk [vmem:[%s444 + $0x18] sm:$0xff] %vm447, %v4056
      %4065 = vst.msk [vmem:[%s444 + $0x20] sm:$0xff] %vm447, %v4057
      %4066 = vst.msk [vmem:[%s444 + $0x28] sm:$0xff] %vm447, %v4058
      %4067 = vst.msk [vmem:[%s444 + $0x30] sm:$0xff] %vm447, %v4059
      %4068 = vst.msk [vmem:[%s444 + $0x38] sm:$0xff] %vm447, %v4060
      %s4069 = smul.u32 8, %s23
      %p4070 = scmp.lt.s32.totalorder %s22, 1
      %s4071 = scalar_select %p4070, %s22, 1
      %p4072 = scmp.lt.s32.totalorder %s4069, 7
      %s4073 = scalar_select %p4072, %s4069, 7
      %s4074 = smul.addr %s4071, 8
      %s4075 = sadd.s32 %s4073, %s4074
      %s4076 = smul.addr %s4075, 8
      %s4077 = scalar_lea.vmem %s7, %s4076
      // Predicated region
      $region81: #{tpu_custom_call.1} parent=47 // pred_check
        %p4078 = pneg %p234
      $region82: #{tpu_custom_call.1} parent=47 // pred_check_branch
        %4080 = sbr.rel (%p4078) target = $region84
      $region83: #{tpu_custom_call.1} parent=47 // pred_region
        %s4081 = smul.u32 8, %s23
      $region84: #{tpu_custom_call.1} parent=47 // pred_fallthru
        _
    $region48: #{tpu_custom_call.1} parent=5 // pred_fallthru
      _
    %p4082 = scmp.le.s32.totalorder 2, %s13
    // Predicated region
    $region85: #{tpu_custom_call.1} parent=5 // pred_check
      %p4083 = pneg %p4082
    $region86: #{tpu_custom_call.1} parent=5 // pred_check_branch
      %4085 = sbr.rel (%p4083) target = $region88
    $region87: #{tpu_custom_call.1} parent=5 // pred_region
      %s4086 = ssub.s32 %s13, 2
      // Predicated region
      $region89: #{tpu_custom_call.1} parent=87 // pred_check
        %p4087 = pneg %p240
      $region90: #{tpu_custom_call.1} parent=87 // pred_check_branch
        %4089 = sbr.rel (%p4087) target = $region92
      $region91: #{tpu_custom_call.1} parent=87 // pred_region
        %s4090 = smul.u32 8, %s25
        %p4091 = scmp.lt.s32.totalorder %s24, 1
        %s4092 = scalar_select %p4091, %s24, 1
        %p4093 = scmp.lt.s32.totalorder %s4090, 7
        %s4094 = scalar_select %p4093, %s4090, 7
        %s4095 = smul.addr %s4092, 8
        %s4096 = sadd.s32 %s4094, %s4095
        %s4097 = smul.addr %s4096, 8
        %s4098 = scalar_lea.vmem %s7, %s4097
      $region92: #{tpu_custom_call.1} parent=87 // pred_fallthru
        _
    $region88: #{tpu_custom_call.1} parent=5 // pred_fallthru
      _
  $region6: #{tpu_custom_call.1} parent=0 // loop_footer
    %s17 = sadd.s32 1, %s13
  $region7: #{tpu_custom_call.1} parent=0 // loop_footer_branch
    %12 = sbr.rel target = $region3
  $region8: #{tpu_custom_call.1} parent=0 // loop_exit
    _

</llo_original>
